<compile_context>
chip_gen: v6e
topology: v6e:2x2x1
jax: 0.10.0
libtpu: 0.0.40
codegen_flags: <defaults>
</compile_context>

<pallas_src>
import math

import jax
import jax.numpy as jnp
from jax import lax
from jax.experimental import pallas as pl
from jax.experimental.pallas import tpu as pltpu

# ---------------- config (small, bert-base-shaped) ----------------
VOCAB = 128
MAX_POS = 16
TYPE_VOCAB = 2
SEQ = 8
HIDDEN = 32
N_HEADS = 2
HEAD_DIM = HIDDEN // N_HEADS
INTERMEDIATE = 64
N_LAYERS = 2
NUM_LABELS = 2
CLS_PAD = 128            # lane-dense padded classifier width; sliced back to NUM_LABELS
LN_EPS = 1e-12
MXU_DTYPE = jnp.bfloat16  # matmul operand dtype (f32 accumulation preserved)


# ---------------- in-kernel helpers ----------------
def _gelu_tanh(x):
    # TODO(synk): HF bert-base uses exact erf-GELU; tanh approximation used here.
    c = math.sqrt(2.0 / math.pi)
    return 0.5 * x * (1.0 + jnp.tanh(c * (x + 0.044715 * x * x * x)))


def _layernorm(x, g, b):
    mean = jnp.mean(x, axis=-1, keepdims=True)
    var = jnp.mean((x - mean) ** 2, axis=-1, keepdims=True)
    return (x - mean) * lax.rsqrt(var + LN_EPS) * g + b


# ---------------- the single fused kernel ----------------
def _bert_kernel(x_ref, emb_g_ref, emb_b_ref,
                 wqkv_ref, bqkv_ref, wo_ref, bo_ref, ln1_g_ref, ln1_b_ref,
                 w1_ref, b1_ref, w2_ref, b2_ref, ln2_g_ref, ln2_b_ref,
                 pool_w_ref, pool_b_ref, cls_w_ref, cls_b_ref, labels_ref,
                 logits_ref, loss_ref):
    M, H = x_ref.shape
    B = logits_ref.shape[0]
    S = M // B
    NH, DH = N_HEADS, HEAD_DIM
    scale = 1.0 / math.sqrt(DH)

    # embedding LayerNorm (embedding sum/gather done in the wrapper)
    h = _layernorm(x_ref[...], emb_g_ref[...], emb_b_ref[...])          # (M, H) f32

    def split_heads(t):   # (M, H) -> (B*NH, S, DH)
        return t.reshape(B, S, NH, DH).transpose(0, 2, 1, 3).reshape(B * NH, S, DH)

    # -------- encoder layers (weights already bf16; static unroll, tiny L) --------
    # TODO(synk): no attention mask — matches HF default all-ones mask, but wrong
    #             for padded / variable-length sequences.
    for l in range(N_LAYERS):
        # fused QKV projection: (M, H) @ (H, 3H), bf16 operands, f32 accumulate
        qkv = jnp.dot(h.astype(MXU_DTYPE), wqkv_ref[l],
                      preferred_element_type=jnp.float32) + bqkv_ref[l]   # (M, 3H)

        q = split_heads(qkv[:, 0:H]).astype(MXU_DTYPE)                    # (B*NH, S, DH)
        k = split_heads(qkv[:, H:2 * H]).astype(MXU_DTYPE)
        v = split_heads(qkv[:, 2 * H:3 * H]).astype(MXU_DTYPE)

        # batched attention over (batch*head): no per-head python loop, no concat
        s = jnp.einsum('bqd,bkd->bqk', q, k,
                       preferred_element_type=jnp.float32) * scale        # (B*NH, S, S)
        m = jnp.max(s, axis=-1, keepdims=True)
        p = jnp.exp(s - m)
        p = p * pl.reciprocal(jnp.sum(p, axis=-1, keepdims=True), approx=True)
        ctx = jnp.einsum('bqk,bkd->bqd', p.astype(MXU_DTYPE), v,
                         preferred_element_type=jnp.float32)               # (B*NH, S, DH)
        ctx = ctx.reshape(B, NH, S, DH).transpose(0, 2, 1, 3).reshape(M, H)

        # output projection + residual + LayerNorm
        attn = jnp.dot(ctx.astype(MXU_DTYPE), wo_ref[l],
                       preferred_element_type=jnp.float32) + bo_ref[l]
        h1 = _layernorm(h + attn, ln1_g_ref[l], ln1_b_ref[l])

        # FFN + GELU + residual + LayerNorm
        ffn = _gelu_tanh(jnp.dot(h1.astype(MXU_DTYPE), w1_ref[l],
                                 preferred_element_type=jnp.float32) + b1_ref[l])
        ffn = jnp.dot(ffn.astype(MXU_DTYPE), w2_ref[l],
                      preferred_element_type=jnp.float32) + b2_ref[l]
        h = _layernorm(h1 + ffn, ln2_g_ref[l], ln2_b_ref[l])

    # -------- pooler + classifier (lane-dense padded to CLS_PAD) --------
    first = h.reshape(B, S, H)[:, 0, :]                                    # (B, H)
    pooled = jnp.tanh(jnp.dot(first.astype(MXU_DTYPE), pool_w_ref[...],
                              preferred_element_type=jnp.float32) + pool_b_ref[...])
    # NOTE: classifier dropout is identity (eval-mode inference).
    logits_pad = jnp.dot(pooled.astype(MXU_DTYPE), cls_w_ref[...],
                         preferred_element_type=jnp.float32) + cls_b_ref[...]  # (B, CLS_PAD)
    logits_ref[...] = logits_pad

    # -------- mean softmax cross-entropy over the first NUM_LABELS columns --------
    col = lax.broadcasted_iota(jnp.int32, (B, CLS_PAD), 1)
    row = lax.broadcasted_iota(jnp.int32, (B, CLS_PAD), 0)
    lbl = jnp.zeros((B, CLS_PAD), jnp.int32)
    for b in range(B):                       # labels read as SMEM scalars
        lbl = jnp.where(row == b, labels_ref[b], lbl)
    valid = col < NUM_LABELS
    lg = jnp.where(valid, logits_pad, -1e30)
    mx = jnp.max(lg, axis=-1, keepdims=True)
    ex = jnp.where(valid, jnp.exp(lg - mx), 0.0)
    lse = mx + jnp.log(jnp.sum(ex, axis=-1, keepdims=True))                # (B, 1)
    picked = jnp.sum(jnp.where((col == lbl) & valid, logits_pad, 0.0),
                     axis=-1, keepdims=True)                               # (B, 1)
    nll = lse - picked                                                     # (B, 1)
    loss_ref[...] = jnp.sum(nll, axis=0, keepdims=True) * (1.0 / float(B))


def _bert_pallas(x, p, label):
    """x:(B*S, H) f32 embeddings; returns (padded logits (B, CLS_PAD), loss (1,1))."""
    M, H = x.shape
    B = label.shape[0]
    L, I = N_LAYERS, INTERMEDIATE

    def full(shape):
        return pl.BlockSpec(shape, lambda *_: (0,) * len(shape))

    return pl.pallas_call(
        _bert_kernel,
        out_shape=(jax.ShapeDtypeStruct((B, CLS_PAD), jnp.float32),
                   jax.ShapeDtypeStruct((1, 1), jnp.float32)),
        in_specs=[
            full((M, H)),                                   # x (embeddings)
            full((1, H)), full((1, H)),                     # emb LN
            full((L, H, 3 * H)), full((L, 1, 3 * H)),       # wqkv / bqkv
            full((L, H, H)), full((L, 1, H)),               # wo / bo
            full((L, 1, H)), full((L, 1, H)),               # attn LN g/b
            full((L, H, I)), full((L, 1, I)),               # w1 / b1
            full((L, I, H)), full((L, 1, H)),               # w2 / b2
            full((L, 1, H)), full((L, 1, H)),               # out LN g/b
            full((H, H)), full((1, H)),                     # pooler
            full((H, CLS_PAD)), full((1, CLS_PAD)),         # classifier (padded)
            pl.BlockSpec(memory_space=pltpu.MemorySpace.SMEM),  # labels (int32)
        ],
        out_specs=(full((B, CLS_PAD)), full((1, 1))),
    )(x,
      p["emb_ln_g"], p["emb_ln_b"],
      p["wqkv"], p["bqkv"], p["wo"], p["bo"], p["ln1_g"], p["ln1_b"],
      p["w1"], p["b1"], p["w2"], p["b2"], p["ln2_g"], p["ln2_b"],
      p["pool_w"], p["pool_b"], p["cls_w_pad"], p["cls_b_pad"],
      label)


# ---------------- parameter init (deterministic, synthetic) ----------------
def init_params(key):
    std = 0.02

    def nrm(k, shape):
        return jax.random.normal(k, shape, jnp.float32) * std

    keys = iter(jax.random.split(key, 64))
    p = {}
    p["word_emb"] = nrm(next(keys), (VOCAB, HIDDEN))
    p["pos_emb"] = nrm(next(keys), (MAX_POS, HIDDEN))
    p["type_emb"] = nrm(next(keys), (TYPE_VOCAB, HIDDEN))
    p["emb_ln_g"] = jnp.ones((1, HIDDEN), jnp.float32)
    p["emb_ln_b"] = jnp.zeros((1, HIDDEN), jnp.float32)

    wqkv, wo, w1, w2 = [], [], [], []
    for _ in range(N_LAYERS):
        wq = nrm(next(keys), (HIDDEN, HIDDEN))
        wk = nrm(next(keys), (HIDDEN, HIDDEN))
        wv = nrm(next(keys), (HIDDEN, HIDDEN))
        wqkv.append(jnp.concatenate([wq, wk, wv], axis=1))   # fused (H, 3H)
        wo.append(nrm(next(keys), (HIDDEN, HIDDEN)))
        w1.append(nrm(next(keys), (HIDDEN, INTERMEDIATE)))
        w2.append(nrm(next(keys), (INTERMEDIATE, HIDDEN)))

    # stacked per-layer weights; matmul weights pre-cast to bf16 (f32 accumulate in-kernel)
    p["wqkv"] = jnp.stack(wqkv).astype(MXU_DTYPE)                       # (L, H, 3H)
    p["bqkv"] = jnp.zeros((N_LAYERS, 1, 3 * HIDDEN), jnp.float32)
    p["wo"] = jnp.stack(wo).astype(MXU_DTYPE)                           # (L, H, H)
    p["bo"] = jnp.zeros((N_LAYERS, 1, HIDDEN), jnp.float32)
    p["ln1_g"] = jnp.ones((N_LAYERS, 1, HIDDEN), jnp.float32)
    p["ln1_b"] = jnp.zeros((N_LAYERS, 1, HIDDEN), jnp.float32)
    p["w1"] = jnp.stack(w1).astype(MXU_DTYPE)                           # (L, H, I)
    p["b1"] = jnp.zeros((N_LAYERS, 1, INTERMEDIATE), jnp.float32)
    p["w2"] = jnp.stack(w2).astype(MXU_DTYPE)                           # (L, I, H)
    p["b2"] = jnp.zeros((N_LAYERS, 1, HIDDEN), jnp.float32)
    p["ln2_g"] = jnp.ones((N_LAYERS, 1, HIDDEN), jnp.float32)
    p["ln2_b"] = jnp.zeros((N_LAYERS, 1, HIDDEN), jnp.float32)

    p["pool_w"] = nrm(next(keys), (HIDDEN, HIDDEN)).astype(MXU_DTYPE)
    p["pool_b"] = jnp.zeros((1, HIDDEN), jnp.float32)

    # classifier padded to a lane-dense width; extra columns are zero, sliced off in wrapper
    cls_w = nrm(next(keys), (HIDDEN, NUM_LABELS))
    p["cls_w_pad"] = (jnp.zeros((HIDDEN, CLS_PAD), jnp.float32)
                      .at[:, :NUM_LABELS].set(cls_w).astype(MXU_DTYPE))
    p["cls_b_pad"] = jnp.zeros((1, CLS_PAD), jnp.float32)
    return p


# ---------------- forward (matches BertForSequenceClassification semantics) ----------------
@jax.jit
def bert_forward(params, text, label):
    B, S = text.shape

    # Embeddings (gathers are plain-JAX glue; everything after is one Pallas kernel).
    word = jnp.take(params["word_emb"], text, axis=0)                    # (B,S,H)
    pos = jnp.take(params["pos_emb"], jnp.arange(S), axis=0)[None]       # (1,S,H)
    tok_type = params["type_emb"][0][None, None]                         # (1,1,H) token_type_ids == 0
    x = (word + pos + tok_type).reshape(B * S, HIDDEN).astype(jnp.float32)
    # NOTE: dropout is identity (eval-mode inference).

    logits_pad, loss = _bert_pallas(x, params, label.astype(jnp.int32))
    logits = logits_pad[:, :NUM_LABELS]                                   # (B, num_labels)
    return loss[0, 0], logits


if __name__ == "__main__":
    key = jax.random.PRNGKey(0)
    pkey, tkey, lkey = jax.random.split(key, 3)

    params = init_params(pkey)
    text = jax.random.randint(tkey, (2, SEQ), 0, VOCAB, dtype=jnp.int32)   # token ids
    label = jax.random.randint(lkey, (2,), 0, NUM_LABELS, dtype=jnp.int32)

    loss, logits = bert_forward(params, text, label)
    jax.block_until_ready((loss, logits))
    assert logits.shape == (2, NUM_LABELS) and loss.shape == ()
    assert bool(jnp.isfinite(loss)) and bool(jnp.all(jnp.isfinite(logits)))
    print("KERNEL_OK")
</pallas_src>

<mosaic_0001>
module attributes {stable_mosaic.version = 11 : i64} {
  func.func @_bert_kernel(%arg0: memref<16x32xf32, #tpu.memory_space<vmem>>, %arg1: memref<1x32xf32, #tpu.memory_space<vmem>>, %arg2: memref<1x32xf32, #tpu.memory_space<vmem>>, %arg3: memref<2x32x96xbf16, #tpu.memory_space<vmem>>, %arg4: memref<2x1x96xf32, #tpu.memory_space<vmem>>, %arg5: memref<2x32x32xbf16, #tpu.memory_space<vmem>>, %arg6: memref<2x1x32xf32, #tpu.memory_space<vmem>>, %arg7: memref<2x1x32xf32, #tpu.memory_space<vmem>>, %arg8: memref<2x1x32xf32, #tpu.memory_space<vmem>>, %arg9: memref<2x32x64xbf16, #tpu.memory_space<vmem>>, %arg10: memref<2x1x64xf32, #tpu.memory_space<vmem>>, %arg11: memref<2x64x32xbf16, #tpu.memory_space<vmem>>, %arg12: memref<2x1x32xf32, #tpu.memory_space<vmem>>, %arg13: memref<2x1x32xf32, #tpu.memory_space<vmem>>, %arg14: memref<2x1x32xf32, #tpu.memory_space<vmem>>, %arg15: memref<32x32xbf16, #tpu.memory_space<vmem>>, %arg16: memref<1x32xf32, #tpu.memory_space<vmem>>, %arg17: memref<32x128xbf16, #tpu.memory_space<vmem>>, %arg18: memref<1x128xf32, #tpu.memory_space<vmem>>, %arg19: memref<2xi32, #tpu.memory_space<smem>>, %arg20: memref<2x128xf32, #tpu.memory_space<vmem>>, %arg21: memref<1x1xf32, #tpu.memory_space<vmem>>) attributes {dimension_semantics = [], scalar_prefetch = 0 : i64, scratch_operands = 0 : i64, tpu.core_type = #tpu.core_type<tc>} {
    %c0 = arith.constant 0 : index
    %c0_0 = arith.constant 0 : index
    %0 = vector.load %arg0[%c0, %c0_0] : memref<16x32xf32, #tpu.memory_space<vmem>>, vector<16x32xf32>
    %c0_1 = arith.constant 0 : index
    %c0_2 = arith.constant 0 : index
    %1 = vector.load %arg1[%c0_1, %c0_2] : memref<1x32xf32, #tpu.memory_space<vmem>>, vector<1x32xf32>
    %c0_3 = arith.constant 0 : index
    %c0_4 = arith.constant 0 : index
    %2 = vector.load %arg2[%c0_3, %c0_4] : memref<1x32xf32, #tpu.memory_space<vmem>>, vector<1x32xf32>
    %cst = arith.constant dense<0.000000e+00> : vector<16xf32>
    %3 = vector.multi_reduction <add>, %0, %cst [1] : vector<16x32xf32> to vector<16xf32>
    %4 = vector.shape_cast %3 : vector<16xf32> to vector<16x1xf32>
    %cst_5 = arith.constant 3.200000e+01 : f32
    %5 = vector.broadcast %cst_5 : f32 to vector<16x1xf32>
    %6 = arith.divf %4, %5 : vector<16x1xf32>
    %7 = vector.broadcast %6 : vector<16x1xf32> to vector<16x32xf32>
    %8 = arith.subf %0, %7 : vector<16x32xf32>
    %9 = arith.mulf %8, %8 : vector<16x32xf32>
    %cst_6 = arith.constant dense<0.000000e+00> : vector<16xf32>
    %10 = vector.multi_reduction <add>, %9, %cst_6 [1] : vector<16x32xf32> to vector<16xf32>
    %11 = vector.shape_cast %10 : vector<16xf32> to vector<16x1xf32>
    %cst_7 = arith.constant 3.200000e+01 : f32
    %12 = vector.broadcast %cst_7 : f32 to vector<16x1xf32>
    %13 = arith.divf %11, %12 : vector<16x1xf32>
    %14 = vector.broadcast %6 : vector<16x1xf32> to vector<16x32xf32>
    %15 = arith.subf %0, %14 : vector<16x32xf32>
    %cst_8 = arith.constant 9.99999996E-13 : f32
    %16 = vector.broadcast %cst_8 : f32 to vector<16x1xf32>
    %17 = arith.addf %13, %16 : vector<16x1xf32>
    %18 = math.rsqrt %17 : vector<16x1xf32>
    %19 = vector.broadcast %18 : vector<16x1xf32> to vector<16x32xf32>
    %20 = arith.mulf %15, %19 : vector<16x32xf32>
    %21 = vector.broadcast %1 : vector<1x32xf32> to vector<16x32xf32>
    %22 = arith.mulf %20, %21 : vector<16x32xf32>
    %23 = vector.broadcast %2 : vector<1x32xf32> to vector<16x32xf32>
    %24 = arith.addf %22, %23 : vector<16x32xf32>
    %25 = arith.truncf %24 : vector<16x32xf32> to vector<16x32xbf16>
    %c0_9 = arith.constant 0 : index
    %c0_10 = arith.constant 0 : index
    %c0_11 = arith.constant 0 : index
    %26 = vector.load %arg3[%c0_9, %c0_10, %c0_11] : memref<2x32x96xbf16, #tpu.memory_space<vmem>>, vector<1x32x96xbf16>
    %27 = vector.shape_cast %26 : vector<1x32x96xbf16> to vector<32x96xbf16>
    %cst_12 = arith.constant dense<0.000000e+00> : vector<16x96xf32>
    %28 = tpu.matmul %25, %27, %cst_12 {dimension_numbers = #tpu.dot_dimension_numbers<[1], [0], [0], [1], [0, 0, 1, 1], [], []>} : vector<16x32xbf16>, vector<32x96xbf16>, vector<16x96xf32> -> vector<16x96xf32>
    %c0_13 = arith.constant 0 : index
    %c0_14 = arith.constant 0 : index
    %c0_15 = arith.constant 0 : index
    %29 = vector.load %arg4[%c0_13, %c0_14, %c0_15] : memref<2x1x96xf32, #tpu.memory_space<vmem>>, vector<1x1x96xf32>
    %30 = vector.shape_cast %29 : vector<1x1x96xf32> to vector<1x96xf32>
    %31 = vector.broadcast %30 : vector<1x96xf32> to vector<16x96xf32>
    %32 = arith.addf %28, %31 : vector<16x96xf32>
    %33 = vector.extract_strided_slice %32 {offsets = [0, 0], sizes = [16, 32], strides = [1, 1]} : vector<16x96xf32> to vector<16x32xf32>
    %34 = vector.shape_cast %33 : vector<16x32xf32> to vector<2x8x2x16xf32>
    %35 = tpu.transpose %34, [0, 2, 1, 3] : vector<2x8x2x16xf32> -> vector<2x2x8x16xf32>
    %36 = vector.shape_cast %35 : vector<2x2x8x16xf32> to vector<4x8x16xf32>
    %37 = arith.truncf %36 : vector<4x8x16xf32> to vector<4x8x16xbf16>
    %38 = vector.extract_strided_slice %32 {offsets = [0, 32], sizes = [16, 32], strides = [1, 1]} : vector<16x96xf32> to vector<16x32xf32>
    %39 = vector.shape_cast %38 : vector<16x32xf32> to vector<2x8x2x16xf32>
    %40 = tpu.transpose %39, [0, 2, 1, 3] : vector<2x8x2x16xf32> -> vector<2x2x8x16xf32>
    %41 = vector.shape_cast %40 : vector<2x2x8x16xf32> to vector<4x8x16xf32>
    %42 = arith.truncf %41 : vector<4x8x16xf32> to vector<4x8x16xbf16>
    %43 = vector.extract_strided_slice %32 {offsets = [0, 64], sizes = [16, 32], strides = [1, 1]} : vector<16x96xf32> to vector<16x32xf32>
    %44 = vector.shape_cast %43 : vector<16x32xf32> to vector<2x8x2x16xf32>
    %45 = tpu.transpose %44, [0, 2, 1, 3] : vector<2x8x2x16xf32> -> vector<2x2x8x16xf32>
    %46 = vector.shape_cast %45 : vector<2x2x8x16xf32> to vector<4x8x16xf32>
    %47 = arith.truncf %46 : vector<4x8x16xf32> to vector<4x8x16xbf16>
    "tpu.trace_start"() <{level = 10 : i32, message = "bqd,bkd->bqk"}> : () -> ()
    %cst_16 = arith.constant dense<0.000000e+00> : vector<4x8x8xf32>
    %48 = tpu.matmul %37, %42, %cst_16 {dimension_numbers = #tpu.dot_dimension_numbers<[2], [2], [1], [1], [0, 0, 0, 1, 1, 1], [0], [0]>} : vector<4x8x16xbf16>, vector<4x8x16xbf16>, vector<4x8x8xf32> -> vector<4x8x8xf32>
    "tpu.trace_stop"() : () -> ()
    %cst_17 = arith.constant 2.500000e-01 : f32
    %49 = vector.broadcast %cst_17 : f32 to vector<4x8x8xf32>
    %50 = arith.mulf %48, %49 : vector<4x8x8xf32>
    %cst_18 = arith.constant dense<0xFF800000> : vector<4x8xf32>
    %51 = vector.multi_reduction <maximumf>, %50, %cst_18 [2] : vector<4x8x8xf32> to vector<4x8xf32>
    %52 = vector.shape_cast %51 : vector<4x8xf32> to vector<4x8x1xf32>
    %53 = vector.broadcast %52 : vector<4x8x1xf32> to vector<4x8x8xf32>
    %54 = arith.subf %50, %53 : vector<4x8x8xf32>
    %55 = math.exp %54 : vector<4x8x8xf32>
    %cst_19 = arith.constant dense<0.000000e+00> : vector<4x8xf32>
    %56 = vector.multi_reduction <add>, %55, %cst_19 [2] : vector<4x8x8xf32> to vector<4x8xf32>
    %57 = vector.shape_cast %56 : vector<4x8xf32> to vector<4x8x1xf32>
    %58 = tpu.reciprocal %57 {approx = true} : vector<4x8x1xf32> -> vector<4x8x1xf32>
    %59 = vector.broadcast %58 : vector<4x8x1xf32> to vector<4x8x8xf32>
    %60 = arith.mulf %55, %59 : vector<4x8x8xf32>
    %61 = arith.truncf %60 : vector<4x8x8xf32> to vector<4x8x8xbf16>
    "tpu.trace_start"() <{level = 10 : i32, message = "bqk,bkd->bqd"}> : () -> ()
    %cst_20 = arith.constant dense<0.000000e+00> : vector<4x8x16xf32>
    %62 = tpu.matmul %61, %47, %cst_20 {dimension_numbers = #tpu.dot_dimension_numbers<[2], [1], [1], [2], [0, 0, 0, 1, 1, 2], [0], [0]>} : vector<4x8x8xbf16>, vector<4x8x16xbf16>, vector<4x8x16xf32> -> vector<4x8x16xf32>
    "tpu.trace_stop"() : () -> ()
    %63 = vector.shape_cast %62 : vector<4x8x16xf32> to vector<2x2x8x16xf32>
    %64 = tpu.transpose %63, [0, 2, 1, 3] : vector<2x2x8x16xf32> -> vector<2x8x2x16xf32>
    %65 = vector.shape_cast %64 : vector<2x8x2x16xf32> to vector<16x32xf32>
    %66 = arith.truncf %65 : vector<16x32xf32> to vector<16x32xbf16>
    %c0_21 = arith.constant 0 : index
    %c0_22 = arith.constant 0 : index
    %c0_23 = arith.constant 0 : index
    %67 = vector.load %arg5[%c0_21, %c0_22, %c0_23] : memref<2x32x32xbf16, #tpu.memory_space<vmem>>, vector<1x32x32xbf16>
    %68 = vector.shape_cast %67 : vector<1x32x32xbf16> to vector<32x32xbf16>
    %cst_24 = arith.constant dense<0.000000e+00> : vector<16x32xf32>
    %69 = tpu.matmul %66, %68, %cst_24 {dimension_numbers = #tpu.dot_dimension_numbers<[1], [0], [0], [1], [0, 0, 1, 1], [], []>} : vector<16x32xbf16>, vector<32x32xbf16>, vector<16x32xf32> -> vector<16x32xf32>
    %c0_25 = arith.constant 0 : index
    %c0_26 = arith.constant 0 : index
    %c0_27 = arith.constant 0 : index
    %70 = vector.load %arg6[%c0_25, %c0_26, %c0_27] : memref<2x1x32xf32, #tpu.memory_space<vmem>>, vector<1x1x32xf32>
    %71 = vector.shape_cast %70 : vector<1x1x32xf32> to vector<1x32xf32>
    %72 = vector.broadcast %71 : vector<1x32xf32> to vector<16x32xf32>
    %73 = arith.addf %69, %72 : vector<16x32xf32>
    %74 = arith.addf %24, %73 : vector<16x32xf32>
    %c0_28 = arith.constant 0 : index
    %c0_29 = arith.constant 0 : index
    %c0_30 = arith.constant 0 : index
    %75 = vector.load %arg7[%c0_28, %c0_29, %c0_30] : memref<2x1x32xf32, #tpu.memory_space<vmem>>, vector<1x1x32xf32>
    %76 = vector.shape_cast %75 : vector<1x1x32xf32> to vector<1x32xf32>
    %c0_31 = arith.constant 0 : index
    %c0_32 = arith.constant 0 : index
    %c0_33 = arith.constant 0 : index
    %77 = vector.load %arg8[%c0_31, %c0_32, %c0_33] : memref<2x1x32xf32, #tpu.memory_space<vmem>>, vector<1x1x32xf32>
    %78 = vector.shape_cast %77 : vector<1x1x32xf32> to vector<1x32xf32>
    %cst_34 = arith.constant dense<0.000000e+00> : vector<16xf32>
    %79 = vector.multi_reduction <add>, %74, %cst_34 [1] : vector<16x32xf32> to vector<16xf32>
    %80 = vector.shape_cast %79 : vector<16xf32> to vector<16x1xf32>
    %cst_35 = arith.constant 3.200000e+01 : f32
    %81 = vector.broadcast %cst_35 : f32 to vector<16x1xf32>
    %82 = arith.divf %80, %81 : vector<16x1xf32>
    %83 = vector.broadcast %82 : vector<16x1xf32> to vector<16x32xf32>
    %84 = arith.subf %74, %83 : vector<16x32xf32>
    %85 = arith.mulf %84, %84 : vector<16x32xf32>
    %cst_36 = arith.constant dense<0.000000e+00> : vector<16xf32>
    %86 = vector.multi_reduction <add>, %85, %cst_36 [1] : vector<16x32xf32> to vector<16xf32>
    %87 = vector.shape_cast %86 : vector<16xf32> to vector<16x1xf32>
    %cst_37 = arith.constant 3.200000e+01 : f32
    %88 = vector.broadcast %cst_37 : f32 to vector<16x1xf32>
    %89 = arith.divf %87, %88 : vector<16x1xf32>
    %90 = vector.broadcast %82 : vector<16x1xf32> to vector<16x32xf32>
    %91 = arith.subf %74, %90 : vector<16x32xf32>
    %cst_38 = arith.constant 9.99999996E-13 : f32
    %92 = vector.broadcast %cst_38 : f32 to vector<16x1xf32>
    %93 = arith.addf %89, %92 : vector<16x1xf32>
    %94 = math.rsqrt %93 : vector<16x1xf32>
    %95 = vector.broadcast %94 : vector<16x1xf32> to vector<16x32xf32>
    %96 = arith.mulf %91, %95 : vector<16x32xf32>
    %97 = vector.broadcast %76 : vector<1x32xf32> to vector<16x32xf32>
    %98 = arith.mulf %96, %97 : vector<16x32xf32>
    %99 = vector.broadcast %78 : vector<1x32xf32> to vector<16x32xf32>
    %100 = arith.addf %98, %99 : vector<16x32xf32>
    %101 = arith.truncf %100 : vector<16x32xf32> to vector<16x32xbf16>
    %c0_39 = arith.constant 0 : index
    %c0_40 = arith.constant 0 : index
    %c0_41 = arith.constant 0 : index
    %102 = vector.load %arg9[%c0_39, %c0_40, %c0_41] : memref<2x32x64xbf16, #tpu.memory_space<vmem>>, vector<1x32x64xbf16>
    %103 = vector.shape_cast %102 : vector<1x32x64xbf16> to vector<32x64xbf16>
    %cst_42 = arith.constant dense<0.000000e+00> : vector<16x64xf32>
    %104 = tpu.matmul %101, %103, %cst_42 {dimension_numbers = #tpu.dot_dimension_numbers<[1], [0], [0], [1], [0, 0, 1, 1], [], []>} : vector<16x32xbf16>, vector<32x64xbf16>, vector<16x64xf32> -> vector<16x64xf32>
    %c0_43 = arith.constant 0 : index
    %c0_44 = arith.constant 0 : index
    %c0_45 = arith.constant 0 : index
    %105 = vector.load %arg10[%c0_43, %c0_44, %c0_45] : memref<2x1x64xf32, #tpu.memory_space<vmem>>, vector<1x1x64xf32>
    %106 = vector.shape_cast %105 : vector<1x1x64xf32> to vector<1x64xf32>
    %107 = vector.broadcast %106 : vector<1x64xf32> to vector<16x64xf32>
    %108 = arith.addf %104, %107 : vector<16x64xf32>
    %cst_46 = arith.constant 5.000000e-01 : f32
    %109 = vector.broadcast %cst_46 : f32 to vector<16x64xf32>
    %110 = arith.mulf %109, %108 : vector<16x64xf32>
    %cst_47 = arith.constant 4.471500e-02 : f32
    %111 = vector.broadcast %cst_47 : f32 to vector<16x64xf32>
    %112 = arith.mulf %111, %108 : vector<16x64xf32>
    %113 = arith.mulf %112, %108 : vector<16x64xf32>
    %114 = arith.mulf %113, %108 : vector<16x64xf32>
    %115 = arith.addf %108, %114 : vector<16x64xf32>
    %cst_48 = arith.constant 0.797884583 : f32
    %116 = vector.broadcast %cst_48 : f32 to vector<16x64xf32>
    %117 = arith.mulf %116, %115 : vector<16x64xf32>
    %118 = math.tanh %117 : vector<16x64xf32>
    %cst_49 = arith.constant 1.000000e+00 : f32
    %119 = vector.broadcast %cst_49 : f32 to vector<16x64xf32>
    %120 = arith.addf %119, %118 : vector<16x64xf32>
    %121 = arith.mulf %110, %120 : vector<16x64xf32>
    %122 = arith.truncf %121 : vector<16x64xf32> to vector<16x64xbf16>
    %c0_50 = arith.constant 0 : index
    %c0_51 = arith.constant 0 : index
    %c0_52 = arith.constant 0 : index
    %123 = vector.load %arg11[%c0_50, %c0_51, %c0_52] : memref<2x64x32xbf16, #tpu.memory_space<vmem>>, vector<1x64x32xbf16>
    %124 = vector.shape_cast %123 : vector<1x64x32xbf16> to vector<64x32xbf16>
    %cst_53 = arith.constant dense<0.000000e+00> : vector<16x32xf32>
    %125 = tpu.matmul %122, %124, %cst_53 {dimension_numbers = #tpu.dot_dimension_numbers<[1], [0], [0], [1], [0, 0, 1, 1], [], []>} : vector<16x64xbf16>, vector<64x32xbf16>, vector<16x32xf32> -> vector<16x32xf32>
    %c0_54 = arith.constant 0 : index
    %c0_55 = arith.constant 0 : index
    %c0_56 = arith.constant 0 : index
    %126 = vector.load %arg12[%c0_54, %c0_55, %c0_56] : memref<2x1x32xf32, #tpu.memory_space<vmem>>, vector<1x1x32xf32>
    %127 = vector.shape_cast %126 : vector<1x1x32xf32> to vector<1x32xf32>
    %128 = vector.broadcast %127 : vector<1x32xf32> to vector<16x32xf32>
    %129 = arith.addf %125, %128 : vector<16x32xf32>
    %130 = arith.addf %100, %129 : vector<16x32xf32>
    %c0_57 = arith.constant 0 : index
    %c0_58 = arith.constant 0 : index
    %c0_59 = arith.constant 0 : index
    %131 = vector.load %arg13[%c0_57, %c0_58, %c0_59] : memref<2x1x32xf32, #tpu.memory_space<vmem>>, vector<1x1x32xf32>
    %132 = vector.shape_cast %131 : vector<1x1x32xf32> to vector<1x32xf32>
    %c0_60 = arith.constant 0 : index
    %c0_61 = arith.constant 0 : index
    %c0_62 = arith.constant 0 : index
    %133 = vector.load %arg14[%c0_60, %c0_61, %c0_62] : memref<2x1x32xf32, #tpu.memory_space<vmem>>, vector<1x1x32xf32>
    %134 = vector.shape_cast %133 : vector<1x1x32xf32> to vector<1x32xf32>
    %cst_63 = arith.constant dense<0.000000e+00> : vector<16xf32>
    %135 = vector.multi_reduction <add>, %130, %cst_63 [1] : vector<16x32xf32> to vector<16xf32>
    %136 = vector.shape_cast %135 : vector<16xf32> to vector<16x1xf32>
    %cst_64 = arith.constant 3.200000e+01 : f32
    %137 = vector.broadcast %cst_64 : f32 to vector<16x1xf32>
    %138 = arith.divf %136, %137 : vector<16x1xf32>
    %139 = vector.broadcast %138 : vector<16x1xf32> to vector<16x32xf32>
    %140 = arith.subf %130, %139 : vector<16x32xf32>
    %141 = arith.mulf %140, %140 : vector<16x32xf32>
    %cst_65 = arith.constant dense<0.000000e+00> : vector<16xf32>
    %142 = vector.multi_reduction <add>, %141, %cst_65 [1] : vector<16x32xf32> to vector<16xf32>
    %143 = vector.shape_cast %142 : vector<16xf32> to vector<16x1xf32>
    %cst_66 = arith.constant 3.200000e+01 : f32
    %144 = vector.broadcast %cst_66 : f32 to vector<16x1xf32>
    %145 = arith.divf %143, %144 : vector<16x1xf32>
    %146 = vector.broadcast %138 : vector<16x1xf32> to vector<16x32xf32>
    %147 = arith.subf %130, %146 : vector<16x32xf32>
    %cst_67 = arith.constant 9.99999996E-13 : f32
    %148 = vector.broadcast %cst_67 : f32 to vector<16x1xf32>
    %149 = arith.addf %145, %148 : vector<16x1xf32>
    %150 = math.rsqrt %149 : vector<16x1xf32>
    %151 = vector.broadcast %150 : vector<16x1xf32> to vector<16x32xf32>
    %152 = arith.mulf %147, %151 : vector<16x32xf32>
    %153 = vector.broadcast %132 : vector<1x32xf32> to vector<16x32xf32>
    %154 = arith.mulf %152, %153 : vector<16x32xf32>
    %155 = vector.broadcast %134 : vector<1x32xf32> to vector<16x32xf32>
    %156 = arith.addf %154, %155 : vector<16x32xf32>
    %157 = arith.truncf %156 : vector<16x32xf32> to vector<16x32xbf16>
    %c1 = arith.constant 1 : index
    %c0_68 = arith.constant 0 : index
    %c0_69 = arith.constant 0 : index
    %158 = vector.load %arg3[%c1, %c0_68, %c0_69] : memref<2x32x96xbf16, #tpu.memory_space<vmem>>, vector<1x32x96xbf16>
    %159 = vector.shape_cast %158 : vector<1x32x96xbf16> to vector<32x96xbf16>
    %cst_70 = arith.constant dense<0.000000e+00> : vector<16x96xf32>
    %160 = tpu.matmul %157, %159, %cst_70 {dimension_numbers = #tpu.dot_dimension_numbers<[1], [0], [0], [1], [0, 0, 1, 1], [], []>} : vector<16x32xbf16>, vector<32x96xbf16>, vector<16x96xf32> -> vector<16x96xf32>
    %c1_71 = arith.constant 1 : index
    %c0_72 = arith.constant 0 : index
    %c0_73 = arith.constant 0 : index
    %161 = vector.load %arg4[%c1_71, %c0_72, %c0_73] : memref<2x1x96xf32, #tpu.memory_space<vmem>>, vector<1x1x96xf32>
    %162 = vector.shape_cast %161 : vector<1x1x96xf32> to vector<1x96xf32>
    %163 = vector.broadcast %162 : vector<1x96xf32> to vector<16x96xf32>
    %164 = arith.addf %160, %163 : vector<16x96xf32>
    %165 = vector.extract_strided_slice %164 {offsets = [0, 0], sizes = [16, 32], strides = [1, 1]} : vector<16x96xf32> to vector<16x32xf32>
    %166 = vector.shape_cast %165 : vector<16x32xf32> to vector<2x8x2x16xf32>
    %167 = tpu.transpose %166, [0, 2, 1, 3] : vector<2x8x2x16xf32> -> vector<2x2x8x16xf32>
    %168 = vector.shape_cast %167 : vector<2x2x8x16xf32> to vector<4x8x16xf32>
    %169 = arith.truncf %168 : vector<4x8x16xf32> to vector<4x8x16xbf16>
    %170 = vector.extract_strided_slice %164 {offsets = [0, 32], sizes = [16, 32], strides = [1, 1]} : vector<16x96xf32> to vector<16x32xf32>
    %171 = vector.shape_cast %170 : vector<16x32xf32> to vector<2x8x2x16xf32>
    %172 = tpu.transpose %171, [0, 2, 1, 3] : vector<2x8x2x16xf32> -> vector<2x2x8x16xf32>
    %173 = vector.shape_cast %172 : vector<2x2x8x16xf32> to vector<4x8x16xf32>
    %174 = arith.truncf %173 : vector<4x8x16xf32> to vector<4x8x16xbf16>
    %175 = vector.extract_strided_slice %164 {offsets = [0, 64], sizes = [16, 32], strides = [1, 1]} : vector<16x96xf32> to vector<16x32xf32>
    %176 = vector.shape_cast %175 : vector<16x32xf32> to vector<2x8x2x16xf32>
    %177 = tpu.transpose %176, [0, 2, 1, 3] : vector<2x8x2x16xf32> -> vector<2x2x8x16xf32>
    %178 = vector.shape_cast %177 : vector<2x2x8x16xf32> to vector<4x8x16xf32>
    %179 = arith.truncf %178 : vector<4x8x16xf32> to vector<4x8x16xbf16>
    "tpu.trace_start"() <{level = 10 : i32, message = "bqd,bkd->bqk"}> : () -> ()
    %cst_74 = arith.constant dense<0.000000e+00> : vector<4x8x8xf32>
    %180 = tpu.matmul %169, %174, %cst_74 {dimension_numbers = #tpu.dot_dimension_numbers<[2], [2], [1], [1], [0, 0, 0, 1, 1, 1], [0], [0]>} : vector<4x8x16xbf16>, vector<4x8x16xbf16>, vector<4x8x8xf32> -> vector<4x8x8xf32>
    "tpu.trace_stop"() : () -> ()
    %cst_75 = arith.constant 2.500000e-01 : f32
    %181 = vector.broadcast %cst_75 : f32 to vector<4x8x8xf32>
    %182 = arith.mulf %180, %181 : vector<4x8x8xf32>
    %cst_76 = arith.constant dense<0xFF800000> : vector<4x8xf32>
    %183 = vector.multi_reduction <maximumf>, %182, %cst_76 [2] : vector<4x8x8xf32> to vector<4x8xf32>
    %184 = vector.shape_cast %183 : vector<4x8xf32> to vector<4x8x1xf32>
    %185 = vector.broadcast %184 : vector<4x8x1xf32> to vector<4x8x8xf32>
    %186 = arith.subf %182, %185 : vector<4x8x8xf32>
    %187 = math.exp %186 : vector<4x8x8xf32>
    %cst_77 = arith.constant dense<0.000000e+00> : vector<4x8xf32>
    %188 = vector.multi_reduction <add>, %187, %cst_77 [2] : vector<4x8x8xf32> to vector<4x8xf32>
    %189 = vector.shape_cast %188 : vector<4x8xf32> to vector<4x8x1xf32>
    %190 = tpu.reciprocal %189 {approx = true} : vector<4x8x1xf32> -> vector<4x8x1xf32>
    %191 = vector.broadcast %190 : vector<4x8x1xf32> to vector<4x8x8xf32>
    %192 = arith.mulf %187, %191 : vector<4x8x8xf32>
    %193 = arith.truncf %192 : vector<4x8x8xf32> to vector<4x8x8xbf16>
    "tpu.trace_start"() <{level = 10 : i32, message = "bqk,bkd->bqd"}> : () -> ()
    %cst_78 = arith.constant dense<0.000000e+00> : vector<4x8x16xf32>
    %194 = tpu.matmul %193, %179, %cst_78 {dimension_numbers = #tpu.dot_dimension_numbers<[2], [1], [1], [2], [0, 0, 0, 1, 1, 2], [0], [0]>} : vector<4x8x8xbf16>, vector<4x8x16xbf16>, vector<4x8x16xf32> -> vector<4x8x16xf32>
    "tpu.trace_stop"() : () -> ()
    %195 = vector.shape_cast %194 : vector<4x8x16xf32> to vector<2x2x8x16xf32>
    %196 = tpu.transpose %195, [0, 2, 1, 3] : vector<2x2x8x16xf32> -> vector<2x8x2x16xf32>
    %197 = vector.shape_cast %196 : vector<2x8x2x16xf32> to vector<16x32xf32>
    %198 = arith.truncf %197 : vector<16x32xf32> to vector<16x32xbf16>
    %c1_79 = arith.constant 1 : index
    %c0_80 = arith.constant 0 : index
    %c0_81 = arith.constant 0 : index
    %199 = vector.load %arg5[%c1_79, %c0_80, %c0_81] : memref<2x32x32xbf16, #tpu.memory_space<vmem>>, vector<1x32x32xbf16>
    %200 = vector.shape_cast %199 : vector<1x32x32xbf16> to vector<32x32xbf16>
    %cst_82 = arith.constant dense<0.000000e+00> : vector<16x32xf32>
    %201 = tpu.matmul %198, %200, %cst_82 {dimension_numbers = #tpu.dot_dimension_numbers<[1], [0], [0], [1], [0, 0, 1, 1], [], []>} : vector<16x32xbf16>, vector<32x32xbf16>, vector<16x32xf32> -> vector<16x32xf32>
    %c1_83 = arith.constant 1 : index
    %c0_84 = arith.constant 0 : index
    %c0_85 = arith.constant 0 : index
    %202 = vector.load %arg6[%c1_83, %c0_84, %c0_85] : memref<2x1x32xf32, #tpu.memory_space<vmem>>, vector<1x1x32xf32>
    %203 = vector.shape_cast %202 : vector<1x1x32xf32> to vector<1x32xf32>
    %204 = vector.broadcast %203 : vector<1x32xf32> to vector<16x32xf32>
    %205 = arith.addf %201, %204 : vector<16x32xf32>
    %206 = arith.addf %156, %205 : vector<16x32xf32>
    %c1_86 = arith.constant 1 : index
    %c0_87 = arith.constant 0 : index
    %c0_88 = arith.constant 0 : index
    %207 = vector.load %arg7[%c1_86, %c0_87, %c0_88] : memref<2x1x32xf32, #tpu.memory_space<vmem>>, vector<1x1x32xf32>
    %208 = vector.shape_cast %207 : vector<1x1x32xf32> to vector<1x32xf32>
    %c1_89 = arith.constant 1 : index
    %c0_90 = arith.constant 0 : index
    %c0_91 = arith.constant 0 : index
    %209 = vector.load %arg8[%c1_89, %c0_90, %c0_91] : memref<2x1x32xf32, #tpu.memory_space<vmem>>, vector<1x1x32xf32>
    %210 = vector.shape_cast %209 : vector<1x1x32xf32> to vector<1x32xf32>
    %cst_92 = arith.constant dense<0.000000e+00> : vector<16xf32>
    %211 = vector.multi_reduction <add>, %206, %cst_92 [1] : vector<16x32xf32> to vector<16xf32>
    %212 = vector.shape_cast %211 : vector<16xf32> to vector<16x1xf32>
    %cst_93 = arith.constant 3.200000e+01 : f32
    %213 = vector.broadcast %cst_93 : f32 to vector<16x1xf32>
    %214 = arith.divf %212, %213 : vector<16x1xf32>
    %215 = vector.broadcast %214 : vector<16x1xf32> to vector<16x32xf32>
    %216 = arith.subf %206, %215 : vector<16x32xf32>
    %217 = arith.mulf %216, %216 : vector<16x32xf32>
    %cst_94 = arith.constant dense<0.000000e+00> : vector<16xf32>
    %218 = vector.multi_reduction <add>, %217, %cst_94 [1] : vector<16x32xf32> to vector<16xf32>
    %219 = vector.shape_cast %218 : vector<16xf32> to vector<16x1xf32>
    %cst_95 = arith.constant 3.200000e+01 : f32
    %220 = vector.broadcast %cst_95 : f32 to vector<16x1xf32>
    %221 = arith.divf %219, %220 : vector<16x1xf32>
    %222 = vector.broadcast %214 : vector<16x1xf32> to vector<16x32xf32>
    %223 = arith.subf %206, %222 : vector<16x32xf32>
    %cst_96 = arith.constant 9.99999996E-13 : f32
    %224 = vector.broadcast %cst_96 : f32 to vector<16x1xf32>
    %225 = arith.addf %221, %224 : vector<16x1xf32>
    %226 = math.rsqrt %225 : vector<16x1xf32>
    %227 = vector.broadcast %226 : vector<16x1xf32> to vector<16x32xf32>
    %228 = arith.mulf %223, %227 : vector<16x32xf32>
    %229 = vector.broadcast %208 : vector<1x32xf32> to vector<16x32xf32>
    %230 = arith.mulf %228, %229 : vector<16x32xf32>
    %231 = vector.broadcast %210 : vector<1x32xf32> to vector<16x32xf32>
    %232 = arith.addf %230, %231 : vector<16x32xf32>
    %233 = arith.truncf %232 : vector<16x32xf32> to vector<16x32xbf16>
    %c1_97 = arith.constant 1 : index
    %c0_98 = arith.constant 0 : index
    %c0_99 = arith.constant 0 : index
    %234 = vector.load %arg9[%c1_97, %c0_98, %c0_99] : memref<2x32x64xbf16, #tpu.memory_space<vmem>>, vector<1x32x64xbf16>
    %235 = vector.shape_cast %234 : vector<1x32x64xbf16> to vector<32x64xbf16>
    %cst_100 = arith.constant dense<0.000000e+00> : vector<16x64xf32>
    %236 = tpu.matmul %233, %235, %cst_100 {dimension_numbers = #tpu.dot_dimension_numbers<[1], [0], [0], [1], [0, 0, 1, 1], [], []>} : vector<16x32xbf16>, vector<32x64xbf16>, vector<16x64xf32> -> vector<16x64xf32>
    %c1_101 = arith.constant 1 : index
    %c0_102 = arith.constant 0 : index
    %c0_103 = arith.constant 0 : index
    %237 = vector.load %arg10[%c1_101, %c0_102, %c0_103] : memref<2x1x64xf32, #tpu.memory_space<vmem>>, vector<1x1x64xf32>
    %238 = vector.shape_cast %237 : vector<1x1x64xf32> to vector<1x64xf32>
    %239 = vector.broadcast %238 : vector<1x64xf32> to vector<16x64xf32>
    %240 = arith.addf %236, %239 : vector<16x64xf32>
    %cst_104 = arith.constant 5.000000e-01 : f32
    %241 = vector.broadcast %cst_104 : f32 to vector<16x64xf32>
    %242 = arith.mulf %241, %240 : vector<16x64xf32>
    %cst_105 = arith.constant 4.471500e-02 : f32
    %243 = vector.broadcast %cst_105 : f32 to vector<16x64xf32>
    %244 = arith.mulf %243, %240 : vector<16x64xf32>
    %245 = arith.mulf %244, %240 : vector<16x64xf32>
    %246 = arith.mulf %245, %240 : vector<16x64xf32>
    %247 = arith.addf %240, %246 : vector<16x64xf32>
    %cst_106 = arith.constant 0.797884583 : f32
    %248 = vector.broadcast %cst_106 : f32 to vector<16x64xf32>
    %249 = arith.mulf %248, %247 : vector<16x64xf32>
    %250 = math.tanh %249 : vector<16x64xf32>
    %cst_107 = arith.constant 1.000000e+00 : f32
    %251 = vector.broadcast %cst_107 : f32 to vector<16x64xf32>
    %252 = arith.addf %251, %250 : vector<16x64xf32>
    %253 = arith.mulf %242, %252 : vector<16x64xf32>
    %254 = arith.truncf %253 : vector<16x64xf32> to vector<16x64xbf16>
    %c1_108 = arith.constant 1 : index
    %c0_109 = arith.constant 0 : index
    %c0_110 = arith.constant 0 : index
    %255 = vector.load %arg11[%c1_108, %c0_109, %c0_110] : memref<2x64x32xbf16, #tpu.memory_space<vmem>>, vector<1x64x32xbf16>
    %256 = vector.shape_cast %255 : vector<1x64x32xbf16> to vector<64x32xbf16>
    %cst_111 = arith.constant dense<0.000000e+00> : vector<16x32xf32>
    %257 = tpu.matmul %254, %256, %cst_111 {dimension_numbers = #tpu.dot_dimension_numbers<[1], [0], [0], [1], [0, 0, 1, 1], [], []>} : vector<16x64xbf16>, vector<64x32xbf16>, vector<16x32xf32> -> vector<16x32xf32>
    %c1_112 = arith.constant 1 : index
    %c0_113 = arith.constant 0 : index
    %c0_114 = arith.constant 0 : index
    %258 = vector.load %arg12[%c1_112, %c0_113, %c0_114] : memref<2x1x32xf32, #tpu.memory_space<vmem>>, vector<1x1x32xf32>
    %259 = vector.shape_cast %258 : vector<1x1x32xf32> to vector<1x32xf32>
    %260 = vector.broadcast %259 : vector<1x32xf32> to vector<16x32xf32>
    %261 = arith.addf %257, %260 : vector<16x32xf32>
    %262 = arith.addf %232, %261 : vector<16x32xf32>
    %c1_115 = arith.constant 1 : index
    %c0_116 = arith.constant 0 : index
    %c0_117 = arith.constant 0 : index
    %263 = vector.load %arg13[%c1_115, %c0_116, %c0_117] : memref<2x1x32xf32, #tpu.memory_space<vmem>>, vector<1x1x32xf32>
    %264 = vector.shape_cast %263 : vector<1x1x32xf32> to vector<1x32xf32>
    %c1_118 = arith.constant 1 : index
    %c0_119 = arith.constant 0 : index
    %c0_120 = arith.constant 0 : index
    %265 = vector.load %arg14[%c1_118, %c0_119, %c0_120] : memref<2x1x32xf32, #tpu.memory_space<vmem>>, vector<1x1x32xf32>
    %266 = vector.shape_cast %265 : vector<1x1x32xf32> to vector<1x32xf32>
    %cst_121 = arith.constant dense<0.000000e+00> : vector<16xf32>
    %267 = vector.multi_reduction <add>, %262, %cst_121 [1] : vector<16x32xf32> to vector<16xf32>
    %268 = vector.shape_cast %267 : vector<16xf32> to vector<16x1xf32>
    %cst_122 = arith.constant 3.200000e+01 : f32
    %269 = vector.broadcast %cst_122 : f32 to vector<16x1xf32>
    %270 = arith.divf %268, %269 : vector<16x1xf32>
    %271 = vector.broadcast %270 : vector<16x1xf32> to vector<16x32xf32>
    %272 = arith.subf %262, %271 : vector<16x32xf32>
    %273 = arith.mulf %272, %272 : vector<16x32xf32>
    %cst_123 = arith.constant dense<0.000000e+00> : vector<16xf32>
    %274 = vector.multi_reduction <add>, %273, %cst_123 [1] : vector<16x32xf32> to vector<16xf32>
    %275 = vector.shape_cast %274 : vector<16xf32> to vector<16x1xf32>
    %cst_124 = arith.constant 3.200000e+01 : f32
    %276 = vector.broadcast %cst_124 : f32 to vector<16x1xf32>
    %277 = arith.divf %275, %276 : vector<16x1xf32>
    %278 = vector.broadcast %270 : vector<16x1xf32> to vector<16x32xf32>
    %279 = arith.subf %262, %278 : vector<16x32xf32>
    %cst_125 = arith.constant 9.99999996E-13 : f32
    %280 = vector.broadcast %cst_125 : f32 to vector<16x1xf32>
    %281 = arith.addf %277, %280 : vector<16x1xf32>
    %282 = math.rsqrt %281 : vector<16x1xf32>
    %283 = vector.broadcast %282 : vector<16x1xf32> to vector<16x32xf32>
    %284 = arith.mulf %279, %283 : vector<16x32xf32>
    %285 = vector.broadcast %264 : vector<1x32xf32> to vector<16x32xf32>
    %286 = arith.mulf %284, %285 : vector<16x32xf32>
    %287 = vector.broadcast %266 : vector<1x32xf32> to vector<16x32xf32>
    %288 = arith.addf %286, %287 : vector<16x32xf32>
    %289 = vector.shape_cast %288 : vector<16x32xf32> to vector<2x8x32xf32>
    %290 = vector.extract_strided_slice %289 {offsets = [0, 0, 0], sizes = [2, 1, 32], strides = [1, 1, 1]} : vector<2x8x32xf32> to vector<2x1x32xf32>
    %291 = vector.shape_cast %290 : vector<2x1x32xf32> to vector<2x32xf32>
    %292 = arith.truncf %291 : vector<2x32xf32> to vector<2x32xbf16>
    %c0_126 = arith.constant 0 : index
    %c0_127 = arith.constant 0 : index
    %293 = vector.load %arg15[%c0_126, %c0_127] : memref<32x32xbf16, #tpu.memory_space<vmem>>, vector<32x32xbf16>
    %cst_128 = arith.constant dense<0.000000e+00> : vector<2x32xf32>
    %294 = tpu.matmul %292, %293, %cst_128 {dimension_numbers = #tpu.dot_dimension_numbers<[1], [0], [0], [1], [0, 0, 1, 1], [], []>} : vector<2x32xbf16>, vector<32x32xbf16>, vector<2x32xf32> -> vector<2x32xf32>
    %c0_129 = arith.constant 0 : index
    %c0_130 = arith.constant 0 : index
    %295 = vector.load %arg16[%c0_129, %c0_130] : memref<1x32xf32, #tpu.memory_space<vmem>>, vector<1x32xf32>
    %296 = vector.broadcast %295 : vector<1x32xf32> to vector<2x32xf32>
    %297 = arith.addf %294, %296 : vector<2x32xf32>
    %298 = math.tanh %297 : vector<2x32xf32>
    %299 = arith.truncf %298 : vector<2x32xf32> to vector<2x32xbf16>
    %c0_131 = arith.constant 0 : index
    %c0_132 = arith.constant 0 : index
    %300 = vector.load %arg17[%c0_131, %c0_132] : memref<32x128xbf16, #tpu.memory_space<vmem>>, vector<32x128xbf16>
    %cst_133 = arith.constant dense<0.000000e+00> : vector<2x128xf32>
    %301 = tpu.matmul %299, %300, %cst_133 {dimension_numbers = #tpu.dot_dimension_numbers<[1], [0], [0], [1], [0, 0, 1, 1], [], []>} : vector<2x32xbf16>, vector<32x128xbf16>, vector<2x128xf32> -> vector<2x128xf32>
    %c0_134 = arith.constant 0 : index
    %c0_135 = arith.constant 0 : index
    %302 = vector.load %arg18[%c0_134, %c0_135] : memref<1x128xf32, #tpu.memory_space<vmem>>, vector<1x128xf32>
    %303 = vector.broadcast %302 : vector<1x128xf32> to vector<2x128xf32>
    %304 = arith.addf %301, %303 : vector<2x128xf32>
    %c0_136 = arith.constant 0 : index
    %c0_137 = arith.constant 0 : index
    %305 = vector.load %arg20[%c0_136, %c0_137] : memref<2x128xf32, #tpu.memory_space<vmem>>, vector<2x128xf32>
    tpu.vector_store %arg20[%c0_136, %c0_137], %304 {strides = array<i32>} : memref<2x128xf32, #tpu.memory_space<vmem>>, vector<2x128xf32>,
    %306 = tpu.iota {dimensions = array<i32: 1>} : vector<2x128xi32>
    %307 = tpu.iota {dimensions = array<i32: 0>} : vector<2x128xi32>
    %c0_i32 = arith.constant 0 : i32
    %308 = vector.broadcast %c0_i32 : i32 to vector<2x128xi32>
    %c0_i32_138 = arith.constant 0 : i32
    %309 = vector.broadcast %c0_i32_138 : i32 to vector<2x128xi32>
    %310 = arith.cmpi eq, %307, %309 : vector<2x128xi32>
    %c0_139 = arith.constant 0 : index
    %311 = memref.load %arg19[%c0_139] : memref<2xi32, #tpu.memory_space<smem>>
    %312 = vector.broadcast %311 : i32 to vector<2x128xi32>
    %313 = arith.select %310, %312, %308 : vector<2x128xi1>, vector<2x128xi32>
    %c1_i32 = arith.constant 1 : i32
    %314 = vector.broadcast %c1_i32 : i32 to vector<2x128xi32>
    %315 = arith.cmpi eq, %307, %314 : vector<2x128xi32>
    %c1_140 = arith.constant 1 : index
    %316 = memref.load %arg19[%c1_140] : memref<2xi32, #tpu.memory_space<smem>>
    %317 = vector.broadcast %316 : i32 to vector<2x128xi32>
    %318 = arith.select %315, %317, %313 : vector<2x128xi1>, vector<2x128xi32>
    %c2_i32 = arith.constant 2 : i32
    %319 = vector.broadcast %c2_i32 : i32 to vector<2x128xi32>
    %320 = arith.cmpi slt, %306, %319 : vector<2x128xi32>
    %cst_141 = arith.constant -1.000000e+30 : f32
    %321 = vector.broadcast %cst_141 : f32 to vector<2x128xf32>
    %322 = arith.select %320, %304, %321 : vector<2x128xi1>, vector<2x128xf32>
    %cst_142 = arith.constant dense<0xFF800000> : vector<2xf32>
    %323 = vector.multi_reduction <maximumf>, %322, %cst_142 [1] : vector<2x128xf32> to vector<2xf32>
    %324 = vector.shape_cast %323 : vector<2xf32> to vector<2x1xf32>
    %325 = vector.broadcast %324 : vector<2x1xf32> to vector<2x128xf32>
    %326 = arith.subf %322, %325 : vector<2x128xf32>
    %327 = math.exp %326 : vector<2x128xf32>
    %cst_143 = arith.constant 0.000000e+00 : f32
    %328 = vector.broadcast %cst_143 : f32 to vector<2x128xf32>
    %329 = arith.select %320, %327, %328 : vector<2x128xi1>, vector<2x128xf32>
    %cst_144 = arith.constant dense<0.000000e+00> : vector<2xf32>
    %330 = vector.multi_reduction <add>, %329, %cst_144 [1] : vector<2x128xf32> to vector<2xf32>
    %331 = vector.shape_cast %330 : vector<2xf32> to vector<2x1xf32>
    %332 = math.log %331 : vector<2x1xf32>
    %333 = arith.addf %324, %332 : vector<2x1xf32>
    %334 = arith.cmpi eq, %306, %318 : vector<2x128xi32>
    %335 = arith.andi %334, %320 : vector<2x128xi1>
    %cst_145 = arith.constant 0.000000e+00 : f32
    %336 = vector.broadcast %cst_145 : f32 to vector<2x128xf32>
    %337 = arith.select %335, %304, %336 : vector<2x128xi1>, vector<2x128xf32>
    %cst_146 = arith.constant dense<0.000000e+00> : vector<2xf32>
    %338 = vector.multi_reduction <add>, %337, %cst_146 [1] : vector<2x128xf32> to vector<2xf32>
    %339 = vector.shape_cast %338 : vector<2xf32> to vector<2x1xf32>
    %340 = arith.subf %333, %339 : vector<2x1xf32>
    %cst_147 = arith.constant dense<0.000000e+00> : vector<1xf32>
    %341 = vector.multi_reduction <add>, %340, %cst_147 [0] : vector<2x1xf32> to vector<1xf32>
    %342 = vector.shape_cast %341 : vector<1xf32> to vector<1x1xf32>
    %cst_148 = arith.constant 5.000000e-01 : f32
    %343 = vector.broadcast %cst_148 : f32 to vector<1x1xf32>
    %344 = arith.mulf %342, %343 : vector<1x1xf32>
    %c0_149 = arith.constant 0 : index
    %c0_150 = arith.constant 0 : index
    %345 = vector.load %arg21[%c0_149, %c0_150] : memref<1x1xf32, #tpu.memory_space<vmem>>, vector<1x1xf32>
    tpu.vector_store %arg21[%c0_149, %c0_150], %344 {strides = array<i32>} : memref<1x1xf32, #tpu.memory_space<vmem>>, vector<1x1xf32>,
    return
  }
}

</mosaic_0001>

<llo_original>
// kernel: bert_forward.1
$region0: #{bert_forward.1}
  #allocation0 [shape = 'u32[]', space=smem, size = 0x4, offset = 0x4, fixed_abs, tag = 'smem constant byte address 0x4 - core index']
  #allocation1 [shape = 'u32[144,128]{1,0:T(1,128)}', space=vmem, size = 0x12000, scoped, tag = 'internal scratch']
  %s0 = inlined_call_operand.vmem [shape: f32[16,32], index: 0, kind: input, shape index: {}]
  %s1 = inlined_call_operand.vmem [shape: f32[1,32], index: 1, kind: input, shape index: {}]
  %s2 = inlined_call_operand.vmem [shape: f32[1,32], index: 2, kind: input, shape index: {}]
  %s3 = inlined_call_operand.vmem [shape: bf16[2,32,96], index: 3, kind: input, shape index: {}]
  %s4 = inlined_call_operand.vmem [shape: f32[2,1,96], index: 4, kind: input, shape index: {}]
  %s5 = inlined_call_operand.vmem [shape: bf16[2,32,32], index: 5, kind: input, shape index: {}]
  %s6 = inlined_call_operand.vmem [shape: f32[2,1,32], index: 6, kind: input, shape index: {}]
  %s7 = inlined_call_operand.vmem [shape: f32[2,1,32], index: 7, kind: input, shape index: {}]
  %s8 = inlined_call_operand.vmem [shape: f32[2,1,32], index: 8, kind: input, shape index: {}]
  %s9 = inlined_call_operand.vmem [shape: bf16[2,32,64], index: 9, kind: input, shape index: {}]
  %s10 = inlined_call_operand.vmem [shape: f32[2,1,64], index: 10, kind: input, shape index: {}]
  %s11 = inlined_call_operand.vmem [shape: bf16[2,64,32], index: 11, kind: input, shape index: {}]
  %s12 = inlined_call_operand.vmem [shape: f32[2,1,32], index: 12, kind: input, shape index: {}]
  %s13 = inlined_call_operand.vmem [shape: f32[2,1,32], index: 13, kind: input, shape index: {}]
  %s14 = inlined_call_operand.vmem [shape: f32[2,1,32], index: 14, kind: input, shape index: {}]
  %s15 = inlined_call_operand.vmem [shape: bf16[32,32], index: 15, kind: input, shape index: {}]
  %s16 = inlined_call_operand.vmem [shape: f32[1,32], index: 16, kind: input, shape index: {}]
  %s17 = inlined_call_operand.vmem [shape: bf16[32,128], index: 17, kind: input, shape index: {}]
  %s18 = inlined_call_operand.vmem [shape: f32[1,128], index: 18, kind: input, shape index: {}]
  %s19 = inlined_call_operand.vmem [shape: s32[2], index: 19, kind: input, shape index: {}]
  %s20 = inlined_call_operand.hbm [shape: f32[2,128], index: 20, kind: output, shape index: {0}]
  %s21 = inlined_call_operand.hbm [shape: f32[1,1], index: 21, kind: output, shape index: {1}]
  %22 = xla_tuple %s20, %s21
  %s23 = sld [smem:[#allocation0]]
  $region102: #{bert_forward.1} parent=0
    _
  %s25 = ssub.s32 1, %s23
  %s26 = scalar_select 0, %s25, %s23
  $region1: #{bert_forward.1} parent=0
    #allocation2 [shape = 'u8[512]{0}', space=smem, size = 0x200, scoped, tag = 'input window, operand 19, single buffered']
    #allocation3 [shape = 's32[1]{0}', space=sflag, size = 0x4, scoped, tag = 'scoped memory for bert_forward.1']
    #allocation4 [shape = 's32[1]{0}', space=sflag, size = 0x4, scoped, tag = 'scoped memory for bert_forward.1']
    #allocation5 [shape = 'u8[1024]{0}', space=vmem, size = 0x400, scoped, tag = 'output window, operand 0, single buffered']
    #allocation6 [shape = 'u8[512]{0}', space=vmem, size = 0x400, scoped, tag = 'output window, operand 1, single buffered']
    #allocation7 [shape = 's32[1]{0}', space=sflag, size = 0x4, scoped, tag = 'scoped memory for bert_forward.1']
    %27 = vsyncpa [#allocation4], 0
    %28 = vsyncpa [#allocation3], 0
    %29 = vsyncpa [#allocation7], 0
    // Predicated region
    $region2: #{bert_forward.1} parent=1 // pred_check
      _
    $region3: #{bert_forward.1} parent=1 // pred_check_branch
      %31 = sbr.rel (0) target = $region5
    $region4: #{bert_forward.1} parent=1 // pred_region
      _
    $region5: #{bert_forward.1} parent=1 // pred_fallthru
      _
    // Predicated region
    $region6: #{bert_forward.1} parent=1 // pred_check
      _
    $region7: #{bert_forward.1} parent=1 // pred_check_branch
      %33 = sbr.rel (0) target = $region9
    $region8: #{bert_forward.1} parent=1 // pred_region
      _
    $region9: #{bert_forward.1} parent=1 // pred_fallthru
      _
    // Predicated region
    $region10: #{bert_forward.1} parent=1 // pred_check
      _
    $region11: #{bert_forward.1} parent=1 // pred_check_branch
      %35 = sbr.rel (0) target = $region13
    $region12: #{bert_forward.1} parent=1 // pred_region
      _
    $region13: #{bert_forward.1} parent=1 // pred_fallthru
      _
    // Predicated region
    $region14: #{bert_forward.1} parent=1 // pred_check
      _
    $region15: #{bert_forward.1} parent=1 // pred_check_branch
      %37 = sbr.rel (0) target = $region17
    $region16: #{bert_forward.1} parent=1 // pred_region
      _
    $region17: #{bert_forward.1} parent=1 // pred_fallthru
      _
    // Predicated region
    $region18: #{bert_forward.1} parent=1 // pred_check
      _
    $region19: #{bert_forward.1} parent=1 // pred_check_branch
      %39 = sbr.rel (0) target = $region21
    $region20: #{bert_forward.1} parent=1 // pred_region
      _
    $region21: #{bert_forward.1} parent=1 // pred_fallthru
      _
    // Predicated region
    $region22: #{bert_forward.1} parent=1 // pred_check
      _
    $region23: #{bert_forward.1} parent=1 // pred_check_branch
      %41 = sbr.rel (0) target = $region25
    $region24: #{bert_forward.1} parent=1 // pred_region
      _
    $region25: #{bert_forward.1} parent=1 // pred_fallthru
      _
    // Predicated region
    $region26: #{bert_forward.1} parent=1 // pred_check
      _
    $region27: #{bert_forward.1} parent=1 // pred_check_branch
      %43 = sbr.rel (0) target = $region29
    $region28: #{bert_forward.1} parent=1 // pred_region
      _
    $region29: #{bert_forward.1} parent=1 // pred_fallthru
      _
    // Predicated region
    $region30: #{bert_forward.1} parent=1 // pred_check
      _
    $region31: #{bert_forward.1} parent=1 // pred_check_branch
      %45 = sbr.rel (0) target = $region33
    $region32: #{bert_forward.1} parent=1 // pred_region
      _
    $region33: #{bert_forward.1} parent=1 // pred_fallthru
      _
    // Predicated region
    $region34: #{bert_forward.1} parent=1 // pred_check
      _
    $region35: #{bert_forward.1} parent=1 // pred_check_branch
      %47 = sbr.rel (0) target = $region37
    $region36: #{bert_forward.1} parent=1 // pred_region
      _
    $region37: #{bert_forward.1} parent=1 // pred_fallthru
      _
    // Predicated region
    $region38: #{bert_forward.1} parent=1 // pred_check
      _
    $region39: #{bert_forward.1} parent=1 // pred_check_branch
      %49 = sbr.rel (0) target = $region41
    $region40: #{bert_forward.1} parent=1 // pred_region
      _
    $region41: #{bert_forward.1} parent=1 // pred_fallthru
      _
    // Predicated region
    $region42: #{bert_forward.1} parent=1 // pred_check
      _
    $region43: #{bert_forward.1} parent=1 // pred_check_branch
      %51 = sbr.rel (0) target = $region45
    $region44: #{bert_forward.1} parent=1 // pred_region
      _
    $region45: #{bert_forward.1} parent=1 // pred_fallthru
      _
    // Predicated region
    $region46: #{bert_forward.1} parent=1 // pred_check
      _
    $region47: #{bert_forward.1} parent=1 // pred_check_branch
      %53 = sbr.rel (0) target = $region49
    $region48: #{bert_forward.1} parent=1 // pred_region
      _
    $region49: #{bert_forward.1} parent=1 // pred_fallthru
      _
    // Predicated region
    $region50: #{bert_forward.1} parent=1 // pred_check
      _
    $region51: #{bert_forward.1} parent=1 // pred_check_branch
      %55 = sbr.rel (0) target = $region53
    $region52: #{bert_forward.1} parent=1 // pred_region
      _
    $region53: #{bert_forward.1} parent=1 // pred_fallthru
      _
    // Predicated region
    $region54: #{bert_forward.1} parent=1 // pred_check
      _
    $region55: #{bert_forward.1} parent=1 // pred_check_branch
      %57 = sbr.rel (0) target = $region57
    $region56: #{bert_forward.1} parent=1 // pred_region
      _
    $region57: #{bert_forward.1} parent=1 // pred_fallthru
      _
    // Predicated region
    $region58: #{bert_forward.1} parent=1 // pred_check
      _
    $region59: #{bert_forward.1} parent=1 // pred_check_branch
      %59 = sbr.rel (0) target = $region61
    $region60: #{bert_forward.1} parent=1 // pred_region
      _
    $region61: #{bert_forward.1} parent=1 // pred_fallthru
      _
    // Predicated region
    $region62: #{bert_forward.1} parent=1 // pred_check
      _
    $region63: #{bert_forward.1} parent=1 // pred_check_branch
      %61 = sbr.rel (0) target = $region65
    $region64: #{bert_forward.1} parent=1 // pred_region
      _
    $region65: #{bert_forward.1} parent=1 // pred_fallthru
      _
    // Predicated region
    $region66: #{bert_forward.1} parent=1 // pred_check
      _
    $region67: #{bert_forward.1} parent=1 // pred_check_branch
      %63 = sbr.rel (0) target = $region69
    $region68: #{bert_forward.1} parent=1 // pred_region
      _
    $region69: #{bert_forward.1} parent=1 // pred_fallthru
      _
    // Predicated region
    $region70: #{bert_forward.1} parent=1 // pred_check
      _
    $region71: #{bert_forward.1} parent=1 // pred_check_branch
      %65 = sbr.rel (0) target = $region73
    $region72: #{bert_forward.1} parent=1 // pred_region
      _
    $region73: #{bert_forward.1} parent=1 // pred_fallthru
      _
    // Predicated region
    $region74: #{bert_forward.1} parent=1 // pred_check
      _
    $region75: #{bert_forward.1} parent=1 // pred_check_branch
      %67 = sbr.rel (0) target = $region77
    $region76: #{bert_forward.1} parent=1 // pred_region
      _
    $region77: #{bert_forward.1} parent=1 // pred_fallthru
      _
    // Predicated region
    $region78: #{bert_forward.1} parent=1 // pred_check
      _
    $region79: #{bert_forward.1} parent=1 // pred_check_branch
      %69 = sbr.rel (0) target = $region81
    $region80: #{bert_forward.1} parent=1 // pred_region
      %s71 = ssub.s32 16, 16
      %72 = vsyncadd [#allocation4], %s71
      %s74 = sshll.u32 %s19, 4
      %s75 = int_to_ptr.vmem [resolvable:$true] %s74
      %77 = dma.vmem_to_smem %s75, 16, [#allocation2], [#allocation4]
    $region81: #{bert_forward.1} parent=1 // pred_fallthru
      _
    // Predicated region
    $region82: #{bert_forward.1} parent=1 // pred_check
      _
    $region83: #{bert_forward.1} parent=1 // pred_check_branch
      %79 = sbr.rel (0) target = $region85
    $region84: #{bert_forward.1} parent=1 // pred_region
      %80 = dma.done [#allocation4], 16
    $region85: #{bert_forward.1} parent=1 // pred_fallthru
      _
    %81 = sfence
    %v83 = vld [vmem:[%s0] sm:$0xff]
    %v84 = vld [vmem:[%s0 + $0x8] sm:$0xff]
    %v85 = vld [vmem:[%s1] sm:$0x1]
    %v86 = vld [vmem:[%s2] sm:$0x1]
    %vm87 = vcmask 261120
    %v88 = vsel %vm87, %v83, 0.0
    %89 = vadd.xlane.f32.xlu0 %v88
    %v90 = vpop.xlane.xlu0 %89
    %v91 = vsel %vm87, %v84, 0.0
    %92 = vadd.xlane.f32.xlu0 %v91
    %v93 = vpop.xlane.xlu0 %92
    %v94 = vrcp.pop 32.0
    %v95 = vmul.f32 %v90, %v94
    %v96 = vmul.f32 %v93, %v94
    %v97 = vsub.f32 %v83, %v95
    %v98 = vsub.f32 %v84, %v96
    %v99 = vmul.f32 %v97, %v97
    %v100 = vmul.f32 %v98, %v98
    %v101 = vsel %vm87, %v99, 0.0
    %102 = vadd.xlane.f32.xlu0 %v101
    %v103 = vpop.xlane.xlu0 %102
    %v104 = vsel %vm87, %v100, 0.0
    %105 = vadd.xlane.f32.xlu0 %v104
    %v106 = vpop.xlane.xlu0 %105
    %v107 = vmul.f32 %v103, %v94
    %v108 = vmul.f32 %v106, %v94
    %v109 = vadd.f32 %v107, 1e-12
    %v110 = vadd.f32 %v108, 1e-12
    %v111 = vrsqrt.pop %v109
    %v112 = vrsqrt.pop %v110
    %v113 = vmul.f32 %v97, %v111
    %v114 = vmul.f32 %v98, %v112
    %v116 = vlaneseq
    %v117 = vshrl.u32 %v116, 7
    %v118 = vsub.s32 0, %v117
    %v119 = vrot.slane %v85, %v118
    %v121 = vmul.f32 %v113, %v119
    %v122 = vmul.f32 %v114, %v119
    %v124 = vlaneseq
    %v125 = vshrl.u32 %v124, 7
    %v126 = vsub.s32 0, %v125
    %v127 = vrot.slane %v86, %v126
    %v129 = vadd.f32 %v121, %v127
    %v130 = vadd.f32 %v122, %v127
    %v131 = vpack.c.bf16 %v130, %v129
    %v132 = vld [vmem:[%s3] sm:$0xf]
    %v133 = vld [vmem:[%s3 + $0x4] sm:$0xf]
    %v134 = vld [vmem:[%s3 + $0x8] sm:$0xf]
    %v135 = vld [vmem:[%s3 + $0xc] sm:$0xf]
    %v136 = vld [vmem:[%s4] sm:$0x1]
    %v138 = vlaneseq
    %v139 = vshrl.u32 %v138, 7
    %v140 = vsub.s32 0, %v139
    %v141 = vrot.slane %v136, %v140
    %v147 = vunpack.c.l.b16 %v132
    %v148 = vunpack.c.l.b16 %v133
    %v149 = vunpack.c.l.b16 %v134
    %v150 = vunpack.c.l.b16 %v135
    %v151 = vpack.c.b16 %v148, %v147
    %v152 = vpack.c.b16 %v150, %v149
    %v156 = vsel %vm87, %v131, 0
    %158 = vmatprep.subr.bf16.mxu0 0
    %159 = vmatpush1.bf16.msra.mxu0 0
    %160 = vmatprep.subr.bf16.mxu0 0
    %161 = vmatpush1.bf16.msra.mxu0 0
    %162 = vmatprep.subr.bf16.mxu0 0
    %163 = vmatpush1.bf16.msra.mxu0 0
    %164 = vmatprep.subr.bf16.mxu0 0
    %165 = vmatpush1.bf16.msra.mxu0 0
    %166 = vmatprep.subr.bf16.mxu0 0
    %167 = vmatpush1.bf16.msra.mxu0 0
    %168 = vmatprep.subr.bf16.mxu0 0
    %169 = vmatpush1.bf16.msra.mxu0 0
    %170 = vmatprep.subr.bf16.mxu0 0
    %171 = vmatpush1.bf16.msra.mxu0 %v152
    %172 = vmatprep.subr.bf16.mxu0 0
    %173 = vmatpush1.bf16.msra.mxu0 %v151
    %174 = vmatprep.subr.bf16.mxu0 0
    %175 = vmatpush2.bf16.msra.mxu0 0
    %176 = vmatprep.subr.bf16.mxu0 0
    %177 = vmatpush2.bf16.msra.mxu0 0
    %178 = vmatprep.subr.bf16.mxu0 0
    %179 = vmatpush2.bf16.msra.mxu0 0
    %180 = vmatprep.subr.bf16.mxu0 0
    %181 = vmatpush2.bf16.msra.mxu0 0
    %182 = vmatprep.subr.bf16.mxu0 0
    %183 = vmatpush2.bf16.msra.mxu0 0
    %184 = vmatprep.subr.bf16.mxu0 0
    %185 = vmatpush2.bf16.msra.mxu0 0
    %186 = vmatprep.subr.bf16.mxu0 0
    %187 = vmatpush2.bf16.msra.mxu0 0
    %188 = vmatprep.subr.bf16.mxu0 0
    %189 = vmatpush2.bf16.msra.mxu0 0
    %190 = vmatprep.mubr.bf16.mxu0 0
    %191 = vmatmul.mubr.bf16.gmra.mxu0 %v156
    %v192 = vpop.f32.mrf.mxu0
    %v193 = vadd.f32 %v141, %v192
    %v194 = vpop.f32.mrf.mxu0
    %v195 = vpop.f32.mrf.mxu0
    %v196 = vadd.f32 %v141, %v195
    %v197 = vpop.f32.mrf.mxu0
    %198 = vdwg.mxu0
    %201 = vrot.lane.b32.xlu0 %v193, 112
    %v202 = vpop.permute.xlu0 %201
    %203 = vrot.lane.b32.xlu0 %v196, 112
    %v204 = vpop.permute.xlu0 %203
    %v207 = vcombine.high %v193, 0.0
    %v209 = vunpack.c.l.s4 1983009808
    %v210 = vunpack.c.0.s8 %v209
    %v211 = vlaneseq
    %v212 = vshrl.u32 %v211, 7
    %v213 = vsub.s32 %v210, %v212
    %v214 = vrot.slane %v193, %v213
    %v216 = vunpack.c.l.s4 1983009808
    %v217 = vunpack.c.0.s8 %v216
    %v218 = vlaneseq
    %v219 = vshrl.u32 %v218, 7
    %v220 = vsub.s32 %v217, %v219
    %v221 = vrot.slane %v207, %v220
    %v222 = vcombine.high %v202, 0.0
    %v224 = vunpack.c.l.s4 1983009808
    %v225 = vunpack.c.0.s8 %v224
    %v226 = vlaneseq
    %v227 = vshrl.u32 %v226, 7
    %v228 = vsub.s32 %v225, %v227
    %v229 = vrot.slane %v202, %v228
    %v231 = vunpack.c.l.s4 1983009808
    %v232 = vunpack.c.0.s8 %v231
    %v233 = vlaneseq
    %v234 = vshrl.u32 %v233, 7
    %v235 = vsub.s32 %v232, %v234
    %v236 = vrot.slane %v222, %v235
    %v237 = vcombine.low %v214, %v229
    %v238 = vcombine.high %v214, %v229
    %v240 = vunpack.c.l.s4 1934713408
    %v241 = vunpack.c.0.s8 %v240
    %v242 = vlaneseq
    %v243 = vshrl.u32 %v242, 7
    %v244 = vsub.s32 %v241, %v243
    %v245 = vrot.slane %v237, %v244
    %v247 = vunpack.c.l.s4 1934713408
    %v248 = vunpack.c.0.s8 %v247
    %v249 = vlaneseq
    %v250 = vshrl.u32 %v249, 7
    %v251 = vsub.s32 %v248, %v250
    %v252 = vrot.slane %v238, %v251
    %v253 = vcombine.low %v221, %v236
    %v254 = vcombine.high %v221, %v236
    %v256 = vunpack.c.l.s4 1934713408
    %v257 = vunpack.c.0.s8 %v256
    %v258 = vlaneseq
    %v259 = vshrl.u32 %v258, 7
    %v260 = vsub.s32 %v257, %v259
    %v261 = vrot.slane %v253, %v260
    %v263 = vunpack.c.l.s4 1934713408
    %v264 = vunpack.c.0.s8 %v263
    %v265 = vlaneseq
    %v266 = vshrl.u32 %v265, 7
    %v267 = vsub.s32 %v264, %v266
    %v268 = vrot.slane %v254, %v267
    %v269 = vcombine.high %v245, 0.0
    %v270 = vcombine.high %v252, 0.0
    %v271 = vcombine.high %v261, 0.0
    %v272 = vcombine.high %v268, 0.0
    %v273 = vcombine.high %v196, 0.0
    %v275 = vunpack.c.l.s4 1983009808
    %v276 = vunpack.c.0.s8 %v275
    %v277 = vlaneseq
    %v278 = vshrl.u32 %v277, 7
    %v279 = vsub.s32 %v276, %v278
    %v280 = vrot.slane %v196, %v279
    %v282 = vunpack.c.l.s4 1983009808
    %v283 = vunpack.c.0.s8 %v282
    %v284 = vlaneseq
    %v285 = vshrl.u32 %v284, 7
    %v286 = vsub.s32 %v283, %v285
    %v287 = vrot.slane %v273, %v286
    %v288 = vcombine.high %v204, 0.0
    %v290 = vunpack.c.l.s4 1983009808
    %v291 = vunpack.c.0.s8 %v290
    %v292 = vlaneseq
    %v293 = vshrl.u32 %v292, 7
    %v294 = vsub.s32 %v291, %v293
    %v295 = vrot.slane %v204, %v294
    %v297 = vunpack.c.l.s4 1983009808
    %v298 = vunpack.c.0.s8 %v297
    %v299 = vlaneseq
    %v300 = vshrl.u32 %v299, 7
    %v301 = vsub.s32 %v298, %v300
    %v302 = vrot.slane %v288, %v301
    %v303 = vcombine.low %v280, %v295
    %v304 = vcombine.high %v280, %v295
    %v306 = vunpack.c.l.s4 1934713408
    %v307 = vunpack.c.0.s8 %v306
    %v308 = vlaneseq
    %v309 = vshrl.u32 %v308, 7
    %v310 = vsub.s32 %v307, %v309
    %v311 = vrot.slane %v303, %v310
    %v313 = vunpack.c.l.s4 1934713408
    %v314 = vunpack.c.0.s8 %v313
    %v315 = vlaneseq
    %v316 = vshrl.u32 %v315, 7
    %v317 = vsub.s32 %v314, %v316
    %v318 = vrot.slane %v304, %v317
    %v319 = vcombine.low %v287, %v302
    %v320 = vcombine.high %v287, %v302
    %v322 = vunpack.c.l.s4 1934713408
    %v323 = vunpack.c.0.s8 %v322
    %v324 = vlaneseq
    %v325 = vshrl.u32 %v324, 7
    %v326 = vsub.s32 %v323, %v325
    %v327 = vrot.slane %v319, %v326
    %v329 = vunpack.c.l.s4 1934713408
    %v330 = vunpack.c.0.s8 %v329
    %v331 = vlaneseq
    %v332 = vshrl.u32 %v331, 7
    %v333 = vsub.s32 %v330, %v332
    %v334 = vrot.slane %v320, %v333
    %v335 = vcombine.high %v311, 0.0
    %v336 = vcombine.high %v318, 0.0
    %v337 = vcombine.high %v327, 0.0
    %v338 = vcombine.high %v334, 0.0
    %v339 = vcombine.low %v245, %v252
    %v341 = vunpack.c.l.s4 1983009808
    %v342 = vunpack.c.0.s8 %v341
    %v343 = vlaneseq
    %v344 = vshrl.u32 %v343, 7
    %v345 = vsub.s32 %v342, %v344
    %v346 = vrot.slane %v339, %v345
    %v347 = vcombine.low %v269, %v270
    %v349 = vunpack.c.l.s4 1983009808
    %v350 = vunpack.c.0.s8 %v349
    %v351 = vlaneseq
    %v352 = vshrl.u32 %v351, 7
    %v353 = vsub.s32 %v350, %v352
    %v354 = vrot.slane %v347, %v353
    %v355 = vcombine.low %v261, %v268
    %v357 = vunpack.c.l.s4 1983009808
    %v358 = vunpack.c.0.s8 %v357
    %v359 = vlaneseq
    %v360 = vshrl.u32 %v359, 7
    %v361 = vsub.s32 %v358, %v360
    %v362 = vrot.slane %v355, %v361
    %v363 = vcombine.low %v271, %v272
    %v365 = vunpack.c.l.s4 1983009808
    %v366 = vunpack.c.0.s8 %v365
    %v367 = vlaneseq
    %v368 = vshrl.u32 %v367, 7
    %v369 = vsub.s32 %v366, %v368
    %v370 = vrot.slane %v363, %v369
    %v371 = vcombine.low %v346, %v354
    %v373 = vunpack.c.l.s4 1934713408
    %v374 = vunpack.c.0.s8 %v373
    %v375 = vlaneseq
    %v376 = vshrl.u32 %v375, 7
    %v377 = vsub.s32 %v374, %v376
    %v378 = vrot.slane %v371, %v377
    %v379 = vcombine.low %v362, %v370
    %v381 = vunpack.c.l.s4 1934713408
    %v382 = vunpack.c.0.s8 %v381
    %v383 = vlaneseq
    %v384 = vshrl.u32 %v383, 7
    %v385 = vsub.s32 %v382, %v384
    %v386 = vrot.slane %v379, %v385
    %v387 = vcombine.low %v378, %v386
    %v388 = vcombine.high %v378, %v386
    %v389 = vcombine.low %v311, %v318
    %v391 = vunpack.c.l.s4 1983009808
    %v392 = vunpack.c.0.s8 %v391
    %v393 = vlaneseq
    %v394 = vshrl.u32 %v393, 7
    %v395 = vsub.s32 %v392, %v394
    %v396 = vrot.slane %v389, %v395
    %v397 = vcombine.low %v335, %v336
    %v399 = vunpack.c.l.s4 1983009808
    %v400 = vunpack.c.0.s8 %v399
    %v401 = vlaneseq
    %v402 = vshrl.u32 %v401, 7
    %v403 = vsub.s32 %v400, %v402
    %v404 = vrot.slane %v397, %v403
    %v405 = vcombine.low %v327, %v334
    %v407 = vunpack.c.l.s4 1983009808
    %v408 = vunpack.c.0.s8 %v407
    %v409 = vlaneseq
    %v410 = vshrl.u32 %v409, 7
    %v411 = vsub.s32 %v408, %v410
    %v412 = vrot.slane %v405, %v411
    %v413 = vcombine.low %v337, %v338
    %v415 = vunpack.c.l.s4 1983009808
    %v416 = vunpack.c.0.s8 %v415
    %v417 = vlaneseq
    %v418 = vshrl.u32 %v417, 7
    %v419 = vsub.s32 %v416, %v418
    %v420 = vrot.slane %v413, %v419
    %v421 = vcombine.low %v396, %v404
    %v423 = vunpack.c.l.s4 1934713408
    %v424 = vunpack.c.0.s8 %v423
    %v425 = vlaneseq
    %v426 = vshrl.u32 %v425, 7
    %v427 = vsub.s32 %v424, %v426
    %v428 = vrot.slane %v421, %v427
    %v429 = vcombine.low %v412, %v420
    %v431 = vunpack.c.l.s4 1934713408
    %v432 = vunpack.c.0.s8 %v431
    %v433 = vlaneseq
    %v434 = vshrl.u32 %v433, 7
    %v435 = vsub.s32 %v432, %v434
    %v436 = vrot.slane %v429, %v435
    %v437 = vcombine.low %v428, %v436
    %v438 = vcombine.high %v428, %v436
    %v439 = vpack.c.bf16 %v387, %v387
    %v440 = vpack.c.bf16 %v388, %v388
    %v441 = vpack.c.bf16 %v437, %v437
    %v442 = vpack.c.bf16 %v438, %v438
    %443 = vrot.lane.b32.xlu0 %v193, 96
    %v444 = vpop.permute.xlu0 %443
    %445 = vrot.lane.b32.xlu0 %v196, 96
    %v446 = vpop.permute.xlu0 %445
    %447 = vrot.lane.b32.xlu0 %v202, 96
    %v448 = vpop.permute.xlu0 %447
    %449 = vrot.lane.b32.xlu0 %v204, 96
    %v450 = vpop.permute.xlu0 %449
    %v455 = vcombine.high %v444, 0.0
    %v457 = vunpack.c.l.s4 1983009808
    %v458 = vunpack.c.0.s8 %v457
    %v459 = vlaneseq
    %v460 = vshrl.u32 %v459, 7
    %v461 = vsub.s32 %v458, %v460
    %v462 = vrot.slane %v444, %v461
    %v464 = vunpack.c.l.s4 1983009808
    %v465 = vunpack.c.0.s8 %v464
    %v466 = vlaneseq
    %v467 = vshrl.u32 %v466, 7
    %v468 = vsub.s32 %v465, %v467
    %v469 = vrot.slane %v455, %v468
    %v470 = vcombine.high %v448, 0.0
    %v472 = vunpack.c.l.s4 1983009808
    %v473 = vunpack.c.0.s8 %v472
    %v474 = vlaneseq
    %v475 = vshrl.u32 %v474, 7
    %v476 = vsub.s32 %v473, %v475
    %v477 = vrot.slane %v448, %v476
    %v479 = vunpack.c.l.s4 1983009808
    %v480 = vunpack.c.0.s8 %v479
    %v481 = vlaneseq
    %v482 = vshrl.u32 %v481, 7
    %v483 = vsub.s32 %v480, %v482
    %v484 = vrot.slane %v470, %v483
    %v485 = vcombine.low %v462, %v477
    %v486 = vcombine.high %v462, %v477
    %v488 = vunpack.c.l.s4 1934713408
    %v489 = vunpack.c.0.s8 %v488
    %v490 = vlaneseq
    %v491 = vshrl.u32 %v490, 7
    %v492 = vsub.s32 %v489, %v491
    %v493 = vrot.slane %v485, %v492
    %v495 = vunpack.c.l.s4 1934713408
    %v496 = vunpack.c.0.s8 %v495
    %v497 = vlaneseq
    %v498 = vshrl.u32 %v497, 7
    %v499 = vsub.s32 %v496, %v498
    %v500 = vrot.slane %v486, %v499
    %v501 = vcombine.low %v469, %v484
    %v502 = vcombine.high %v469, %v484
    %v504 = vunpack.c.l.s4 1934713408
    %v505 = vunpack.c.0.s8 %v504
    %v506 = vlaneseq
    %v507 = vshrl.u32 %v506, 7
    %v508 = vsub.s32 %v505, %v507
    %v509 = vrot.slane %v501, %v508
    %v511 = vunpack.c.l.s4 1934713408
    %v512 = vunpack.c.0.s8 %v511
    %v513 = vlaneseq
    %v514 = vshrl.u32 %v513, 7
    %v515 = vsub.s32 %v512, %v514
    %v516 = vrot.slane %v502, %v515
    %v517 = vcombine.high %v493, 0.0
    %v518 = vcombine.high %v500, 0.0
    %v519 = vcombine.high %v509, 0.0
    %v520 = vcombine.high %v516, 0.0
    %v521 = vcombine.high %v446, 0.0
    %v523 = vunpack.c.l.s4 1983009808
    %v524 = vunpack.c.0.s8 %v523
    %v525 = vlaneseq
    %v526 = vshrl.u32 %v525, 7
    %v527 = vsub.s32 %v524, %v526
    %v528 = vrot.slane %v446, %v527
    %v530 = vunpack.c.l.s4 1983009808
    %v531 = vunpack.c.0.s8 %v530
    %v532 = vlaneseq
    %v533 = vshrl.u32 %v532, 7
    %v534 = vsub.s32 %v531, %v533
    %v535 = vrot.slane %v521, %v534
    %v536 = vcombine.high %v450, 0.0
    %v538 = vunpack.c.l.s4 1983009808
    %v539 = vunpack.c.0.s8 %v538
    %v540 = vlaneseq
    %v541 = vshrl.u32 %v540, 7
    %v542 = vsub.s32 %v539, %v541
    %v543 = vrot.slane %v450, %v542
    %v545 = vunpack.c.l.s4 1983009808
    %v546 = vunpack.c.0.s8 %v545
    %v547 = vlaneseq
    %v548 = vshrl.u32 %v547, 7
    %v549 = vsub.s32 %v546, %v548
    %v550 = vrot.slane %v536, %v549
    %v551 = vcombine.low %v528, %v543
    %v552 = vcombine.high %v528, %v543
    %v554 = vunpack.c.l.s4 1934713408
    %v555 = vunpack.c.0.s8 %v554
    %v556 = vlaneseq
    %v557 = vshrl.u32 %v556, 7
    %v558 = vsub.s32 %v555, %v557
    %v559 = vrot.slane %v551, %v558
    %v561 = vunpack.c.l.s4 1934713408
    %v562 = vunpack.c.0.s8 %v561
    %v563 = vlaneseq
    %v564 = vshrl.u32 %v563, 7
    %v565 = vsub.s32 %v562, %v564
    %v566 = vrot.slane %v552, %v565
    %v567 = vcombine.low %v535, %v550
    %v568 = vcombine.high %v535, %v550
    %v570 = vunpack.c.l.s4 1934713408
    %v571 = vunpack.c.0.s8 %v570
    %v572 = vlaneseq
    %v573 = vshrl.u32 %v572, 7
    %v574 = vsub.s32 %v571, %v573
    %v575 = vrot.slane %v567, %v574
    %v577 = vunpack.c.l.s4 1934713408
    %v578 = vunpack.c.0.s8 %v577
    %v579 = vlaneseq
    %v580 = vshrl.u32 %v579, 7
    %v581 = vsub.s32 %v578, %v580
    %v582 = vrot.slane %v568, %v581
    %v583 = vcombine.high %v559, 0.0
    %v584 = vcombine.high %v566, 0.0
    %v585 = vcombine.high %v575, 0.0
    %v586 = vcombine.high %v582, 0.0
    %v587 = vcombine.low %v493, %v500
    %v589 = vunpack.c.l.s4 1983009808
    %v590 = vunpack.c.0.s8 %v589
    %v591 = vlaneseq
    %v592 = vshrl.u32 %v591, 7
    %v593 = vsub.s32 %v590, %v592
    %v594 = vrot.slane %v587, %v593
    %v595 = vcombine.low %v517, %v518
    %v597 = vunpack.c.l.s4 1983009808
    %v598 = vunpack.c.0.s8 %v597
    %v599 = vlaneseq
    %v600 = vshrl.u32 %v599, 7
    %v601 = vsub.s32 %v598, %v600
    %v602 = vrot.slane %v595, %v601
    %v603 = vcombine.low %v509, %v516
    %v605 = vunpack.c.l.s4 1983009808
    %v606 = vunpack.c.0.s8 %v605
    %v607 = vlaneseq
    %v608 = vshrl.u32 %v607, 7
    %v609 = vsub.s32 %v606, %v608
    %v610 = vrot.slane %v603, %v609
    %v611 = vcombine.low %v519, %v520
    %v613 = vunpack.c.l.s4 1983009808
    %v614 = vunpack.c.0.s8 %v613
    %v615 = vlaneseq
    %v616 = vshrl.u32 %v615, 7
    %v617 = vsub.s32 %v614, %v616
    %v618 = vrot.slane %v611, %v617
    %v619 = vcombine.low %v594, %v602
    %v621 = vunpack.c.l.s4 1934713408
    %v622 = vunpack.c.0.s8 %v621
    %v623 = vlaneseq
    %v624 = vshrl.u32 %v623, 7
    %v625 = vsub.s32 %v622, %v624
    %v626 = vrot.slane %v619, %v625
    %v627 = vcombine.low %v610, %v618
    %v629 = vunpack.c.l.s4 1934713408
    %v630 = vunpack.c.0.s8 %v629
    %v631 = vlaneseq
    %v632 = vshrl.u32 %v631, 7
    %v633 = vsub.s32 %v630, %v632
    %v634 = vrot.slane %v627, %v633
    %v635 = vcombine.low %v626, %v634
    %v636 = vcombine.high %v626, %v634
    %v637 = vcombine.low %v559, %v566
    %v639 = vunpack.c.l.s4 1983009808
    %v640 = vunpack.c.0.s8 %v639
    %v641 = vlaneseq
    %v642 = vshrl.u32 %v641, 7
    %v643 = vsub.s32 %v640, %v642
    %v644 = vrot.slane %v637, %v643
    %v645 = vcombine.low %v583, %v584
    %v647 = vunpack.c.l.s4 1983009808
    %v648 = vunpack.c.0.s8 %v647
    %v649 = vlaneseq
    %v650 = vshrl.u32 %v649, 7
    %v651 = vsub.s32 %v648, %v650
    %v652 = vrot.slane %v645, %v651
    %v653 = vcombine.low %v575, %v582
    %v655 = vunpack.c.l.s4 1983009808
    %v656 = vunpack.c.0.s8 %v655
    %v657 = vlaneseq
    %v658 = vshrl.u32 %v657, 7
    %v659 = vsub.s32 %v656, %v658
    %v660 = vrot.slane %v653, %v659
    %v661 = vcombine.low %v585, %v586
    %v663 = vunpack.c.l.s4 1983009808
    %v664 = vunpack.c.0.s8 %v663
    %v665 = vlaneseq
    %v666 = vshrl.u32 %v665, 7
    %v667 = vsub.s32 %v664, %v666
    %v668 = vrot.slane %v661, %v667
    %v669 = vcombine.low %v644, %v652
    %v671 = vunpack.c.l.s4 1934713408
    %v672 = vunpack.c.0.s8 %v671
    %v673 = vlaneseq
    %v674 = vshrl.u32 %v673, 7
    %v675 = vsub.s32 %v672, %v674
    %v676 = vrot.slane %v669, %v675
    %v677 = vcombine.low %v660, %v668
    %v679 = vunpack.c.l.s4 1934713408
    %v680 = vunpack.c.0.s8 %v679
    %v681 = vlaneseq
    %v682 = vshrl.u32 %v681, 7
    %v683 = vsub.s32 %v680, %v682
    %v684 = vrot.slane %v677, %v683
    %v685 = vcombine.low %v676, %v684
    %v686 = vcombine.high %v676, %v684
    %v687 = vpack.c.bf16 %v635, %v635
    %v688 = vpack.c.bf16 %v636, %v636
    %v689 = vpack.c.bf16 %v685, %v685
    %v690 = vpack.c.bf16 %v686, %v686
    %691 = vrot.lane.b32.xlu0 %v193, 64
    %v692 = vpop.permute.xlu0 %691
    %693 = vrot.lane.b32.xlu0 %v196, 64
    %v694 = vpop.permute.xlu0 %693
    %695 = vrot.lane.b32.xlu0 %v202, 64
    %v696 = vpop.permute.xlu0 %695
    %697 = vrot.lane.b32.xlu0 %v204, 64
    %v698 = vpop.permute.xlu0 %697
    %v703 = vcombine.high %v692, 0.0
    %v705 = vunpack.c.l.s4 1983009808
    %v706 = vunpack.c.0.s8 %v705
    %v707 = vlaneseq
    %v708 = vshrl.u32 %v707, 7
    %v709 = vsub.s32 %v706, %v708
    %v710 = vrot.slane %v692, %v709
    %v712 = vunpack.c.l.s4 1983009808
    %v713 = vunpack.c.0.s8 %v712
    %v714 = vlaneseq
    %v715 = vshrl.u32 %v714, 7
    %v716 = vsub.s32 %v713, %v715
    %v717 = vrot.slane %v703, %v716
    %v718 = vcombine.high %v696, 0.0
    %v720 = vunpack.c.l.s4 1983009808
    %v721 = vunpack.c.0.s8 %v720
    %v722 = vlaneseq
    %v723 = vshrl.u32 %v722, 7
    %v724 = vsub.s32 %v721, %v723
    %v725 = vrot.slane %v696, %v724
    %v727 = vunpack.c.l.s4 1983009808
    %v728 = vunpack.c.0.s8 %v727
    %v729 = vlaneseq
    %v730 = vshrl.u32 %v729, 7
    %v731 = vsub.s32 %v728, %v730
    %v732 = vrot.slane %v718, %v731
    %v733 = vcombine.low %v710, %v725
    %v734 = vcombine.high %v710, %v725
    %v736 = vunpack.c.l.s4 1934713408
    %v737 = vunpack.c.0.s8 %v736
    %v738 = vlaneseq
    %v739 = vshrl.u32 %v738, 7
    %v740 = vsub.s32 %v737, %v739
    %v741 = vrot.slane %v733, %v740
    %v743 = vunpack.c.l.s4 1934713408
    %v744 = vunpack.c.0.s8 %v743
    %v745 = vlaneseq
    %v746 = vshrl.u32 %v745, 7
    %v747 = vsub.s32 %v744, %v746
    %v748 = vrot.slane %v734, %v747
    %v749 = vcombine.low %v717, %v732
    %v750 = vcombine.high %v717, %v732
    %v752 = vunpack.c.l.s4 1934713408
    %v753 = vunpack.c.0.s8 %v752
    %v754 = vlaneseq
    %v755 = vshrl.u32 %v754, 7
    %v756 = vsub.s32 %v753, %v755
    %v757 = vrot.slane %v749, %v756
    %v759 = vunpack.c.l.s4 1934713408
    %v760 = vunpack.c.0.s8 %v759
    %v761 = vlaneseq
    %v762 = vshrl.u32 %v761, 7
    %v763 = vsub.s32 %v760, %v762
    %v764 = vrot.slane %v750, %v763
    %v765 = vcombine.high %v741, 0.0
    %v766 = vcombine.high %v748, 0.0
    %v767 = vcombine.high %v757, 0.0
    %v768 = vcombine.high %v764, 0.0
    %v769 = vcombine.high %v694, 0.0
    %v771 = vunpack.c.l.s4 1983009808
    %v772 = vunpack.c.0.s8 %v771
    %v773 = vlaneseq
    %v774 = vshrl.u32 %v773, 7
    %v775 = vsub.s32 %v772, %v774
    %v776 = vrot.slane %v694, %v775
    %v778 = vunpack.c.l.s4 1983009808
    %v779 = vunpack.c.0.s8 %v778
    %v780 = vlaneseq
    %v781 = vshrl.u32 %v780, 7
    %v782 = vsub.s32 %v779, %v781
    %v783 = vrot.slane %v769, %v782
    %v784 = vcombine.high %v698, 0.0
    %v786 = vunpack.c.l.s4 1983009808
    %v787 = vunpack.c.0.s8 %v786
    %v788 = vlaneseq
    %v789 = vshrl.u32 %v788, 7
    %v790 = vsub.s32 %v787, %v789
    %v791 = vrot.slane %v698, %v790
    %v793 = vunpack.c.l.s4 1983009808
    %v794 = vunpack.c.0.s8 %v793
    %v795 = vlaneseq
    %v796 = vshrl.u32 %v795, 7
    %v797 = vsub.s32 %v794, %v796
    %v798 = vrot.slane %v784, %v797
    %v799 = vcombine.low %v776, %v791
    %v800 = vcombine.high %v776, %v791
    %v802 = vunpack.c.l.s4 1934713408
    %v803 = vunpack.c.0.s8 %v802
    %v804 = vlaneseq
    %v805 = vshrl.u32 %v804, 7
    %v806 = vsub.s32 %v803, %v805
    %v807 = vrot.slane %v799, %v806
    %v809 = vunpack.c.l.s4 1934713408
    %v810 = vunpack.c.0.s8 %v809
    %v811 = vlaneseq
    %v812 = vshrl.u32 %v811, 7
    %v813 = vsub.s32 %v810, %v812
    %v814 = vrot.slane %v800, %v813
    %v815 = vcombine.low %v783, %v798
    %v816 = vcombine.high %v783, %v798
    %v818 = vunpack.c.l.s4 1934713408
    %v819 = vunpack.c.0.s8 %v818
    %v820 = vlaneseq
    %v821 = vshrl.u32 %v820, 7
    %v822 = vsub.s32 %v819, %v821
    %v823 = vrot.slane %v815, %v822
    %v825 = vunpack.c.l.s4 1934713408
    %v826 = vunpack.c.0.s8 %v825
    %v827 = vlaneseq
    %v828 = vshrl.u32 %v827, 7
    %v829 = vsub.s32 %v826, %v828
    %v830 = vrot.slane %v816, %v829
    %v831 = vcombine.high %v807, 0.0
    %v832 = vcombine.high %v814, 0.0
    %v833 = vcombine.high %v823, 0.0
    %v834 = vcombine.high %v830, 0.0
    %v835 = vcombine.low %v741, %v748
    %v837 = vunpack.c.l.s4 1983009808
    %v838 = vunpack.c.0.s8 %v837
    %v839 = vlaneseq
    %v840 = vshrl.u32 %v839, 7
    %v841 = vsub.s32 %v838, %v840
    %v842 = vrot.slane %v835, %v841
    %v843 = vcombine.low %v765, %v766
    %v845 = vunpack.c.l.s4 1983009808
    %v846 = vunpack.c.0.s8 %v845
    %v847 = vlaneseq
    %v848 = vshrl.u32 %v847, 7
    %v849 = vsub.s32 %v846, %v848
    %v850 = vrot.slane %v843, %v849
    %v851 = vcombine.low %v757, %v764
    %v853 = vunpack.c.l.s4 1983009808
    %v854 = vunpack.c.0.s8 %v853
    %v855 = vlaneseq
    %v856 = vshrl.u32 %v855, 7
    %v857 = vsub.s32 %v854, %v856
    %v858 = vrot.slane %v851, %v857
    %v859 = vcombine.low %v767, %v768
    %v861 = vunpack.c.l.s4 1983009808
    %v862 = vunpack.c.0.s8 %v861
    %v863 = vlaneseq
    %v864 = vshrl.u32 %v863, 7
    %v865 = vsub.s32 %v862, %v864
    %v866 = vrot.slane %v859, %v865
    %v867 = vcombine.low %v842, %v850
    %v869 = vunpack.c.l.s4 1934713408
    %v870 = vunpack.c.0.s8 %v869
    %v871 = vlaneseq
    %v872 = vshrl.u32 %v871, 7
    %v873 = vsub.s32 %v870, %v872
    %v874 = vrot.slane %v867, %v873
    %v875 = vcombine.low %v858, %v866
    %v877 = vunpack.c.l.s4 1934713408
    %v878 = vunpack.c.0.s8 %v877
    %v879 = vlaneseq
    %v880 = vshrl.u32 %v879, 7
    %v881 = vsub.s32 %v878, %v880
    %v882 = vrot.slane %v875, %v881
    %v883 = vcombine.low %v874, %v882
    %v884 = vcombine.high %v874, %v882
    %v885 = vcombine.low %v807, %v814
    %v887 = vunpack.c.l.s4 1983009808
    %v888 = vunpack.c.0.s8 %v887
    %v889 = vlaneseq
    %v890 = vshrl.u32 %v889, 7
    %v891 = vsub.s32 %v888, %v890
    %v892 = vrot.slane %v885, %v891
    %v893 = vcombine.low %v831, %v832
    %v895 = vunpack.c.l.s4 1983009808
    %v896 = vunpack.c.0.s8 %v895
    %v897 = vlaneseq
    %v898 = vshrl.u32 %v897, 7
    %v899 = vsub.s32 %v896, %v898
    %v900 = vrot.slane %v893, %v899
    %v901 = vcombine.low %v823, %v830
    %v903 = vunpack.c.l.s4 1983009808
    %v904 = vunpack.c.0.s8 %v903
    %v905 = vlaneseq
    %v906 = vshrl.u32 %v905, 7
    %v907 = vsub.s32 %v904, %v906
    %v908 = vrot.slane %v901, %v907
    %v909 = vcombine.low %v833, %v834
    %v911 = vunpack.c.l.s4 1983009808
    %v912 = vunpack.c.0.s8 %v911
    %v913 = vlaneseq
    %v914 = vshrl.u32 %v913, 7
    %v915 = vsub.s32 %v912, %v914
    %v916 = vrot.slane %v909, %v915
    %v917 = vcombine.low %v892, %v900
    %v919 = vunpack.c.l.s4 1934713408
    %v920 = vunpack.c.0.s8 %v919
    %v921 = vlaneseq
    %v922 = vshrl.u32 %v921, 7
    %v923 = vsub.s32 %v920, %v922
    %v924 = vrot.slane %v917, %v923
    %v925 = vcombine.low %v908, %v916
    %v927 = vunpack.c.l.s4 1934713408
    %v928 = vunpack.c.0.s8 %v927
    %v929 = vlaneseq
    %v930 = vshrl.u32 %v929, 7
    %v931 = vsub.s32 %v928, %v930
    %v932 = vrot.slane %v925, %v931
    %v933 = vcombine.low %v924, %v932
    %v934 = vcombine.high %v924, %v932
    %v935 = vpack.c.bf16 %v883, %v883
    %v936 = vpack.c.bf16 %v884, %v884
    %v937 = vpack.c.bf16 %v933, %v933
    %v938 = vpack.c.bf16 %v934, %v934
    %vm939 = vcmask 130048
    %v941 = vsel %vm939, %v439, 0
    %v944 = vsel %vm939, %v687, 0
    %946 = vmatprep.subr.bf16.mxu0 0
    %947 = vmatpush1.bf16.xpose.msra.mxu0 0
    %948 = vmatprep.subr.bf16.mxu0 0
    %949 = vmatpush1.bf16.xpose.msra.mxu0 0
    %950 = vmatprep.subr.bf16.mxu0 0
    %951 = vmatpush1.bf16.xpose.msra.mxu0 0
    %952 = vmatprep.subr.bf16.mxu0 0
    %953 = vmatpush1.bf16.xpose.msra.mxu0 0
    %954 = vmatprep.subr.bf16.mxu0 0
    %955 = vmatpush1.bf16.xpose.msra.mxu0 0
    %956 = vmatprep.subr.bf16.mxu0 0
    %957 = vmatpush1.bf16.xpose.msra.mxu0 0
    %958 = vmatprep.subr.bf16.mxu0 0
    %959 = vmatpush1.bf16.xpose.msra.mxu0 0
    %960 = vmatprep.subr.bf16.mxu0 0
    %961 = vmatpush1.bf16.xpose.msra.mxu0 %v944
    %962 = vmatprep.subr.bf16.mxu0 0
    %963 = vmatpush2.bf16.xpose.msra.mxu0 0
    %964 = vmatprep.subr.bf16.mxu0 0
    %965 = vmatpush2.bf16.xpose.msra.mxu0 0
    %966 = vmatprep.subr.bf16.mxu0 0
    %967 = vmatpush2.bf16.xpose.msra.mxu0 0
    %968 = vmatprep.subr.bf16.mxu0 0
    %969 = vmatpush2.bf16.xpose.msra.mxu0 0
    %970 = vmatprep.subr.bf16.mxu0 0
    %971 = vmatpush2.bf16.xpose.msra.mxu0 0
    %972 = vmatprep.subr.bf16.mxu0 0
    %973 = vmatpush2.bf16.xpose.msra.mxu0 0
    %974 = vmatprep.subr.bf16.mxu0 0
    %975 = vmatpush2.bf16.xpose.msra.mxu0 0
    %976 = vmatprep.subr.bf16.mxu0 0
    %977 = vmatpush2.bf16.xpose.msra.mxu0 0
    %978 = vmatprep.mubr.bf16.mxu0 0
    %979 = vmatmul.mubr.bf16.gmra.mxu0 %v941
    %v980 = vpop.f32.mrf.mxu0
    %v981 = vadd.f32 0.0, %v980
    %v982 = vpop.f32.mrf.mxu0
    %v983 = vpop.f32.mrf.mxu0
    %v984 = vpop.f32.mrf.mxu0
    %985 = vdwg.mxu0
    %v987 = vsel %vm939, %v440, 0
    %v990 = vsel %vm939, %v688, 0
    %992 = vmatprep.subr.bf16.mxu0 0
    %993 = vmatpush1.bf16.xpose.msra.mxu0 0
    %994 = vmatprep.subr.bf16.mxu0 0
    %995 = vmatpush1.bf16.xpose.msra.mxu0 0
    %996 = vmatprep.subr.bf16.mxu0 0
    %997 = vmatpush1.bf16.xpose.msra.mxu0 0
    %998 = vmatprep.subr.bf16.mxu0 0
    %999 = vmatpush1.bf16.xpose.msra.mxu0 0
    %1000 = vmatprep.subr.bf16.mxu0 0
    %1001 = vmatpush1.bf16.xpose.msra.mxu0 0
    %1002 = vmatprep.subr.bf16.mxu0 0
    %1003 = vmatpush1.bf16.xpose.msra.mxu0 0
    %1004 = vmatprep.subr.bf16.mxu0 0
    %1005 = vmatpush1.bf16.xpose.msra.mxu0 0
    %1006 = vmatprep.subr.bf16.mxu0 0
    %1007 = vmatpush1.bf16.xpose.msra.mxu0 %v990
    %1008 = vmatprep.subr.bf16.mxu0 0
    %1009 = vmatpush2.bf16.xpose.msra.mxu0 0
    %1010 = vmatprep.subr.bf16.mxu0 0
    %1011 = vmatpush2.bf16.xpose.msra.mxu0 0
    %1012 = vmatprep.subr.bf16.mxu0 0
    %1013 = vmatpush2.bf16.xpose.msra.mxu0 0
    %1014 = vmatprep.subr.bf16.mxu0 0
    %1015 = vmatpush2.bf16.xpose.msra.mxu0 0
    %1016 = vmatprep.subr.bf16.mxu0 0
    %1017 = vmatpush2.bf16.xpose.msra.mxu0 0
    %1018 = vmatprep.subr.bf16.mxu0 0
    %1019 = vmatpush2.bf16.xpose.msra.mxu0 0
    %1020 = vmatprep.subr.bf16.mxu0 0
    %1021 = vmatpush2.bf16.xpose.msra.mxu0 0
    %1022 = vmatprep.subr.bf16.mxu0 0
    %1023 = vmatpush2.bf16.xpose.msra.mxu0 0
    %1024 = vmatprep.mubr.bf16.mxu0 0
    %1025 = vmatmul.mubr.bf16.gmra.mxu0 %v987
    %v1026 = vpop.f32.mrf.mxu0
    %v1027 = vadd.f32 0.0, %v1026
    %v1028 = vpop.f32.mrf.mxu0
    %v1029 = vpop.f32.mrf.mxu0
    %v1030 = vpop.f32.mrf.mxu0
    %1031 = vdwg.mxu0
    %v1033 = vsel %vm939, %v441, 0
    %v1036 = vsel %vm939, %v689, 0
    %1038 = vmatprep.subr.bf16.mxu0 0
    %1039 = vmatpush1.bf16.xpose.msra.mxu0 0
    %1040 = vmatprep.subr.bf16.mxu0 0
    %1041 = vmatpush1.bf16.xpose.msra.mxu0 0
    %1042 = vmatprep.subr.bf16.mxu0 0
    %1043 = vmatpush1.bf16.xpose.msra.mxu0 0
    %1044 = vmatprep.subr.bf16.mxu0 0
    %1045 = vmatpush1.bf16.xpose.msra.mxu0 0
    %1046 = vmatprep.subr.bf16.mxu0 0
    %1047 = vmatpush1.bf16.xpose.msra.mxu0 0
    %1048 = vmatprep.subr.bf16.mxu0 0
    %1049 = vmatpush1.bf16.xpose.msra.mxu0 0
    %1050 = vmatprep.subr.bf16.mxu0 0
    %1051 = vmatpush1.bf16.xpose.msra.mxu0 0
    %1052 = vmatprep.subr.bf16.mxu0 0
    %1053 = vmatpush1.bf16.xpose.msra.mxu0 %v1036
    %1054 = vmatprep.subr.bf16.mxu0 0
    %1055 = vmatpush2.bf16.xpose.msra.mxu0 0
    %1056 = vmatprep.subr.bf16.mxu0 0
    %1057 = vmatpush2.bf16.xpose.msra.mxu0 0
    %1058 = vmatprep.subr.bf16.mxu0 0
    %1059 = vmatpush2.bf16.xpose.msra.mxu0 0
    %1060 = vmatprep.subr.bf16.mxu0 0
    %1061 = vmatpush2.bf16.xpose.msra.mxu0 0
    %1062 = vmatprep.subr.bf16.mxu0 0
    %1063 = vmatpush2.bf16.xpose.msra.mxu0 0
    %1064 = vmatprep.subr.bf16.mxu0 0
    %1065 = vmatpush2.bf16.xpose.msra.mxu0 0
    %1066 = vmatprep.subr.bf16.mxu0 0
    %1067 = vmatpush2.bf16.xpose.msra.mxu0 0
    %1068 = vmatprep.subr.bf16.mxu0 0
    %1069 = vmatpush2.bf16.xpose.msra.mxu0 0
    %1070 = vmatprep.mubr.bf16.mxu0 0
    %1071 = vmatmul.mubr.bf16.gmra.mxu0 %v1033
    %v1072 = vpop.f32.mrf.mxu0
    %v1073 = vadd.f32 0.0, %v1072
    %v1074 = vpop.f32.mrf.mxu0
    %v1075 = vpop.f32.mrf.mxu0
    %v1076 = vpop.f32.mrf.mxu0
    %1077 = vdwg.mxu0
    %v1079 = vsel %vm939, %v442, 0
    %v1082 = vsel %vm939, %v690, 0
    %1084 = vmatprep.subr.bf16.mxu0 0
    %1085 = vmatpush1.bf16.xpose.msra.mxu0 0
    %1086 = vmatprep.subr.bf16.mxu0 0
    %1087 = vmatpush1.bf16.xpose.msra.mxu0 0
    %1088 = vmatprep.subr.bf16.mxu0 0
    %1089 = vmatpush1.bf16.xpose.msra.mxu0 0
    %1090 = vmatprep.subr.bf16.mxu0 0
    %1091 = vmatpush1.bf16.xpose.msra.mxu0 0
    %1092 = vmatprep.subr.bf16.mxu0 0
    %1093 = vmatpush1.bf16.xpose.msra.mxu0 0
    %1094 = vmatprep.subr.bf16.mxu0 0
    %1095 = vmatpush1.bf16.xpose.msra.mxu0 0
    %1096 = vmatprep.subr.bf16.mxu0 0
    %1097 = vmatpush1.bf16.xpose.msra.mxu0 0
    %1098 = vmatprep.subr.bf16.mxu0 0
    %1099 = vmatpush1.bf16.xpose.msra.mxu0 %v1082
    %1100 = vmatprep.subr.bf16.mxu0 0
    %1101 = vmatpush2.bf16.xpose.msra.mxu0 0
    %1102 = vmatprep.subr.bf16.mxu0 0
    %1103 = vmatpush2.bf16.xpose.msra.mxu0 0
    %1104 = vmatprep.subr.bf16.mxu0 0
    %1105 = vmatpush2.bf16.xpose.msra.mxu0 0
    %1106 = vmatprep.subr.bf16.mxu0 0
    %1107 = vmatpush2.bf16.xpose.msra.mxu0 0
    %1108 = vmatprep.subr.bf16.mxu0 0
    %1109 = vmatpush2.bf16.xpose.msra.mxu0 0
    %1110 = vmatprep.subr.bf16.mxu0 0
    %1111 = vmatpush2.bf16.xpose.msra.mxu0 0
    %1112 = vmatprep.subr.bf16.mxu0 0
    %1113 = vmatpush2.bf16.xpose.msra.mxu0 0
    %1114 = vmatprep.subr.bf16.mxu0 0
    %1115 = vmatpush2.bf16.xpose.msra.mxu0 0
    %1116 = vmatprep.mubr.bf16.mxu0 0
    %1117 = vmatmul.mubr.bf16.gmra.mxu0 %v1079
    %v1118 = vpop.f32.mrf.mxu0
    %v1119 = vadd.f32 0.0, %v1118
    %v1120 = vpop.f32.mrf.mxu0
    %v1121 = vpop.f32.mrf.mxu0
    %v1122 = vpop.f32.mrf.mxu0
    %1123 = vdwg.mxu0
    %v1124 = vmul.f32 %v981, 0.25
    %v1125 = vmul.f32 %v1027, 0.25
    %v1126 = vmul.f32 %v1073, 0.25
    %v1127 = vmul.f32 %v1119, 0.25
    %vm1128 = vcmask 64512
    %v1129 = vsel %vm1128, %v1124, -inf
    %1130 = vmax.xlane.f32.xlu0 %v1129
    %v1131 = vpop.xlane.xlu0 %1130
    %v1132 = vsel %vm1128, %v1125, -inf
    %1133 = vmax.xlane.f32.xlu0 %v1132
    %v1134 = vpop.xlane.xlu0 %1133
    %v1135 = vsel %vm1128, %v1126, -inf
    %1136 = vmax.xlane.f32.xlu0 %v1135
    %v1137 = vpop.xlane.xlu0 %1136
    %v1138 = vsel %vm1128, %v1127, -inf
    %1139 = vmax.xlane.f32.xlu0 %v1138
    %v1140 = vpop.xlane.xlu0 %1139
    %v1141 = vsub.f32 %v1124, %v1131
    %v1142 = vsub.f32 %v1125, %v1134
    %v1143 = vsub.f32 %v1126, %v1137
    %v1144 = vsub.f32 %v1127, %v1140
    %v1145 = vmul.f32 %v1141, 1.442695
    %v1146 = vpow.pop %v1145
    %v1147 = vmul.f32 %v1142, 1.442695
    %v1148 = vpow.pop %v1147
    %v1149 = vmul.f32 %v1143, 1.442695
    %v1150 = vpow.pop %v1149
    %v1151 = vmul.f32 %v1144, 1.442695
    %v1152 = vpow.pop %v1151
    %v1153 = vsel %vm1128, %v1146, 0.0
    %1154 = vadd.xlane.f32.xlu0 %v1153
    %v1155 = vpop.xlane.xlu0 %1154
    %v1156 = vsel %vm1128, %v1148, 0.0
    %1157 = vadd.xlane.f32.xlu0 %v1156
    %v1158 = vpop.xlane.xlu0 %1157
    %v1159 = vsel %vm1128, %v1150, 0.0
    %1160 = vadd.xlane.f32.xlu0 %v1159
    %v1161 = vpop.xlane.xlu0 %1160
    %v1162 = vsel %vm1128, %v1152, 0.0
    %1163 = vadd.xlane.f32.xlu0 %v1162
    %v1164 = vpop.xlane.xlu0 %1163
    %v1165 = vrcp.pop %v1155
    %v1166 = vrcp.pop %v1158
    %v1167 = vrcp.pop %v1161
    %v1168 = vrcp.pop %v1164
    %v1169 = vmul.f32 %v1146, %v1165
    %v1170 = vmul.f32 %v1148, %v1166
    %v1171 = vmul.f32 %v1150, %v1167
    %v1172 = vmul.f32 %v1152, %v1168
    %v1173 = vpack.c.bf16 %v1169, %v1169
    %v1174 = vpack.c.bf16 %v1170, %v1170
    %v1175 = vpack.c.bf16 %v1171, %v1171
    %v1176 = vpack.c.bf16 %v1172, %v1172
    %v1178 = vsel %vm1128, %v1173, 0
    %vm1180 = vcmask 1043456
    %v1182 = vsel %vm1180, %v935, 0
    %1184 = vmatprep.subr.bf16.mxu0 0
    %1185 = vmatpush1.bf16.msra.mxu0 0
    %1186 = vmatprep.subr.bf16.mxu0 0
    %1187 = vmatpush1.bf16.msra.mxu0 0
    %1188 = vmatprep.subr.bf16.mxu0 0
    %1189 = vmatpush1.bf16.msra.mxu0 0
    %1190 = vmatprep.subr.bf16.mxu0 0
    %1191 = vmatpush1.bf16.msra.mxu0 0
    %1192 = vmatprep.subr.bf16.mxu0 0
    %1193 = vmatpush1.bf16.msra.mxu0 0
    %1194 = vmatprep.subr.bf16.mxu0 0
    %1195 = vmatpush1.bf16.msra.mxu0 0
    %1196 = vmatprep.subr.bf16.mxu0 0
    %1197 = vmatpush1.bf16.msra.mxu0 0
    %1198 = vmatprep.subr.bf16.mxu0 0
    %1199 = vmatpush1.bf16.msra.mxu0 %v1182
    %1200 = vmatprep.subr.bf16.mxu0 0
    %1201 = vmatpush2.bf16.msra.mxu0 0
    %1202 = vmatprep.subr.bf16.mxu0 0
    %1203 = vmatpush2.bf16.msra.mxu0 0
    %1204 = vmatprep.subr.bf16.mxu0 0
    %1205 = vmatpush2.bf16.msra.mxu0 0
    %1206 = vmatprep.subr.bf16.mxu0 0
    %1207 = vmatpush2.bf16.msra.mxu0 0
    %1208 = vmatprep.subr.bf16.mxu0 0
    %1209 = vmatpush2.bf16.msra.mxu0 0
    %1210 = vmatprep.subr.bf16.mxu0 0
    %1211 = vmatpush2.bf16.msra.mxu0 0
    %1212 = vmatprep.subr.bf16.mxu0 0
    %1213 = vmatpush2.bf16.msra.mxu0 0
    %1214 = vmatprep.subr.bf16.mxu0 0
    %1215 = vmatpush2.bf16.msra.mxu0 0
    %1216 = vmatprep.mubr.bf16.mxu0 0
    %1217 = vmatmul.mubr.bf16.gmra.mxu0 %v1178
    %v1218 = vpop.f32.mrf.mxu0
    %v1219 = vadd.f32 0.0, %v1218
    %v1220 = vpop.f32.mrf.mxu0
    %v1221 = vpop.f32.mrf.mxu0
    %v1222 = vpop.f32.mrf.mxu0
    %1223 = vdwg.mxu0
    %v1225 = vsel %vm1128, %v1174, 0
    %v1228 = vsel %vm1180, %v936, 0
    %1230 = vmatprep.subr.bf16.mxu0 0
    %1231 = vmatpush1.bf16.msra.mxu0 0
    %1232 = vmatprep.subr.bf16.mxu0 0
    %1233 = vmatpush1.bf16.msra.mxu0 0
    %1234 = vmatprep.subr.bf16.mxu0 0
    %1235 = vmatpush1.bf16.msra.mxu0 0
    %1236 = vmatprep.subr.bf16.mxu0 0
    %1237 = vmatpush1.bf16.msra.mxu0 0
    %1238 = vmatprep.subr.bf16.mxu0 0
    %1239 = vmatpush1.bf16.msra.mxu0 0
    %1240 = vmatprep.subr.bf16.mxu0 0
    %1241 = vmatpush1.bf16.msra.mxu0 0
    %1242 = vmatprep.subr.bf16.mxu0 0
    %1243 = vmatpush1.bf16.msra.mxu0 0
    %1244 = vmatprep.subr.bf16.mxu0 0
    %1245 = vmatpush1.bf16.msra.mxu0 %v1228
    %1246 = vmatprep.subr.bf16.mxu0 0
    %1247 = vmatpush2.bf16.msra.mxu0 0
    %1248 = vmatprep.subr.bf16.mxu0 0
    %1249 = vmatpush2.bf16.msra.mxu0 0
    %1250 = vmatprep.subr.bf16.mxu0 0
    %1251 = vmatpush2.bf16.msra.mxu0 0
    %1252 = vmatprep.subr.bf16.mxu0 0
    %1253 = vmatpush2.bf16.msra.mxu0 0
    %1254 = vmatprep.subr.bf16.mxu0 0
    %1255 = vmatpush2.bf16.msra.mxu0 0
    %1256 = vmatprep.subr.bf16.mxu0 0
    %1257 = vmatpush2.bf16.msra.mxu0 0
    %1258 = vmatprep.subr.bf16.mxu0 0
    %1259 = vmatpush2.bf16.msra.mxu0 0
    %1260 = vmatprep.subr.bf16.mxu0 0
    %1261 = vmatpush2.bf16.msra.mxu0 0
    %1262 = vmatprep.mubr.bf16.mxu0 0
    %1263 = vmatmul.mubr.bf16.gmra.mxu0 %v1225
    %v1264 = vpop.f32.mrf.mxu0
    %v1265 = vadd.f32 0.0, %v1264
    %v1266 = vpop.f32.mrf.mxu0
    %v1267 = vpop.f32.mrf.mxu0
    %v1268 = vpop.f32.mrf.mxu0
    %1269 = vdwg.mxu0
    %v1271 = vsel %vm1128, %v1175, 0
    %v1274 = vsel %vm1180, %v937, 0
    %1276 = vmatprep.subr.bf16.mxu0 0
    %1277 = vmatpush1.bf16.msra.mxu0 0
    %1278 = vmatprep.subr.bf16.mxu0 0
    %1279 = vmatpush1.bf16.msra.mxu0 0
    %1280 = vmatprep.subr.bf16.mxu0 0
    %1281 = vmatpush1.bf16.msra.mxu0 0
    %1282 = vmatprep.subr.bf16.mxu0 0
    %1283 = vmatpush1.bf16.msra.mxu0 0
    %1284 = vmatprep.subr.bf16.mxu0 0
    %1285 = vmatpush1.bf16.msra.mxu0 0
    %1286 = vmatprep.subr.bf16.mxu0 0
    %1287 = vmatpush1.bf16.msra.mxu0 0
    %1288 = vmatprep.subr.bf16.mxu0 0
    %1289 = vmatpush1.bf16.msra.mxu0 0
    %1290 = vmatprep.subr.bf16.mxu0 0
    %1291 = vmatpush1.bf16.msra.mxu0 %v1274
    %1292 = vmatprep.subr.bf16.mxu0 0
    %1293 = vmatpush2.bf16.msra.mxu0 0
    %1294 = vmatprep.subr.bf16.mxu0 0
    %1295 = vmatpush2.bf16.msra.mxu0 0
    %1296 = vmatprep.subr.bf16.mxu0 0
    %1297 = vmatpush2.bf16.msra.mxu0 0
    %1298 = vmatprep.subr.bf16.mxu0 0
    %1299 = vmatpush2.bf16.msra.mxu0 0
    %1300 = vmatprep.subr.bf16.mxu0 0
    %1301 = vmatpush2.bf16.msra.mxu0 0
    %1302 = vmatprep.subr.bf16.mxu0 0
    %1303 = vmatpush2.bf16.msra.mxu0 0
    %1304 = vmatprep.subr.bf16.mxu0 0
    %1305 = vmatpush2.bf16.msra.mxu0 0
    %1306 = vmatprep.subr.bf16.mxu0 0
    %1307 = vmatpush2.bf16.msra.mxu0 0
    %1308 = vmatprep.mubr.bf16.mxu0 0
    %1309 = vmatmul.mubr.bf16.gmra.mxu0 %v1271
    %v1310 = vpop.f32.mrf.mxu0
    %v1311 = vadd.f32 0.0, %v1310
    %v1312 = vpop.f32.mrf.mxu0
    %v1313 = vpop.f32.mrf.mxu0
    %v1314 = vpop.f32.mrf.mxu0
    %1315 = vdwg.mxu0
    %v1317 = vsel %vm1128, %v1176, 0
    %v1320 = vsel %vm1180, %v938, 0
    %1322 = vmatprep.subr.bf16.mxu0 0
    %1323 = vmatpush1.bf16.msra.mxu0 0
    %1324 = vmatprep.subr.bf16.mxu0 0
    %1325 = vmatpush1.bf16.msra.mxu0 0
    %1326 = vmatprep.subr.bf16.mxu0 0
    %1327 = vmatpush1.bf16.msra.mxu0 0
    %1328 = vmatprep.subr.bf16.mxu0 0
    %1329 = vmatpush1.bf16.msra.mxu0 0
    %1330 = vmatprep.subr.bf16.mxu0 0
    %1331 = vmatpush1.bf16.msra.mxu0 0
    %1332 = vmatprep.subr.bf16.mxu0 0
    %1333 = vmatpush1.bf16.msra.mxu0 0
    %1334 = vmatprep.subr.bf16.mxu0 0
    %1335 = vmatpush1.bf16.msra.mxu0 0
    %1336 = vmatprep.subr.bf16.mxu0 0
    %1337 = vmatpush1.bf16.msra.mxu0 %v1320
    %1338 = vmatprep.subr.bf16.mxu0 0
    %1339 = vmatpush2.bf16.msra.mxu0 0
    %1340 = vmatprep.subr.bf16.mxu0 0
    %1341 = vmatpush2.bf16.msra.mxu0 0
    %1342 = vmatprep.subr.bf16.mxu0 0
    %1343 = vmatpush2.bf16.msra.mxu0 0
    %1344 = vmatprep.subr.bf16.mxu0 0
    %1345 = vmatpush2.bf16.msra.mxu0 0
    %1346 = vmatprep.subr.bf16.mxu0 0
    %1347 = vmatpush2.bf16.msra.mxu0 0
    %1348 = vmatprep.subr.bf16.mxu0 0
    %1349 = vmatpush2.bf16.msra.mxu0 0
    %1350 = vmatprep.subr.bf16.mxu0 0
    %1351 = vmatpush2.bf16.msra.mxu0 0
    %1352 = vmatprep.subr.bf16.mxu0 0
    %1353 = vmatpush2.bf16.msra.mxu0 0
    %1354 = vmatprep.mubr.bf16.mxu0 0
    %1355 = vmatmul.mubr.bf16.gmra.mxu0 %v1317
    %v1356 = vpop.f32.mrf.mxu0
    %v1357 = vadd.f32 0.0, %v1356
    %v1358 = vpop.f32.mrf.mxu0
    %v1359 = vpop.f32.mrf.mxu0
    %v1360 = vpop.f32.mrf.mxu0
    %1361 = vdwg.mxu0
    %v1362 = vcombine.high %v1219, 0.0
    %v1364 = vunpack.c.l.s4 1983009808
    %v1365 = vunpack.c.0.s8 %v1364
    %v1366 = vlaneseq
    %v1367 = vshrl.u32 %v1366, 7
    %v1368 = vsub.s32 %v1365, %v1367
    %v1369 = vrot.slane %v1219, %v1368
    %v1371 = vunpack.c.l.s4 1983009808
    %v1372 = vunpack.c.0.s8 %v1371
    %v1373 = vlaneseq
    %v1374 = vshrl.u32 %v1373, 7
    %v1375 = vsub.s32 %v1372, %v1374
    %v1376 = vrot.slane %v1362, %v1375
    %v1377 = vcombine.high %v1265, 0.0
    %v1379 = vunpack.c.l.s4 1983009808
    %v1380 = vunpack.c.0.s8 %v1379
    %v1381 = vlaneseq
    %v1382 = vshrl.u32 %v1381, 7
    %v1383 = vsub.s32 %v1380, %v1382
    %v1384 = vrot.slane %v1265, %v1383
    %v1386 = vunpack.c.l.s4 1983009808
    %v1387 = vunpack.c.0.s8 %v1386
    %v1388 = vlaneseq
    %v1389 = vshrl.u32 %v1388, 7
    %v1390 = vsub.s32 %v1387, %v1389
    %v1391 = vrot.slane %v1377, %v1390
    %v1392 = vcombine.low %v1369, %v1384
    %v1393 = vcombine.high %v1369, %v1384
    %v1395 = vunpack.c.l.s4 1934713408
    %v1396 = vunpack.c.0.s8 %v1395
    %v1397 = vlaneseq
    %v1398 = vshrl.u32 %v1397, 7
    %v1399 = vsub.s32 %v1396, %v1398
    %v1400 = vrot.slane %v1392, %v1399
    %v1402 = vunpack.c.l.s4 1934713408
    %v1403 = vunpack.c.0.s8 %v1402
    %v1404 = vlaneseq
    %v1405 = vshrl.u32 %v1404, 7
    %v1406 = vsub.s32 %v1403, %v1405
    %v1407 = vrot.slane %v1393, %v1406
    %v1408 = vcombine.low %v1376, %v1391
    %v1409 = vcombine.high %v1376, %v1391
    %v1411 = vunpack.c.l.s4 1934713408
    %v1412 = vunpack.c.0.s8 %v1411
    %v1413 = vlaneseq
    %v1414 = vshrl.u32 %v1413, 7
    %v1415 = vsub.s32 %v1412, %v1414
    %v1416 = vrot.slane %v1408, %v1415
    %v1418 = vunpack.c.l.s4 1934713408
    %v1419 = vunpack.c.0.s8 %v1418
    %v1420 = vlaneseq
    %v1421 = vshrl.u32 %v1420, 7
    %v1422 = vsub.s32 %v1419, %v1421
    %v1423 = vrot.slane %v1409, %v1422
    %v1424 = vcombine.high %v1400, 0.0
    %v1425 = vcombine.high %v1407, 0.0
    %v1426 = vcombine.high %v1416, 0.0
    %v1427 = vcombine.high %v1423, 0.0
    %v1428 = vcombine.high %v1311, 0.0
    %v1430 = vunpack.c.l.s4 1983009808
    %v1431 = vunpack.c.0.s8 %v1430
    %v1432 = vlaneseq
    %v1433 = vshrl.u32 %v1432, 7
    %v1434 = vsub.s32 %v1431, %v1433
    %v1435 = vrot.slane %v1311, %v1434
    %v1437 = vunpack.c.l.s4 1983009808
    %v1438 = vunpack.c.0.s8 %v1437
    %v1439 = vlaneseq
    %v1440 = vshrl.u32 %v1439, 7
    %v1441 = vsub.s32 %v1438, %v1440
    %v1442 = vrot.slane %v1428, %v1441
    %v1443 = vcombine.high %v1357, 0.0
    %v1445 = vunpack.c.l.s4 1983009808
    %v1446 = vunpack.c.0.s8 %v1445
    %v1447 = vlaneseq
    %v1448 = vshrl.u32 %v1447, 7
    %v1449 = vsub.s32 %v1446, %v1448
    %v1450 = vrot.slane %v1357, %v1449
    %v1452 = vunpack.c.l.s4 1983009808
    %v1453 = vunpack.c.0.s8 %v1452
    %v1454 = vlaneseq
    %v1455 = vshrl.u32 %v1454, 7
    %v1456 = vsub.s32 %v1453, %v1455
    %v1457 = vrot.slane %v1443, %v1456
    %v1458 = vcombine.low %v1435, %v1450
    %v1459 = vcombine.high %v1435, %v1450
    %v1461 = vunpack.c.l.s4 1934713408
    %v1462 = vunpack.c.0.s8 %v1461
    %v1463 = vlaneseq
    %v1464 = vshrl.u32 %v1463, 7
    %v1465 = vsub.s32 %v1462, %v1464
    %v1466 = vrot.slane %v1458, %v1465
    %v1468 = vunpack.c.l.s4 1934713408
    %v1469 = vunpack.c.0.s8 %v1468
    %v1470 = vlaneseq
    %v1471 = vshrl.u32 %v1470, 7
    %v1472 = vsub.s32 %v1469, %v1471
    %v1473 = vrot.slane %v1459, %v1472
    %v1474 = vcombine.low %v1442, %v1457
    %v1475 = vcombine.high %v1442, %v1457
    %v1477 = vunpack.c.l.s4 1934713408
    %v1478 = vunpack.c.0.s8 %v1477
    %v1479 = vlaneseq
    %v1480 = vshrl.u32 %v1479, 7
    %v1481 = vsub.s32 %v1478, %v1480
    %v1482 = vrot.slane %v1474, %v1481
    %v1484 = vunpack.c.l.s4 1934713408
    %v1485 = vunpack.c.0.s8 %v1484
    %v1486 = vlaneseq
    %v1487 = vshrl.u32 %v1486, 7
    %v1488 = vsub.s32 %v1485, %v1487
    %v1489 = vrot.slane %v1475, %v1488
    %v1490 = vcombine.high %v1466, 0.0
    %v1491 = vcombine.high %v1473, 0.0
    %v1492 = vcombine.high %v1482, 0.0
    %v1493 = vcombine.high %v1489, 0.0
    %v1494 = vcombine.low %v1400, %v1407
    %v1496 = vunpack.c.l.s4 1983009808
    %v1497 = vunpack.c.0.s8 %v1496
    %v1498 = vlaneseq
    %v1499 = vshrl.u32 %v1498, 7
    %v1500 = vsub.s32 %v1497, %v1499
    %v1501 = vrot.slane %v1494, %v1500
    %v1502 = vcombine.low %v1424, %v1425
    %v1504 = vunpack.c.l.s4 1983009808
    %v1505 = vunpack.c.0.s8 %v1504
    %v1506 = vlaneseq
    %v1507 = vshrl.u32 %v1506, 7
    %v1508 = vsub.s32 %v1505, %v1507
    %v1509 = vrot.slane %v1502, %v1508
    %v1510 = vcombine.low %v1416, %v1423
    %v1512 = vunpack.c.l.s4 1983009808
    %v1513 = vunpack.c.0.s8 %v1512
    %v1514 = vlaneseq
    %v1515 = vshrl.u32 %v1514, 7
    %v1516 = vsub.s32 %v1513, %v1515
    %v1517 = vrot.slane %v1510, %v1516
    %v1518 = vcombine.low %v1426, %v1427
    %v1520 = vunpack.c.l.s4 1983009808
    %v1521 = vunpack.c.0.s8 %v1520
    %v1522 = vlaneseq
    %v1523 = vshrl.u32 %v1522, 7
    %v1524 = vsub.s32 %v1521, %v1523
    %v1525 = vrot.slane %v1518, %v1524
    %v1526 = vcombine.low %v1501, %v1509
    %v1528 = vunpack.c.l.s4 1934713408
    %v1529 = vunpack.c.0.s8 %v1528
    %v1530 = vlaneseq
    %v1531 = vshrl.u32 %v1530, 7
    %v1532 = vsub.s32 %v1529, %v1531
    %v1533 = vrot.slane %v1526, %v1532
    %v1534 = vcombine.low %v1517, %v1525
    %v1536 = vunpack.c.l.s4 1934713408
    %v1537 = vunpack.c.0.s8 %v1536
    %v1538 = vlaneseq
    %v1539 = vshrl.u32 %v1538, 7
    %v1540 = vsub.s32 %v1537, %v1539
    %v1541 = vrot.slane %v1534, %v1540
    %v1542 = vcombine.low %v1533, %v1541
    %v1543 = vcombine.high %v1533, %v1541
    %v1544 = vcombine.low %v1466, %v1473
    %v1546 = vunpack.c.l.s4 1983009808
    %v1547 = vunpack.c.0.s8 %v1546
    %v1548 = vlaneseq
    %v1549 = vshrl.u32 %v1548, 7
    %v1550 = vsub.s32 %v1547, %v1549
    %v1551 = vrot.slane %v1544, %v1550
    %v1552 = vcombine.low %v1490, %v1491
    %v1554 = vunpack.c.l.s4 1983009808
    %v1555 = vunpack.c.0.s8 %v1554
    %v1556 = vlaneseq
    %v1557 = vshrl.u32 %v1556, 7
    %v1558 = vsub.s32 %v1555, %v1557
    %v1559 = vrot.slane %v1552, %v1558
    %v1560 = vcombine.low %v1482, %v1489
    %v1562 = vunpack.c.l.s4 1983009808
    %v1563 = vunpack.c.0.s8 %v1562
    %v1564 = vlaneseq
    %v1565 = vshrl.u32 %v1564, 7
    %v1566 = vsub.s32 %v1563, %v1565
    %v1567 = vrot.slane %v1560, %v1566
    %v1568 = vcombine.low %v1492, %v1493
    %v1570 = vunpack.c.l.s4 1983009808
    %v1571 = vunpack.c.0.s8 %v1570
    %v1572 = vlaneseq
    %v1573 = vshrl.u32 %v1572, 7
    %v1574 = vsub.s32 %v1571, %v1573
    %v1575 = vrot.slane %v1568, %v1574
    %v1576 = vcombine.low %v1551, %v1559
    %v1578 = vunpack.c.l.s4 1934713408
    %v1579 = vunpack.c.0.s8 %v1578
    %v1580 = vlaneseq
    %v1581 = vshrl.u32 %v1580, 7
    %v1582 = vsub.s32 %v1579, %v1581
    %v1583 = vrot.slane %v1576, %v1582
    %v1584 = vcombine.low %v1567, %v1575
    %v1586 = vunpack.c.l.s4 1934713408
    %v1587 = vunpack.c.0.s8 %v1586
    %v1588 = vlaneseq
    %v1589 = vshrl.u32 %v1588, 7
    %v1590 = vsub.s32 %v1587, %v1589
    %v1591 = vrot.slane %v1584, %v1590
    %v1592 = vcombine.low %v1583, %v1591
    %v1593 = vcombine.high %v1583, %v1591
    %1596 = vrot.lane.b32.xlu0 %v1543, 16
    %v1597 = vpop.permute.xlu0 %1596
    %1598 = vrot.lane.b32.xlu0 %v1593, 16
    %v1599 = vpop.permute.xlu0 %1598
    %v1602 = vsel %vm939, %v1542, %v1597
    %v1603 = vsel %vm939, %v1592, %v1599
    %v1604 = vpack.c.bf16 %v1603, %v1602
    %v1605 = vld [vmem:[%s5] sm:$0xf]
    %v1606 = vld [vmem:[%s5 + $0x4] sm:$0xf]
    %v1607 = vld [vmem:[%s5 + $0x8] sm:$0xf]
    %v1608 = vld [vmem:[%s5 + $0xc] sm:$0xf]
    %v1609 = vld [vmem:[%s6] sm:$0x1]
    %v1611 = vlaneseq
    %v1612 = vshrl.u32 %v1611, 7
    %v1613 = vsub.s32 0, %v1612
    %v1614 = vrot.slane %v1609, %v1613
    %v1620 = vunpack.c.l.b16 %v1605
    %v1621 = vunpack.c.l.b16 %v1606
    %v1622 = vunpack.c.l.b16 %v1607
    %v1623 = vunpack.c.l.b16 %v1608
    %v1624 = vpack.c.b16 %v1621, %v1620
    %v1625 = vpack.c.b16 %v1623, %v1622
    %v1629 = vsel %vm87, %v1604, 0
    %1631 = vmatprep.subr.bf16.mxu0 0
    %1632 = vmatpush1.bf16.msra.mxu0 0
    %1633 = vmatprep.subr.bf16.mxu0 0
    %1634 = vmatpush1.bf16.msra.mxu0 0
    %1635 = vmatprep.subr.bf16.mxu0 0
    %1636 = vmatpush1.bf16.msra.mxu0 0
    %1637 = vmatprep.subr.bf16.mxu0 0
    %1638 = vmatpush1.bf16.msra.mxu0 0
    %1639 = vmatprep.subr.bf16.mxu0 0
    %1640 = vmatpush1.bf16.msra.mxu0 0
    %1641 = vmatprep.subr.bf16.mxu0 0
    %1642 = vmatpush1.bf16.msra.mxu0 0
    %1643 = vmatprep.subr.bf16.mxu0 0
    %1644 = vmatpush1.bf16.msra.mxu0 %v1625
    %1645 = vmatprep.subr.bf16.mxu0 0
    %1646 = vmatpush1.bf16.msra.mxu0 %v1624
    %1647 = vmatprep.subr.bf16.mxu0 0
    %1648 = vmatpush2.bf16.msra.mxu0 0
    %1649 = vmatprep.subr.bf16.mxu0 0
    %1650 = vmatpush2.bf16.msra.mxu0 0
    %1651 = vmatprep.subr.bf16.mxu0 0
    %1652 = vmatpush2.bf16.msra.mxu0 0
    %1653 = vmatprep.subr.bf16.mxu0 0
    %1654 = vmatpush2.bf16.msra.mxu0 0
    %1655 = vmatprep.subr.bf16.mxu0 0
    %1656 = vmatpush2.bf16.msra.mxu0 0
    %1657 = vmatprep.subr.bf16.mxu0 0
    %1658 = vmatpush2.bf16.msra.mxu0 0
    %1659 = vmatprep.subr.bf16.mxu0 0
    %1660 = vmatpush2.bf16.msra.mxu0 0
    %1661 = vmatprep.subr.bf16.mxu0 0
    %1662 = vmatpush2.bf16.msra.mxu0 0
    %1663 = vmatprep.mubr.bf16.mxu0 0
    %1664 = vmatmul.mubr.bf16.gmra.mxu0 %v1629
    %v1665 = vpop.f32.mrf.mxu0
    %v1666 = vadd.f32 %v1614, %v1665
    %v1667 = vpop.f32.mrf.mxu0
    %v1668 = vpop.f32.mrf.mxu0
    %v1669 = vadd.f32 %v1614, %v1668
    %v1670 = vpop.f32.mrf.mxu0
    %1671 = vdwg.mxu0
    %v1672 = vadd.f32 %v129, %v1666
    %v1673 = vadd.f32 %v130, %v1669
    %v1674 = vld [vmem:[%s7] sm:$0x1]
    %v1675 = vld [vmem:[%s8] sm:$0x1]
    %v1676 = vsel %vm87, %v1672, 0.0
    %1677 = vadd.xlane.f32.xlu0 %v1676
    %v1678 = vpop.xlane.xlu0 %1677
    %v1679 = vsel %vm87, %v1673, 0.0
    %1680 = vadd.xlane.f32.xlu0 %v1679
    %v1681 = vpop.xlane.xlu0 %1680
    %v1682 = vmul.f32 %v1678, %v94
    %v1683 = vmul.f32 %v1681, %v94
    %v1684 = vsub.f32 %v1672, %v1682
    %v1685 = vsub.f32 %v1673, %v1683
    %v1686 = vmul.f32 %v1684, %v1684
    %v1687 = vmul.f32 %v1685, %v1685
    %v1688 = vsel %vm87, %v1686, 0.0
    %1689 = vadd.xlane.f32.xlu0 %v1688
    %v1690 = vpop.xlane.xlu0 %1689
    %v1691 = vsel %vm87, %v1687, 0.0
    %1692 = vadd.xlane.f32.xlu0 %v1691
    %v1693 = vpop.xlane.xlu0 %1692
    %v1694 = vmul.f32 %v1690, %v94
    %v1695 = vmul.f32 %v1693, %v94
    %v1696 = vadd.f32 %v1694, 1e-12
    %v1697 = vadd.f32 %v1695, 1e-12
    %v1698 = vrsqrt.pop %v1696
    %v1699 = vrsqrt.pop %v1697
    %v1700 = vmul.f32 %v1684, %v1698
    %v1701 = vmul.f32 %v1685, %v1699
    %v1703 = vlaneseq
    %v1704 = vshrl.u32 %v1703, 7
    %v1705 = vsub.s32 0, %v1704
    %v1706 = vrot.slane %v1674, %v1705
    %v1708 = vmul.f32 %v1700, %v1706
    %v1709 = vmul.f32 %v1701, %v1706
    %v1711 = vlaneseq
    %v1712 = vshrl.u32 %v1711, 7
    %v1713 = vsub.s32 0, %v1712
    %v1714 = vrot.slane %v1675, %v1713
    %v1716 = vadd.f32 %v1708, %v1714
    %v1717 = vadd.f32 %v1709, %v1714
    %v1718 = vpack.c.bf16 %v1717, %v1716
    %v1719 = vld [vmem:[%s9] sm:$0xf]
    %v1720 = vld [vmem:[%s9 + $0x4] sm:$0xf]
    %v1721 = vld [vmem:[%s9 + $0x8] sm:$0xf]
    %v1722 = vld [vmem:[%s9 + $0xc] sm:$0xf]
    %v1723 = vld [vmem:[%s10] sm:$0x1]
    %v1725 = vlaneseq
    %v1726 = vshrl.u32 %v1725, 7
    %v1727 = vsub.s32 0, %v1726
    %v1728 = vrot.slane %v1723, %v1727
    %v1734 = vunpack.c.l.b16 %v1719
    %v1735 = vunpack.c.l.b16 %v1720
    %v1736 = vunpack.c.l.b16 %v1721
    %v1737 = vunpack.c.l.b16 %v1722
    %v1738 = vpack.c.b16 %v1735, %v1734
    %v1739 = vpack.c.b16 %v1737, %v1736
    %v1743 = vsel %vm87, %v1718, 0
    %1745 = vmatprep.subr.bf16.mxu0 0
    %1746 = vmatpush1.bf16.msra.mxu0 0
    %1747 = vmatprep.subr.bf16.mxu0 0
    %1748 = vmatpush1.bf16.msra.mxu0 0
    %1749 = vmatprep.subr.bf16.mxu0 0
    %1750 = vmatpush1.bf16.msra.mxu0 0
    %1751 = vmatprep.subr.bf16.mxu0 0
    %1752 = vmatpush1.bf16.msra.mxu0 0
    %1753 = vmatprep.subr.bf16.mxu0 0
    %1754 = vmatpush1.bf16.msra.mxu0 0
    %1755 = vmatprep.subr.bf16.mxu0 0
    %1756 = vmatpush1.bf16.msra.mxu0 0
    %1757 = vmatprep.subr.bf16.mxu0 0
    %1758 = vmatpush1.bf16.msra.mxu0 %v1739
    %1759 = vmatprep.subr.bf16.mxu0 0
    %1760 = vmatpush1.bf16.msra.mxu0 %v1738
    %1761 = vmatprep.subr.bf16.mxu0 0
    %1762 = vmatpush2.bf16.msra.mxu0 0
    %1763 = vmatprep.subr.bf16.mxu0 0
    %1764 = vmatpush2.bf16.msra.mxu0 0
    %1765 = vmatprep.subr.bf16.mxu0 0
    %1766 = vmatpush2.bf16.msra.mxu0 0
    %1767 = vmatprep.subr.bf16.mxu0 0
    %1768 = vmatpush2.bf16.msra.mxu0 0
    %1769 = vmatprep.subr.bf16.mxu0 0
    %1770 = vmatpush2.bf16.msra.mxu0 0
    %1771 = vmatprep.subr.bf16.mxu0 0
    %1772 = vmatpush2.bf16.msra.mxu0 0
    %1773 = vmatprep.subr.bf16.mxu0 0
    %1774 = vmatpush2.bf16.msra.mxu0 0
    %1775 = vmatprep.subr.bf16.mxu0 0
    %1776 = vmatpush2.bf16.msra.mxu0 0
    %1777 = vmatprep.mubr.bf16.mxu0 0
    %1778 = vmatmul.mubr.bf16.gmra.mxu0 %v1743
    %v1779 = vpop.f32.mrf.mxu0
    %v1780 = vadd.f32 %v1728, %v1779
    %v1781 = vpop.f32.mrf.mxu0
    %v1782 = vpop.f32.mrf.mxu0
    %v1783 = vadd.f32 %v1728, %v1782
    %v1784 = vpop.f32.mrf.mxu0
    %1785 = vdwg.mxu0
    %v1786 = vmul.f32 %v1780, 0.5
    %v1787 = vmul.f32 %v1783, 0.5
    %v1788 = vmul.f32 %v1780, 0.044715
    %v1789 = vmul.f32 %v1783, 0.044715
    %v1790 = vmul.f32 %v1788, %v1780
    %v1791 = vmul.f32 %v1789, %v1783
    %v1792 = vmul.f32 %v1790, %v1780
    %v1793 = vmul.f32 %v1791, %v1783
    %v1794 = vadd.f32 %v1780, %v1792
    %v1795 = vadd.f32 %v1783, %v1793
    %v1796 = vmul.f32 %v1794, 0.7978846
    %v1797 = vmul.f32 %v1795, 0.7978846
    %v1798 = vtanh.pop %v1796
    %v1799 = vtanh.pop %v1797
    %v1800 = vadd.f32 %v1798, 1.0
    %v1801 = vadd.f32 %v1799, 1.0
    %v1802 = vmul.f32 %v1786, %v1800
    %v1803 = vmul.f32 %v1787, %v1801
    %v1804 = vpack.c.bf16 %v1803, %v1802
    %v1805 = vld [vmem:[%s11] sm:$0xf]
    %v1806 = vld [vmem:[%s11 + $0x4] sm:$0xf]
    %v1807 = vld [vmem:[%s11 + $0x8] sm:$0xf]
    %v1808 = vld [vmem:[%s11 + $0xc] sm:$0xf]
    %v1809 = vld [vmem:[%s11 + $0x10] sm:$0xf]
    %v1810 = vld [vmem:[%s11 + $0x14] sm:$0xf]
    %v1811 = vld [vmem:[%s11 + $0x18] sm:$0xf]
    %v1812 = vld [vmem:[%s11 + $0x1c] sm:$0xf]
    %v1813 = vld [vmem:[%s12] sm:$0x1]
    %v1815 = vlaneseq
    %v1816 = vshrl.u32 %v1815, 7
    %v1817 = vsub.s32 0, %v1816
    %v1818 = vrot.slane %v1813, %v1817
    %v1828 = vunpack.c.l.b16 %v1805
    %v1829 = vunpack.c.l.b16 %v1806
    %v1830 = vunpack.c.l.b16 %v1807
    %v1831 = vunpack.c.l.b16 %v1808
    %v1832 = vunpack.c.l.b16 %v1809
    %v1833 = vunpack.c.l.b16 %v1810
    %v1834 = vunpack.c.l.b16 %v1811
    %v1835 = vunpack.c.l.b16 %v1812
    %v1836 = vpack.c.b16 %v1829, %v1828
    %v1837 = vpack.c.b16 %v1831, %v1830
    %v1838 = vpack.c.b16 %v1833, %v1832
    %v1839 = vpack.c.b16 %v1835, %v1834
    %vm1844 = vcmask 523264
    %v1846 = vsel %vm1844, %v1804, 0
    %1848 = vmatprep.subr.bf16.mxu0 0
    %1849 = vmatpush1.bf16.msra.mxu0 0
    %1850 = vmatprep.subr.bf16.mxu0 0
    %1851 = vmatpush1.bf16.msra.mxu0 0
    %1852 = vmatprep.subr.bf16.mxu0 0
    %1853 = vmatpush1.bf16.msra.mxu0 0
    %1854 = vmatprep.subr.bf16.mxu0 0
    %1855 = vmatpush1.bf16.msra.mxu0 0
    %1856 = vmatprep.subr.bf16.mxu0 0
    %1857 = vmatpush1.bf16.msra.mxu0 %v1839
    %1858 = vmatprep.subr.bf16.mxu0 0
    %1859 = vmatpush1.bf16.msra.mxu0 %v1838
    %1860 = vmatprep.subr.bf16.mxu0 0
    %1861 = vmatpush1.bf16.msra.mxu0 %v1837
    %1862 = vmatprep.subr.bf16.mxu0 0
    %1863 = vmatpush1.bf16.msra.mxu0 %v1836
    %1864 = vmatprep.subr.bf16.mxu0 0
    %1865 = vmatpush2.bf16.msra.mxu0 0
    %1866 = vmatprep.subr.bf16.mxu0 0
    %1867 = vmatpush2.bf16.msra.mxu0 0
    %1868 = vmatprep.subr.bf16.mxu0 0
    %1869 = vmatpush2.bf16.msra.mxu0 0
    %1870 = vmatprep.subr.bf16.mxu0 0
    %1871 = vmatpush2.bf16.msra.mxu0 0
    %1872 = vmatprep.subr.bf16.mxu0 0
    %1873 = vmatpush2.bf16.msra.mxu0 0
    %1874 = vmatprep.subr.bf16.mxu0 0
    %1875 = vmatpush2.bf16.msra.mxu0 0
    %1876 = vmatprep.subr.bf16.mxu0 0
    %1877 = vmatpush2.bf16.msra.mxu0 0
    %1878 = vmatprep.subr.bf16.mxu0 0
    %1879 = vmatpush2.bf16.msra.mxu0 0
    %1880 = vmatprep.mubr.bf16.mxu0 0
    %1881 = vmatmul.mubr.bf16.gmra.mxu0 %v1846
    %v1882 = vpop.f32.mrf.mxu0
    %v1883 = vadd.f32 %v1818, %v1882
    %v1884 = vpop.f32.mrf.mxu0
    %v1885 = vpop.f32.mrf.mxu0
    %v1886 = vadd.f32 %v1818, %v1885
    %v1887 = vpop.f32.mrf.mxu0
    %1888 = vdwg.mxu0
    %v1889 = vadd.f32 %v1716, %v1883
    %v1890 = vadd.f32 %v1717, %v1886
    %v1891 = vld [vmem:[%s13] sm:$0x1]
    %v1892 = vld [vmem:[%s14] sm:$0x1]
    %v1893 = vsel %vm87, %v1889, 0.0
    %1894 = vadd.xlane.f32.xlu0 %v1893
    %v1895 = vpop.xlane.xlu0 %1894
    %v1896 = vsel %vm87, %v1890, 0.0
    %1897 = vadd.xlane.f32.xlu0 %v1896
    %v1898 = vpop.xlane.xlu0 %1897
    %v1899 = vmul.f32 %v1895, %v94
    %v1900 = vmul.f32 %v1898, %v94
    %v1901 = vsub.f32 %v1889, %v1899
    %v1902 = vsub.f32 %v1890, %v1900
    %v1903 = vmul.f32 %v1901, %v1901
    %v1904 = vmul.f32 %v1902, %v1902
    %v1905 = vsel %vm87, %v1903, 0.0
    %1906 = vadd.xlane.f32.xlu0 %v1905
    %v1907 = vpop.xlane.xlu0 %1906
    %v1908 = vsel %vm87, %v1904, 0.0
    %1909 = vadd.xlane.f32.xlu0 %v1908
    %v1910 = vpop.xlane.xlu0 %1909
    %v1911 = vmul.f32 %v1907, %v94
    %v1912 = vmul.f32 %v1910, %v94
    %v1913 = vadd.f32 %v1911, 1e-12
    %v1914 = vadd.f32 %v1912, 1e-12
    %v1915 = vrsqrt.pop %v1913
    %v1916 = vrsqrt.pop %v1914
    %v1917 = vmul.f32 %v1901, %v1915
    %v1918 = vmul.f32 %v1902, %v1916
    %v1920 = vlaneseq
    %v1921 = vshrl.u32 %v1920, 7
    %v1922 = vsub.s32 0, %v1921
    %v1923 = vrot.slane %v1891, %v1922
    %v1925 = vmul.f32 %v1917, %v1923
    %v1926 = vmul.f32 %v1918, %v1923
    %v1928 = vlaneseq
    %v1929 = vshrl.u32 %v1928, 7
    %v1930 = vsub.s32 0, %v1929
    %v1931 = vrot.slane %v1892, %v1930
    %v1933 = vadd.f32 %v1925, %v1931
    %v1934 = vadd.f32 %v1926, %v1931
    %v1935 = vpack.c.bf16 %v1934, %v1933
    %s1936 = scalar_lea.vmem %s3, 16
    %v1937 = vld [vmem:[%s1936] sm:$0xf]
    %v1938 = vld [vmem:[%s1936 + $0x4] sm:$0xf]
    %v1939 = vld [vmem:[%s1936 + $0x8] sm:$0xf]
    %v1940 = vld [vmem:[%s1936 + $0xc] sm:$0xf]
    %s1941 = scalar_lea.vmem %s4, 1
    %v1942 = vld [vmem:[%s1941] sm:$0x1]
    %v1944 = vlaneseq
    %v1945 = vshrl.u32 %v1944, 7
    %v1946 = vsub.s32 0, %v1945
    %v1947 = vrot.slane %v1942, %v1946
    %v1953 = vunpack.c.l.b16 %v1937
    %v1954 = vunpack.c.l.b16 %v1938
    %v1955 = vunpack.c.l.b16 %v1939
    %v1956 = vunpack.c.l.b16 %v1940
    %v1957 = vpack.c.b16 %v1954, %v1953
    %v1958 = vpack.c.b16 %v1956, %v1955
    %v1962 = vsel %vm87, %v1935, 0
    %1964 = vmatprep.subr.bf16.mxu0 0
    %1965 = vmatpush1.bf16.msra.mxu0 0
    %1966 = vmatprep.subr.bf16.mxu0 0
    %1967 = vmatpush1.bf16.msra.mxu0 0
    %1968 = vmatprep.subr.bf16.mxu0 0
    %1969 = vmatpush1.bf16.msra.mxu0 0
    %1970 = vmatprep.subr.bf16.mxu0 0
    %1971 = vmatpush1.bf16.msra.mxu0 0
    %1972 = vmatprep.subr.bf16.mxu0 0
    %1973 = vmatpush1.bf16.msra.mxu0 0
    %1974 = vmatprep.subr.bf16.mxu0 0
    %1975 = vmatpush1.bf16.msra.mxu0 0
    %1976 = vmatprep.subr.bf16.mxu0 0
    %1977 = vmatpush1.bf16.msra.mxu0 %v1958
    %1978 = vmatprep.subr.bf16.mxu0 0
    %1979 = vmatpush1.bf16.msra.mxu0 %v1957
    %1980 = vmatprep.subr.bf16.mxu0 0
    %1981 = vmatpush2.bf16.msra.mxu0 0
    %1982 = vmatprep.subr.bf16.mxu0 0
    %1983 = vmatpush2.bf16.msra.mxu0 0
    %1984 = vmatprep.subr.bf16.mxu0 0
    %1985 = vmatpush2.bf16.msra.mxu0 0
    %1986 = vmatprep.subr.bf16.mxu0 0
    %1987 = vmatpush2.bf16.msra.mxu0 0
    %1988 = vmatprep.subr.bf16.mxu0 0
    %1989 = vmatpush2.bf16.msra.mxu0 0
    %1990 = vmatprep.subr.bf16.mxu0 0
    %1991 = vmatpush2.bf16.msra.mxu0 0
    %1992 = vmatprep.subr.bf16.mxu0 0
    %1993 = vmatpush2.bf16.msra.mxu0 0
    %1994 = vmatprep.subr.bf16.mxu0 0
    %1995 = vmatpush2.bf16.msra.mxu0 0
    %1996 = vmatprep.mubr.bf16.mxu0 0
    %1997 = vmatmul.mubr.bf16.gmra.mxu0 %v1962
    %v1998 = vpop.f32.mrf.mxu0
    %v1999 = vadd.f32 %v1947, %v1998
    %v2000 = vpop.f32.mrf.mxu0
    %v2001 = vpop.f32.mrf.mxu0
    %v2002 = vadd.f32 %v1947, %v2001
    %v2003 = vpop.f32.mrf.mxu0
    %2004 = vdwg.mxu0
    %2007 = vrot.lane.b32.xlu0 %v1999, 112
    %v2008 = vpop.permute.xlu0 %2007
    %2009 = vrot.lane.b32.xlu0 %v2002, 112
    %v2010 = vpop.permute.xlu0 %2009
    %v2013 = vcombine.high %v1999, 0.0
    %v2015 = vunpack.c.l.s4 1983009808
    %v2016 = vunpack.c.0.s8 %v2015
    %v2017 = vlaneseq
    %v2018 = vshrl.u32 %v2017, 7
    %v2019 = vsub.s32 %v2016, %v2018
    %v2020 = vrot.slane %v1999, %v2019
    %v2022 = vunpack.c.l.s4 1983009808
    %v2023 = vunpack.c.0.s8 %v2022
    %v2024 = vlaneseq
    %v2025 = vshrl.u32 %v2024, 7
    %v2026 = vsub.s32 %v2023, %v2025
    %v2027 = vrot.slane %v2013, %v2026
    %v2028 = vcombine.high %v2008, 0.0
    %v2030 = vunpack.c.l.s4 1983009808
    %v2031 = vunpack.c.0.s8 %v2030
    %v2032 = vlaneseq
    %v2033 = vshrl.u32 %v2032, 7
    %v2034 = vsub.s32 %v2031, %v2033
    %v2035 = vrot.slane %v2008, %v2034
    %v2037 = vunpack.c.l.s4 1983009808
    %v2038 = vunpack.c.0.s8 %v2037
    %v2039 = vlaneseq
    %v2040 = vshrl.u32 %v2039, 7
    %v2041 = vsub.s32 %v2038, %v2040
    %v2042 = vrot.slane %v2028, %v2041
    %v2043 = vcombine.low %v2020, %v2035
    %v2044 = vcombine.high %v2020, %v2035
    %v2046 = vunpack.c.l.s4 1934713408
    %v2047 = vunpack.c.0.s8 %v2046
    %v2048 = vlaneseq
    %v2049 = vshrl.u32 %v2048, 7
    %v2050 = vsub.s32 %v2047, %v2049
    %v2051 = vrot.slane %v2043, %v2050
    %v2053 = vunpack.c.l.s4 1934713408
    %v2054 = vunpack.c.0.s8 %v2053
    %v2055 = vlaneseq
    %v2056 = vshrl.u32 %v2055, 7
    %v2057 = vsub.s32 %v2054, %v2056
    %v2058 = vrot.slane %v2044, %v2057
    %v2059 = vcombine.low %v2027, %v2042
    %v2060 = vcombine.high %v2027, %v2042
    %v2062 = vunpack.c.l.s4 1934713408
    %v2063 = vunpack.c.0.s8 %v2062
    %v2064 = vlaneseq
    %v2065 = vshrl.u32 %v2064, 7
    %v2066 = vsub.s32 %v2063, %v2065
    %v2067 = vrot.slane %v2059, %v2066
    %v2069 = vunpack.c.l.s4 1934713408
    %v2070 = vunpack.c.0.s8 %v2069
    %v2071 = vlaneseq
    %v2072 = vshrl.u32 %v2071, 7
    %v2073 = vsub.s32 %v2070, %v2072
    %v2074 = vrot.slane %v2060, %v2073
    %v2075 = vcombine.high %v2051, 0.0
    %v2076 = vcombine.high %v2058, 0.0
    %v2077 = vcombine.high %v2067, 0.0
    %v2078 = vcombine.high %v2074, 0.0
    %v2079 = vcombine.high %v2002, 0.0
    %v2081 = vunpack.c.l.s4 1983009808
    %v2082 = vunpack.c.0.s8 %v2081
    %v2083 = vlaneseq
    %v2084 = vshrl.u32 %v2083, 7
    %v2085 = vsub.s32 %v2082, %v2084
    %v2086 = vrot.slane %v2002, %v2085
    %v2088 = vunpack.c.l.s4 1983009808
    %v2089 = vunpack.c.0.s8 %v2088
    %v2090 = vlaneseq
    %v2091 = vshrl.u32 %v2090, 7
    %v2092 = vsub.s32 %v2089, %v2091
    %v2093 = vrot.slane %v2079, %v2092
    %v2094 = vcombine.high %v2010, 0.0
    %v2096 = vunpack.c.l.s4 1983009808
    %v2097 = vunpack.c.0.s8 %v2096
    %v2098 = vlaneseq
    %v2099 = vshrl.u32 %v2098, 7
    %v2100 = vsub.s32 %v2097, %v2099
    %v2101 = vrot.slane %v2010, %v2100
    %v2103 = vunpack.c.l.s4 1983009808
    %v2104 = vunpack.c.0.s8 %v2103
    %v2105 = vlaneseq
    %v2106 = vshrl.u32 %v2105, 7
    %v2107 = vsub.s32 %v2104, %v2106
    %v2108 = vrot.slane %v2094, %v2107
    %v2109 = vcombine.low %v2086, %v2101
    %v2110 = vcombine.high %v2086, %v2101
    %v2112 = vunpack.c.l.s4 1934713408
    %v2113 = vunpack.c.0.s8 %v2112
    %v2114 = vlaneseq
    %v2115 = vshrl.u32 %v2114, 7
    %v2116 = vsub.s32 %v2113, %v2115
    %v2117 = vrot.slane %v2109, %v2116
    %v2119 = vunpack.c.l.s4 1934713408
    %v2120 = vunpack.c.0.s8 %v2119
    %v2121 = vlaneseq
    %v2122 = vshrl.u32 %v2121, 7
    %v2123 = vsub.s32 %v2120, %v2122
    %v2124 = vrot.slane %v2110, %v2123
    %v2125 = vcombine.low %v2093, %v2108
    %v2126 = vcombine.high %v2093, %v2108
    %v2128 = vunpack.c.l.s4 1934713408
    %v2129 = vunpack.c.0.s8 %v2128
    %v2130 = vlaneseq
    %v2131 = vshrl.u32 %v2130, 7
    %v2132 = vsub.s32 %v2129, %v2131
    %v2133 = vrot.slane %v2125, %v2132
    %v2135 = vunpack.c.l.s4 1934713408
    %v2136 = vunpack.c.0.s8 %v2135
    %v2137 = vlaneseq
    %v2138 = vshrl.u32 %v2137, 7
    %v2139 = vsub.s32 %v2136, %v2138
    %v2140 = vrot.slane %v2126, %v2139
    %v2141 = vcombine.high %v2117, 0.0
    %v2142 = vcombine.high %v2124, 0.0
    %v2143 = vcombine.high %v2133, 0.0
    %v2144 = vcombine.high %v2140, 0.0
    %v2145 = vcombine.low %v2051, %v2058
    %v2147 = vunpack.c.l.s4 1983009808
    %v2148 = vunpack.c.0.s8 %v2147
    %v2149 = vlaneseq
    %v2150 = vshrl.u32 %v2149, 7
    %v2151 = vsub.s32 %v2148, %v2150
    %v2152 = vrot.slane %v2145, %v2151
    %v2153 = vcombine.low %v2075, %v2076
    %v2155 = vunpack.c.l.s4 1983009808
    %v2156 = vunpack.c.0.s8 %v2155
    %v2157 = vlaneseq
    %v2158 = vshrl.u32 %v2157, 7
    %v2159 = vsub.s32 %v2156, %v2158
    %v2160 = vrot.slane %v2153, %v2159
    %v2161 = vcombine.low %v2067, %v2074
    %v2163 = vunpack.c.l.s4 1983009808
    %v2164 = vunpack.c.0.s8 %v2163
    %v2165 = vlaneseq
    %v2166 = vshrl.u32 %v2165, 7
    %v2167 = vsub.s32 %v2164, %v2166
    %v2168 = vrot.slane %v2161, %v2167
    %v2169 = vcombine.low %v2077, %v2078
    %v2171 = vunpack.c.l.s4 1983009808
    %v2172 = vunpack.c.0.s8 %v2171
    %v2173 = vlaneseq
    %v2174 = vshrl.u32 %v2173, 7
    %v2175 = vsub.s32 %v2172, %v2174
    %v2176 = vrot.slane %v2169, %v2175
    %v2177 = vcombine.low %v2152, %v2160
    %v2179 = vunpack.c.l.s4 1934713408
    %v2180 = vunpack.c.0.s8 %v2179
    %v2181 = vlaneseq
    %v2182 = vshrl.u32 %v2181, 7
    %v2183 = vsub.s32 %v2180, %v2182
    %v2184 = vrot.slane %v2177, %v2183
    %v2185 = vcombine.low %v2168, %v2176
    %v2187 = vunpack.c.l.s4 1934713408
    %v2188 = vunpack.c.0.s8 %v2187
    %v2189 = vlaneseq
    %v2190 = vshrl.u32 %v2189, 7
    %v2191 = vsub.s32 %v2188, %v2190
    %v2192 = vrot.slane %v2185, %v2191
    %v2193 = vcombine.low %v2184, %v2192
    %v2194 = vcombine.high %v2184, %v2192
    %v2195 = vcombine.low %v2117, %v2124
    %v2197 = vunpack.c.l.s4 1983009808
    %v2198 = vunpack.c.0.s8 %v2197
    %v2199 = vlaneseq
    %v2200 = vshrl.u32 %v2199, 7
    %v2201 = vsub.s32 %v2198, %v2200
    %v2202 = vrot.slane %v2195, %v2201
    %v2203 = vcombine.low %v2141, %v2142
    %v2205 = vunpack.c.l.s4 1983009808
    %v2206 = vunpack.c.0.s8 %v2205
    %v2207 = vlaneseq
    %v2208 = vshrl.u32 %v2207, 7
    %v2209 = vsub.s32 %v2206, %v2208
    %v2210 = vrot.slane %v2203, %v2209
    %v2211 = vcombine.low %v2133, %v2140
    %v2213 = vunpack.c.l.s4 1983009808
    %v2214 = vunpack.c.0.s8 %v2213
    %v2215 = vlaneseq
    %v2216 = vshrl.u32 %v2215, 7
    %v2217 = vsub.s32 %v2214, %v2216
    %v2218 = vrot.slane %v2211, %v2217
    %v2219 = vcombine.low %v2143, %v2144
    %v2221 = vunpack.c.l.s4 1983009808
    %v2222 = vunpack.c.0.s8 %v2221
    %v2223 = vlaneseq
    %v2224 = vshrl.u32 %v2223, 7
    %v2225 = vsub.s32 %v2222, %v2224
    %v2226 = vrot.slane %v2219, %v2225
    %v2227 = vcombine.low %v2202, %v2210
    %v2229 = vunpack.c.l.s4 1934713408
    %v2230 = vunpack.c.0.s8 %v2229
    %v2231 = vlaneseq
    %v2232 = vshrl.u32 %v2231, 7
    %v2233 = vsub.s32 %v2230, %v2232
    %v2234 = vrot.slane %v2227, %v2233
    %v2235 = vcombine.low %v2218, %v2226
    %v2237 = vunpack.c.l.s4 1934713408
    %v2238 = vunpack.c.0.s8 %v2237
    %v2239 = vlaneseq
    %v2240 = vshrl.u32 %v2239, 7
    %v2241 = vsub.s32 %v2238, %v2240
    %v2242 = vrot.slane %v2235, %v2241
    %v2243 = vcombine.low %v2234, %v2242
    %v2244 = vcombine.high %v2234, %v2242
    %v2245 = vpack.c.bf16 %v2193, %v2193
    %v2246 = vpack.c.bf16 %v2194, %v2194
    %v2247 = vpack.c.bf16 %v2243, %v2243
    %v2248 = vpack.c.bf16 %v2244, %v2244
    %2249 = vrot.lane.b32.xlu0 %v1999, 96
    %v2250 = vpop.permute.xlu0 %2249
    %2251 = vrot.lane.b32.xlu0 %v2002, 96
    %v2252 = vpop.permute.xlu0 %2251
    %2253 = vrot.lane.b32.xlu0 %v2008, 96
    %v2254 = vpop.permute.xlu0 %2253
    %2255 = vrot.lane.b32.xlu0 %v2010, 96
    %v2256 = vpop.permute.xlu0 %2255
    %v2261 = vcombine.high %v2250, 0.0
    %v2263 = vunpack.c.l.s4 1983009808
    %v2264 = vunpack.c.0.s8 %v2263
    %v2265 = vlaneseq
    %v2266 = vshrl.u32 %v2265, 7
    %v2267 = vsub.s32 %v2264, %v2266
    %v2268 = vrot.slane %v2250, %v2267
    %v2270 = vunpack.c.l.s4 1983009808
    %v2271 = vunpack.c.0.s8 %v2270
    %v2272 = vlaneseq
    %v2273 = vshrl.u32 %v2272, 7
    %v2274 = vsub.s32 %v2271, %v2273
    %v2275 = vrot.slane %v2261, %v2274
    %v2276 = vcombine.high %v2254, 0.0
    %v2278 = vunpack.c.l.s4 1983009808
    %v2279 = vunpack.c.0.s8 %v2278
    %v2280 = vlaneseq
    %v2281 = vshrl.u32 %v2280, 7
    %v2282 = vsub.s32 %v2279, %v2281
    %v2283 = vrot.slane %v2254, %v2282
    %v2285 = vunpack.c.l.s4 1983009808
    %v2286 = vunpack.c.0.s8 %v2285
    %v2287 = vlaneseq
    %v2288 = vshrl.u32 %v2287, 7
    %v2289 = vsub.s32 %v2286, %v2288
    %v2290 = vrot.slane %v2276, %v2289
    %v2291 = vcombine.low %v2268, %v2283
    %v2292 = vcombine.high %v2268, %v2283
    %v2294 = vunpack.c.l.s4 1934713408
    %v2295 = vunpack.c.0.s8 %v2294
    %v2296 = vlaneseq
    %v2297 = vshrl.u32 %v2296, 7
    %v2298 = vsub.s32 %v2295, %v2297
    %v2299 = vrot.slane %v2291, %v2298
    %v2301 = vunpack.c.l.s4 1934713408
    %v2302 = vunpack.c.0.s8 %v2301
    %v2303 = vlaneseq
    %v2304 = vshrl.u32 %v2303, 7
    %v2305 = vsub.s32 %v2302, %v2304
    %v2306 = vrot.slane %v2292, %v2305
    %v2307 = vcombine.low %v2275, %v2290
    %v2308 = vcombine.high %v2275, %v2290
    %v2310 = vunpack.c.l.s4 1934713408
    %v2311 = vunpack.c.0.s8 %v2310
    %v2312 = vlaneseq
    %v2313 = vshrl.u32 %v2312, 7
    %v2314 = vsub.s32 %v2311, %v2313
    %v2315 = vrot.slane %v2307, %v2314
    %v2317 = vunpack.c.l.s4 1934713408
    %v2318 = vunpack.c.0.s8 %v2317
    %v2319 = vlaneseq
    %v2320 = vshrl.u32 %v2319, 7
    %v2321 = vsub.s32 %v2318, %v2320
    %v2322 = vrot.slane %v2308, %v2321
    %v2323 = vcombine.high %v2299, 0.0
    %v2324 = vcombine.high %v2306, 0.0
    %v2325 = vcombine.high %v2315, 0.0
    %v2326 = vcombine.high %v2322, 0.0
    %v2327 = vcombine.high %v2252, 0.0
    %v2329 = vunpack.c.l.s4 1983009808
    %v2330 = vunpack.c.0.s8 %v2329
    %v2331 = vlaneseq
    %v2332 = vshrl.u32 %v2331, 7
    %v2333 = vsub.s32 %v2330, %v2332
    %v2334 = vrot.slane %v2252, %v2333
    %v2336 = vunpack.c.l.s4 1983009808
    %v2337 = vunpack.c.0.s8 %v2336
    %v2338 = vlaneseq
    %v2339 = vshrl.u32 %v2338, 7
    %v2340 = vsub.s32 %v2337, %v2339
    %v2341 = vrot.slane %v2327, %v2340
    %v2342 = vcombine.high %v2256, 0.0
    %v2344 = vunpack.c.l.s4 1983009808
    %v2345 = vunpack.c.0.s8 %v2344
    %v2346 = vlaneseq
    %v2347 = vshrl.u32 %v2346, 7
    %v2348 = vsub.s32 %v2345, %v2347
    %v2349 = vrot.slane %v2256, %v2348
    %v2351 = vunpack.c.l.s4 1983009808
    %v2352 = vunpack.c.0.s8 %v2351
    %v2353 = vlaneseq
    %v2354 = vshrl.u32 %v2353, 7
    %v2355 = vsub.s32 %v2352, %v2354
    %v2356 = vrot.slane %v2342, %v2355
    %v2357 = vcombine.low %v2334, %v2349
    %v2358 = vcombine.high %v2334, %v2349
    %v2360 = vunpack.c.l.s4 1934713408
    %v2361 = vunpack.c.0.s8 %v2360
    %v2362 = vlaneseq
    %v2363 = vshrl.u32 %v2362, 7
    %v2364 = vsub.s32 %v2361, %v2363
    %v2365 = vrot.slane %v2357, %v2364
    %v2367 = vunpack.c.l.s4 1934713408
    %v2368 = vunpack.c.0.s8 %v2367
    %v2369 = vlaneseq
    %v2370 = vshrl.u32 %v2369, 7
    %v2371 = vsub.s32 %v2368, %v2370
    %v2372 = vrot.slane %v2358, %v2371
    %v2373 = vcombine.low %v2341, %v2356
    %v2374 = vcombine.high %v2341, %v2356
    %v2376 = vunpack.c.l.s4 1934713408
    %v2377 = vunpack.c.0.s8 %v2376
    %v2378 = vlaneseq
    %v2379 = vshrl.u32 %v2378, 7
    %v2380 = vsub.s32 %v2377, %v2379
    %v2381 = vrot.slane %v2373, %v2380
    %v2383 = vunpack.c.l.s4 1934713408
    %v2384 = vunpack.c.0.s8 %v2383
    %v2385 = vlaneseq
    %v2386 = vshrl.u32 %v2385, 7
    %v2387 = vsub.s32 %v2384, %v2386
    %v2388 = vrot.slane %v2374, %v2387
    %v2389 = vcombine.high %v2365, 0.0
    %v2390 = vcombine.high %v2372, 0.0
    %v2391 = vcombine.high %v2381, 0.0
    %v2392 = vcombine.high %v2388, 0.0
    %v2393 = vcombine.low %v2299, %v2306
    %v2395 = vunpack.c.l.s4 1983009808
    %v2396 = vunpack.c.0.s8 %v2395
    %v2397 = vlaneseq
    %v2398 = vshrl.u32 %v2397, 7
    %v2399 = vsub.s32 %v2396, %v2398
    %v2400 = vrot.slane %v2393, %v2399
    %v2401 = vcombine.low %v2323, %v2324
    %v2403 = vunpack.c.l.s4 1983009808
    %v2404 = vunpack.c.0.s8 %v2403
    %v2405 = vlaneseq
    %v2406 = vshrl.u32 %v2405, 7
    %v2407 = vsub.s32 %v2404, %v2406
    %v2408 = vrot.slane %v2401, %v2407
    %v2409 = vcombine.low %v2315, %v2322
    %v2411 = vunpack.c.l.s4 1983009808
    %v2412 = vunpack.c.0.s8 %v2411
    %v2413 = vlaneseq
    %v2414 = vshrl.u32 %v2413, 7
    %v2415 = vsub.s32 %v2412, %v2414
    %v2416 = vrot.slane %v2409, %v2415
    %v2417 = vcombine.low %v2325, %v2326
    %v2419 = vunpack.c.l.s4 1983009808
    %v2420 = vunpack.c.0.s8 %v2419
    %v2421 = vlaneseq
    %v2422 = vshrl.u32 %v2421, 7
    %v2423 = vsub.s32 %v2420, %v2422
    %v2424 = vrot.slane %v2417, %v2423
    %v2425 = vcombine.low %v2400, %v2408
    %v2427 = vunpack.c.l.s4 1934713408
    %v2428 = vunpack.c.0.s8 %v2427
    %v2429 = vlaneseq
    %v2430 = vshrl.u32 %v2429, 7
    %v2431 = vsub.s32 %v2428, %v2430
    %v2432 = vrot.slane %v2425, %v2431
    %v2433 = vcombine.low %v2416, %v2424
    %v2435 = vunpack.c.l.s4 1934713408
    %v2436 = vunpack.c.0.s8 %v2435
    %v2437 = vlaneseq
    %v2438 = vshrl.u32 %v2437, 7
    %v2439 = vsub.s32 %v2436, %v2438
    %v2440 = vrot.slane %v2433, %v2439
    %v2441 = vcombine.low %v2432, %v2440
    %v2442 = vcombine.high %v2432, %v2440
    %v2443 = vcombine.low %v2365, %v2372
    %v2445 = vunpack.c.l.s4 1983009808
    %v2446 = vunpack.c.0.s8 %v2445
    %v2447 = vlaneseq
    %v2448 = vshrl.u32 %v2447, 7
    %v2449 = vsub.s32 %v2446, %v2448
    %v2450 = vrot.slane %v2443, %v2449
    %v2451 = vcombine.low %v2389, %v2390
    %v2453 = vunpack.c.l.s4 1983009808
    %v2454 = vunpack.c.0.s8 %v2453
    %v2455 = vlaneseq
    %v2456 = vshrl.u32 %v2455, 7
    %v2457 = vsub.s32 %v2454, %v2456
    %v2458 = vrot.slane %v2451, %v2457
    %v2459 = vcombine.low %v2381, %v2388
    %v2461 = vunpack.c.l.s4 1983009808
    %v2462 = vunpack.c.0.s8 %v2461
    %v2463 = vlaneseq
    %v2464 = vshrl.u32 %v2463, 7
    %v2465 = vsub.s32 %v2462, %v2464
    %v2466 = vrot.slane %v2459, %v2465
    %v2467 = vcombine.low %v2391, %v2392
    %v2469 = vunpack.c.l.s4 1983009808
    %v2470 = vunpack.c.0.s8 %v2469
    %v2471 = vlaneseq
    %v2472 = vshrl.u32 %v2471, 7
    %v2473 = vsub.s32 %v2470, %v2472
    %v2474 = vrot.slane %v2467, %v2473
    %v2475 = vcombine.low %v2450, %v2458
    %v2477 = vunpack.c.l.s4 1934713408
    %v2478 = vunpack.c.0.s8 %v2477
    %v2479 = vlaneseq
    %v2480 = vshrl.u32 %v2479, 7
    %v2481 = vsub.s32 %v2478, %v2480
    %v2482 = vrot.slane %v2475, %v2481
    %v2483 = vcombine.low %v2466, %v2474
    %v2485 = vunpack.c.l.s4 1934713408
    %v2486 = vunpack.c.0.s8 %v2485
    %v2487 = vlaneseq
    %v2488 = vshrl.u32 %v2487, 7
    %v2489 = vsub.s32 %v2486, %v2488
    %v2490 = vrot.slane %v2483, %v2489
    %v2491 = vcombine.low %v2482, %v2490
    %v2492 = vcombine.high %v2482, %v2490
    %v2493 = vpack.c.bf16 %v2441, %v2441
    %v2494 = vpack.c.bf16 %v2442, %v2442
    %v2495 = vpack.c.bf16 %v2491, %v2491
    %v2496 = vpack.c.bf16 %v2492, %v2492
    %2497 = vrot.lane.b32.xlu0 %v1999, 64
    %v2498 = vpop.permute.xlu0 %2497
    %2499 = vrot.lane.b32.xlu0 %v2002, 64
    %v2500 = vpop.permute.xlu0 %2499
    %2501 = vrot.lane.b32.xlu0 %v2008, 64
    %v2502 = vpop.permute.xlu0 %2501
    %2503 = vrot.lane.b32.xlu0 %v2010, 64
    %v2504 = vpop.permute.xlu0 %2503
    %v2509 = vcombine.high %v2498, 0.0
    %v2511 = vunpack.c.l.s4 1983009808
    %v2512 = vunpack.c.0.s8 %v2511
    %v2513 = vlaneseq
    %v2514 = vshrl.u32 %v2513, 7
    %v2515 = vsub.s32 %v2512, %v2514
    %v2516 = vrot.slane %v2498, %v2515
    %v2518 = vunpack.c.l.s4 1983009808
    %v2519 = vunpack.c.0.s8 %v2518
    %v2520 = vlaneseq
    %v2521 = vshrl.u32 %v2520, 7
    %v2522 = vsub.s32 %v2519, %v2521
    %v2523 = vrot.slane %v2509, %v2522
    %v2524 = vcombine.high %v2502, 0.0
    %v2526 = vunpack.c.l.s4 1983009808
    %v2527 = vunpack.c.0.s8 %v2526
    %v2528 = vlaneseq
    %v2529 = vshrl.u32 %v2528, 7
    %v2530 = vsub.s32 %v2527, %v2529
    %v2531 = vrot.slane %v2502, %v2530
    %v2533 = vunpack.c.l.s4 1983009808
    %v2534 = vunpack.c.0.s8 %v2533
    %v2535 = vlaneseq
    %v2536 = vshrl.u32 %v2535, 7
    %v2537 = vsub.s32 %v2534, %v2536
    %v2538 = vrot.slane %v2524, %v2537
    %v2539 = vcombine.low %v2516, %v2531
    %v2540 = vcombine.high %v2516, %v2531
    %v2542 = vunpack.c.l.s4 1934713408
    %v2543 = vunpack.c.0.s8 %v2542
    %v2544 = vlaneseq
    %v2545 = vshrl.u32 %v2544, 7
    %v2546 = vsub.s32 %v2543, %v2545
    %v2547 = vrot.slane %v2539, %v2546
    %v2549 = vunpack.c.l.s4 1934713408
    %v2550 = vunpack.c.0.s8 %v2549
    %v2551 = vlaneseq
    %v2552 = vshrl.u32 %v2551, 7
    %v2553 = vsub.s32 %v2550, %v2552
    %v2554 = vrot.slane %v2540, %v2553
    %v2555 = vcombine.low %v2523, %v2538
    %v2556 = vcombine.high %v2523, %v2538
    %v2558 = vunpack.c.l.s4 1934713408
    %v2559 = vunpack.c.0.s8 %v2558
    %v2560 = vlaneseq
    %v2561 = vshrl.u32 %v2560, 7
    %v2562 = vsub.s32 %v2559, %v2561
    %v2563 = vrot.slane %v2555, %v2562
    %v2565 = vunpack.c.l.s4 1934713408
    %v2566 = vunpack.c.0.s8 %v2565
    %v2567 = vlaneseq
    %v2568 = vshrl.u32 %v2567, 7
    %v2569 = vsub.s32 %v2566, %v2568
    %v2570 = vrot.slane %v2556, %v2569
    %v2571 = vcombine.high %v2547, 0.0
    %v2572 = vcombine.high %v2554, 0.0
    %v2573 = vcombine.high %v2563, 0.0
    %v2574 = vcombine.high %v2570, 0.0
    %v2575 = vcombine.high %v2500, 0.0
    %v2577 = vunpack.c.l.s4 1983009808
    %v2578 = vunpack.c.0.s8 %v2577
    %v2579 = vlaneseq
    %v2580 = vshrl.u32 %v2579, 7
    %v2581 = vsub.s32 %v2578, %v2580
    %v2582 = vrot.slane %v2500, %v2581
    %v2584 = vunpack.c.l.s4 1983009808
    %v2585 = vunpack.c.0.s8 %v2584
    %v2586 = vlaneseq
    %v2587 = vshrl.u32 %v2586, 7
    %v2588 = vsub.s32 %v2585, %v2587
    %v2589 = vrot.slane %v2575, %v2588
    %v2590 = vcombine.high %v2504, 0.0
    %v2592 = vunpack.c.l.s4 1983009808
    %v2593 = vunpack.c.0.s8 %v2592
    %v2594 = vlaneseq
    %v2595 = vshrl.u32 %v2594, 7
    %v2596 = vsub.s32 %v2593, %v2595
    %v2597 = vrot.slane %v2504, %v2596
    %v2599 = vunpack.c.l.s4 1983009808
    %v2600 = vunpack.c.0.s8 %v2599
    %v2601 = vlaneseq
    %v2602 = vshrl.u32 %v2601, 7
    %v2603 = vsub.s32 %v2600, %v2602
    %v2604 = vrot.slane %v2590, %v2603
    %v2605 = vcombine.low %v2582, %v2597
    %v2606 = vcombine.high %v2582, %v2597
    %v2608 = vunpack.c.l.s4 1934713408
    %v2609 = vunpack.c.0.s8 %v2608
    %v2610 = vlaneseq
    %v2611 = vshrl.u32 %v2610, 7
    %v2612 = vsub.s32 %v2609, %v2611
    %v2613 = vrot.slane %v2605, %v2612
    %v2615 = vunpack.c.l.s4 1934713408
    %v2616 = vunpack.c.0.s8 %v2615
    %v2617 = vlaneseq
    %v2618 = vshrl.u32 %v2617, 7
    %v2619 = vsub.s32 %v2616, %v2618
    %v2620 = vrot.slane %v2606, %v2619
    %v2621 = vcombine.low %v2589, %v2604
    %v2622 = vcombine.high %v2589, %v2604
    %v2624 = vunpack.c.l.s4 1934713408
    %v2625 = vunpack.c.0.s8 %v2624
    %v2626 = vlaneseq
    %v2627 = vshrl.u32 %v2626, 7
    %v2628 = vsub.s32 %v2625, %v2627
    %v2629 = vrot.slane %v2621, %v2628
    %v2631 = vunpack.c.l.s4 1934713408
    %v2632 = vunpack.c.0.s8 %v2631
    %v2633 = vlaneseq
    %v2634 = vshrl.u32 %v2633, 7
    %v2635 = vsub.s32 %v2632, %v2634
    %v2636 = vrot.slane %v2622, %v2635
    %v2637 = vcombine.high %v2613, 0.0
    %v2638 = vcombine.high %v2620, 0.0
    %v2639 = vcombine.high %v2629, 0.0
    %v2640 = vcombine.high %v2636, 0.0
    %v2641 = vcombine.low %v2547, %v2554
    %v2643 = vunpack.c.l.s4 1983009808
    %v2644 = vunpack.c.0.s8 %v2643
    %v2645 = vlaneseq
    %v2646 = vshrl.u32 %v2645, 7
    %v2647 = vsub.s32 %v2644, %v2646
    %v2648 = vrot.slane %v2641, %v2647
    %v2649 = vcombine.low %v2571, %v2572
    %v2651 = vunpack.c.l.s4 1983009808
    %v2652 = vunpack.c.0.s8 %v2651
    %v2653 = vlaneseq
    %v2654 = vshrl.u32 %v2653, 7
    %v2655 = vsub.s32 %v2652, %v2654
    %v2656 = vrot.slane %v2649, %v2655
    %v2657 = vcombine.low %v2563, %v2570
    %v2659 = vunpack.c.l.s4 1983009808
    %v2660 = vunpack.c.0.s8 %v2659
    %v2661 = vlaneseq
    %v2662 = vshrl.u32 %v2661, 7
    %v2663 = vsub.s32 %v2660, %v2662
    %v2664 = vrot.slane %v2657, %v2663
    %v2665 = vcombine.low %v2573, %v2574
    %v2667 = vunpack.c.l.s4 1983009808
    %v2668 = vunpack.c.0.s8 %v2667
    %v2669 = vlaneseq
    %v2670 = vshrl.u32 %v2669, 7
    %v2671 = vsub.s32 %v2668, %v2670
    %v2672 = vrot.slane %v2665, %v2671
    %v2673 = vcombine.low %v2648, %v2656
    %v2675 = vunpack.c.l.s4 1934713408
    %v2676 = vunpack.c.0.s8 %v2675
    %v2677 = vlaneseq
    %v2678 = vshrl.u32 %v2677, 7
    %v2679 = vsub.s32 %v2676, %v2678
    %v2680 = vrot.slane %v2673, %v2679
    %v2681 = vcombine.low %v2664, %v2672
    %v2683 = vunpack.c.l.s4 1934713408
    %v2684 = vunpack.c.0.s8 %v2683
    %v2685 = vlaneseq
    %v2686 = vshrl.u32 %v2685, 7
    %v2687 = vsub.s32 %v2684, %v2686
    %v2688 = vrot.slane %v2681, %v2687
    %v2689 = vcombine.low %v2680, %v2688
    %v2690 = vcombine.high %v2680, %v2688
    %v2691 = vcombine.low %v2613, %v2620
    %v2693 = vunpack.c.l.s4 1983009808
    %v2694 = vunpack.c.0.s8 %v2693
    %v2695 = vlaneseq
    %v2696 = vshrl.u32 %v2695, 7
    %v2697 = vsub.s32 %v2694, %v2696
    %v2698 = vrot.slane %v2691, %v2697
    %v2699 = vcombine.low %v2637, %v2638
    %v2701 = vunpack.c.l.s4 1983009808
    %v2702 = vunpack.c.0.s8 %v2701
    %v2703 = vlaneseq
    %v2704 = vshrl.u32 %v2703, 7
    %v2705 = vsub.s32 %v2702, %v2704
    %v2706 = vrot.slane %v2699, %v2705
    %v2707 = vcombine.low %v2629, %v2636
    %v2709 = vunpack.c.l.s4 1983009808
    %v2710 = vunpack.c.0.s8 %v2709
    %v2711 = vlaneseq
    %v2712 = vshrl.u32 %v2711, 7
    %v2713 = vsub.s32 %v2710, %v2712
    %v2714 = vrot.slane %v2707, %v2713
    %v2715 = vcombine.low %v2639, %v2640
    %v2717 = vunpack.c.l.s4 1983009808
    %v2718 = vunpack.c.0.s8 %v2717
    %v2719 = vlaneseq
    %v2720 = vshrl.u32 %v2719, 7
    %v2721 = vsub.s32 %v2718, %v2720
    %v2722 = vrot.slane %v2715, %v2721
    %v2723 = vcombine.low %v2698, %v2706
    %v2725 = vunpack.c.l.s4 1934713408
    %v2726 = vunpack.c.0.s8 %v2725
    %v2727 = vlaneseq
    %v2728 = vshrl.u32 %v2727, 7
    %v2729 = vsub.s32 %v2726, %v2728
    %v2730 = vrot.slane %v2723, %v2729
    %v2731 = vcombine.low %v2714, %v2722
    %v2733 = vunpack.c.l.s4 1934713408
    %v2734 = vunpack.c.0.s8 %v2733
    %v2735 = vlaneseq
    %v2736 = vshrl.u32 %v2735, 7
    %v2737 = vsub.s32 %v2734, %v2736
    %v2738 = vrot.slane %v2731, %v2737
    %v2739 = vcombine.low %v2730, %v2738
    %v2740 = vcombine.high %v2730, %v2738
    %v2741 = vpack.c.bf16 %v2689, %v2689
    %v2742 = vpack.c.bf16 %v2690, %v2690
    %v2743 = vpack.c.bf16 %v2739, %v2739
    %v2744 = vpack.c.bf16 %v2740, %v2740
    %v2746 = vsel %vm939, %v2245, 0
    %v2749 = vsel %vm939, %v2493, 0
    %2751 = vmatprep.subr.bf16.mxu0 0
    %2752 = vmatpush1.bf16.xpose.msra.mxu0 0
    %2753 = vmatprep.subr.bf16.mxu0 0
    %2754 = vmatpush1.bf16.xpose.msra.mxu0 0
    %2755 = vmatprep.subr.bf16.mxu0 0
    %2756 = vmatpush1.bf16.xpose.msra.mxu0 0
    %2757 = vmatprep.subr.bf16.mxu0 0
    %2758 = vmatpush1.bf16.xpose.msra.mxu0 0
    %2759 = vmatprep.subr.bf16.mxu0 0
    %2760 = vmatpush1.bf16.xpose.msra.mxu0 0
    %2761 = vmatprep.subr.bf16.mxu0 0
    %2762 = vmatpush1.bf16.xpose.msra.mxu0 0
    %2763 = vmatprep.subr.bf16.mxu0 0
    %2764 = vmatpush1.bf16.xpose.msra.mxu0 0
    %2765 = vmatprep.subr.bf16.mxu0 0
    %2766 = vmatpush1.bf16.xpose.msra.mxu0 %v2749
    %2767 = vmatprep.subr.bf16.mxu0 0
    %2768 = vmatpush2.bf16.xpose.msra.mxu0 0
    %2769 = vmatprep.subr.bf16.mxu0 0
    %2770 = vmatpush2.bf16.xpose.msra.mxu0 0
    %2771 = vmatprep.subr.bf16.mxu0 0
    %2772 = vmatpush2.bf16.xpose.msra.mxu0 0
    %2773 = vmatprep.subr.bf16.mxu0 0
    %2774 = vmatpush2.bf16.xpose.msra.mxu0 0
    %2775 = vmatprep.subr.bf16.mxu0 0
    %2776 = vmatpush2.bf16.xpose.msra.mxu0 0
    %2777 = vmatprep.subr.bf16.mxu0 0
    %2778 = vmatpush2.bf16.xpose.msra.mxu0 0
    %2779 = vmatprep.subr.bf16.mxu0 0
    %2780 = vmatpush2.bf16.xpose.msra.mxu0 0
    %2781 = vmatprep.subr.bf16.mxu0 0
    %2782 = vmatpush2.bf16.xpose.msra.mxu0 0
    %2783 = vmatprep.mubr.bf16.mxu0 0
    %2784 = vmatmul.mubr.bf16.gmra.mxu0 %v2746
    %v2785 = vpop.f32.mrf.mxu0
    %v2786 = vadd.f32 0.0, %v2785
    %v2787 = vpop.f32.mrf.mxu0
    %v2788 = vpop.f32.mrf.mxu0
    %v2789 = vpop.f32.mrf.mxu0
    %2790 = vdwg.mxu0
    %v2792 = vsel %vm939, %v2246, 0
    %v2795 = vsel %vm939, %v2494, 0
    %2797 = vmatprep.subr.bf16.mxu0 0
    %2798 = vmatpush1.bf16.xpose.msra.mxu0 0
    %2799 = vmatprep.subr.bf16.mxu0 0
    %2800 = vmatpush1.bf16.xpose.msra.mxu0 0
    %2801 = vmatprep.subr.bf16.mxu0 0
    %2802 = vmatpush1.bf16.xpose.msra.mxu0 0
    %2803 = vmatprep.subr.bf16.mxu0 0
    %2804 = vmatpush1.bf16.xpose.msra.mxu0 0
    %2805 = vmatprep.subr.bf16.mxu0 0
    %2806 = vmatpush1.bf16.xpose.msra.mxu0 0
    %2807 = vmatprep.subr.bf16.mxu0 0
    %2808 = vmatpush1.bf16.xpose.msra.mxu0 0
    %2809 = vmatprep.subr.bf16.mxu0 0
    %2810 = vmatpush1.bf16.xpose.msra.mxu0 0
    %2811 = vmatprep.subr.bf16.mxu0 0
    %2812 = vmatpush1.bf16.xpose.msra.mxu0 %v2795
    %2813 = vmatprep.subr.bf16.mxu0 0
    %2814 = vmatpush2.bf16.xpose.msra.mxu0 0
    %2815 = vmatprep.subr.bf16.mxu0 0
    %2816 = vmatpush2.bf16.xpose.msra.mxu0 0
    %2817 = vmatprep.subr.bf16.mxu0 0
    %2818 = vmatpush2.bf16.xpose.msra.mxu0 0
    %2819 = vmatprep.subr.bf16.mxu0 0
    %2820 = vmatpush2.bf16.xpose.msra.mxu0 0
    %2821 = vmatprep.subr.bf16.mxu0 0
    %2822 = vmatpush2.bf16.xpose.msra.mxu0 0
    %2823 = vmatprep.subr.bf16.mxu0 0
    %2824 = vmatpush2.bf16.xpose.msra.mxu0 0
    %2825 = vmatprep.subr.bf16.mxu0 0
    %2826 = vmatpush2.bf16.xpose.msra.mxu0 0
    %2827 = vmatprep.subr.bf16.mxu0 0
    %2828 = vmatpush2.bf16.xpose.msra.mxu0 0
    %2829 = vmatprep.mubr.bf16.mxu0 0
    %2830 = vmatmul.mubr.bf16.gmra.mxu0 %v2792
    %v2831 = vpop.f32.mrf.mxu0
    %v2832 = vadd.f32 0.0, %v2831
    %v2833 = vpop.f32.mrf.mxu0
    %v2834 = vpop.f32.mrf.mxu0
    %v2835 = vpop.f32.mrf.mxu0
    %2836 = vdwg.mxu0
    %v2838 = vsel %vm939, %v2247, 0
    %v2841 = vsel %vm939, %v2495, 0
    %2843 = vmatprep.subr.bf16.mxu0 0
    %2844 = vmatpush1.bf16.xpose.msra.mxu0 0
    %2845 = vmatprep.subr.bf16.mxu0 0
    %2846 = vmatpush1.bf16.xpose.msra.mxu0 0
    %2847 = vmatprep.subr.bf16.mxu0 0
    %2848 = vmatpush1.bf16.xpose.msra.mxu0 0
    %2849 = vmatprep.subr.bf16.mxu0 0
    %2850 = vmatpush1.bf16.xpose.msra.mxu0 0
    %2851 = vmatprep.subr.bf16.mxu0 0
    %2852 = vmatpush1.bf16.xpose.msra.mxu0 0
    %2853 = vmatprep.subr.bf16.mxu0 0
    %2854 = vmatpush1.bf16.xpose.msra.mxu0 0
    %2855 = vmatprep.subr.bf16.mxu0 0
    %2856 = vmatpush1.bf16.xpose.msra.mxu0 0
    %2857 = vmatprep.subr.bf16.mxu0 0
    %2858 = vmatpush1.bf16.xpose.msra.mxu0 %v2841
    %2859 = vmatprep.subr.bf16.mxu0 0
    %2860 = vmatpush2.bf16.xpose.msra.mxu0 0
    %2861 = vmatprep.subr.bf16.mxu0 0
    %2862 = vmatpush2.bf16.xpose.msra.mxu0 0
    %2863 = vmatprep.subr.bf16.mxu0 0
    %2864 = vmatpush2.bf16.xpose.msra.mxu0 0
    %2865 = vmatprep.subr.bf16.mxu0 0
    %2866 = vmatpush2.bf16.xpose.msra.mxu0 0
    %2867 = vmatprep.subr.bf16.mxu0 0
    %2868 = vmatpush2.bf16.xpose.msra.mxu0 0
    %2869 = vmatprep.subr.bf16.mxu0 0
    %2870 = vmatpush2.bf16.xpose.msra.mxu0 0
    %2871 = vmatprep.subr.bf16.mxu0 0
    %2872 = vmatpush2.bf16.xpose.msra.mxu0 0
    %2873 = vmatprep.subr.bf16.mxu0 0
    %2874 = vmatpush2.bf16.xpose.msra.mxu0 0
    %2875 = vmatprep.mubr.bf16.mxu0 0
    %2876 = vmatmul.mubr.bf16.gmra.mxu0 %v2838
    %v2877 = vpop.f32.mrf.mxu0
    %v2878 = vadd.f32 0.0, %v2877
    %v2879 = vpop.f32.mrf.mxu0
    %v2880 = vpop.f32.mrf.mxu0
    %v2881 = vpop.f32.mrf.mxu0
    %2882 = vdwg.mxu0
    %v2884 = vsel %vm939, %v2248, 0
    %v2887 = vsel %vm939, %v2496, 0
    %2889 = vmatprep.subr.bf16.mxu0 0
    %2890 = vmatpush1.bf16.xpose.msra.mxu0 0
    %2891 = vmatprep.subr.bf16.mxu0 0
    %2892 = vmatpush1.bf16.xpose.msra.mxu0 0
    %2893 = vmatprep.subr.bf16.mxu0 0
    %2894 = vmatpush1.bf16.xpose.msra.mxu0 0
    %2895 = vmatprep.subr.bf16.mxu0 0
    %2896 = vmatpush1.bf16.xpose.msra.mxu0 0
    %2897 = vmatprep.subr.bf16.mxu0 0
    %2898 = vmatpush1.bf16.xpose.msra.mxu0 0
    %2899 = vmatprep.subr.bf16.mxu0 0
    %2900 = vmatpush1.bf16.xpose.msra.mxu0 0
    %2901 = vmatprep.subr.bf16.mxu0 0
    %2902 = vmatpush1.bf16.xpose.msra.mxu0 0
    %2903 = vmatprep.subr.bf16.mxu0 0
    %2904 = vmatpush1.bf16.xpose.msra.mxu0 %v2887
    %2905 = vmatprep.subr.bf16.mxu0 0
    %2906 = vmatpush2.bf16.xpose.msra.mxu0 0
    %2907 = vmatprep.subr.bf16.mxu0 0
    %2908 = vmatpush2.bf16.xpose.msra.mxu0 0
    %2909 = vmatprep.subr.bf16.mxu0 0
    %2910 = vmatpush2.bf16.xpose.msra.mxu0 0
    %2911 = vmatprep.subr.bf16.mxu0 0
    %2912 = vmatpush2.bf16.xpose.msra.mxu0 0
    %2913 = vmatprep.subr.bf16.mxu0 0
    %2914 = vmatpush2.bf16.xpose.msra.mxu0 0
    %2915 = vmatprep.subr.bf16.mxu0 0
    %2916 = vmatpush2.bf16.xpose.msra.mxu0 0
    %2917 = vmatprep.subr.bf16.mxu0 0
    %2918 = vmatpush2.bf16.xpose.msra.mxu0 0
    %2919 = vmatprep.subr.bf16.mxu0 0
    %2920 = vmatpush2.bf16.xpose.msra.mxu0 0
    %2921 = vmatprep.mubr.bf16.mxu0 0
    %2922 = vmatmul.mubr.bf16.gmra.mxu0 %v2884
    %v2923 = vpop.f32.mrf.mxu0
    %v2924 = vadd.f32 0.0, %v2923
    %v2925 = vpop.f32.mrf.mxu0
    %v2926 = vpop.f32.mrf.mxu0
    %v2927 = vpop.f32.mrf.mxu0
    %2928 = vdwg.mxu0
    %v2929 = vmul.f32 %v2786, 0.25
    %v2930 = vmul.f32 %v2832, 0.25
    %v2931 = vmul.f32 %v2878, 0.25
    %v2932 = vmul.f32 %v2924, 0.25
    %v2933 = vsel %vm1128, %v2929, -inf
    %2934 = vmax.xlane.f32.xlu0 %v2933
    %v2935 = vpop.xlane.xlu0 %2934
    %v2936 = vsel %vm1128, %v2930, -inf
    %2937 = vmax.xlane.f32.xlu0 %v2936
    %v2938 = vpop.xlane.xlu0 %2937
    %v2939 = vsel %vm1128, %v2931, -inf
    %2940 = vmax.xlane.f32.xlu0 %v2939
    %v2941 = vpop.xlane.xlu0 %2940
    %v2942 = vsel %vm1128, %v2932, -inf
    %2943 = vmax.xlane.f32.xlu0 %v2942
    %v2944 = vpop.xlane.xlu0 %2943
    %v2945 = vsub.f32 %v2929, %v2935
    %v2946 = vsub.f32 %v2930, %v2938
    %v2947 = vsub.f32 %v2931, %v2941
    %v2948 = vsub.f32 %v2932, %v2944
    %v2949 = vmul.f32 %v2945, 1.442695
    %v2950 = vpow.pop %v2949
    %v2951 = vmul.f32 %v2946, 1.442695
    %v2952 = vpow.pop %v2951
    %v2953 = vmul.f32 %v2947, 1.442695
    %v2954 = vpow.pop %v2953
    %v2955 = vmul.f32 %v2948, 1.442695
    %v2956 = vpow.pop %v2955
    %v2957 = vsel %vm1128, %v2950, 0.0
    %2958 = vadd.xlane.f32.xlu0 %v2957
    %v2959 = vpop.xlane.xlu0 %2958
    %v2960 = vsel %vm1128, %v2952, 0.0
    %2961 = vadd.xlane.f32.xlu0 %v2960
    %v2962 = vpop.xlane.xlu0 %2961
    %v2963 = vsel %vm1128, %v2954, 0.0
    %2964 = vadd.xlane.f32.xlu0 %v2963
    %v2965 = vpop.xlane.xlu0 %2964
    %v2966 = vsel %vm1128, %v2956, 0.0
    %2967 = vadd.xlane.f32.xlu0 %v2966
    %v2968 = vpop.xlane.xlu0 %2967
    %v2969 = vrcp.pop %v2959
    %v2970 = vrcp.pop %v2962
    %v2971 = vrcp.pop %v2965
    %v2972 = vrcp.pop %v2968
    %v2973 = vmul.f32 %v2950, %v2969
    %v2974 = vmul.f32 %v2952, %v2970
    %v2975 = vmul.f32 %v2954, %v2971
    %v2976 = vmul.f32 %v2956, %v2972
    %v2977 = vpack.c.bf16 %v2973, %v2973
    %v2978 = vpack.c.bf16 %v2974, %v2974
    %v2979 = vpack.c.bf16 %v2975, %v2975
    %v2980 = vpack.c.bf16 %v2976, %v2976
    %v2982 = vsel %vm1128, %v2977, 0
    %v2985 = vsel %vm1180, %v2741, 0
    %2987 = vmatprep.subr.bf16.mxu0 0
    %2988 = vmatpush1.bf16.msra.mxu0 0
    %2989 = vmatprep.subr.bf16.mxu0 0
    %2990 = vmatpush1.bf16.msra.mxu0 0
    %2991 = vmatprep.subr.bf16.mxu0 0
    %2992 = vmatpush1.bf16.msra.mxu0 0
    %2993 = vmatprep.subr.bf16.mxu0 0
    %2994 = vmatpush1.bf16.msra.mxu0 0
    %2995 = vmatprep.subr.bf16.mxu0 0
    %2996 = vmatpush1.bf16.msra.mxu0 0
    %2997 = vmatprep.subr.bf16.mxu0 0
    %2998 = vmatpush1.bf16.msra.mxu0 0
    %2999 = vmatprep.subr.bf16.mxu0 0
    %3000 = vmatpush1.bf16.msra.mxu0 0
    %3001 = vmatprep.subr.bf16.mxu0 0
    %3002 = vmatpush1.bf16.msra.mxu0 %v2985
    %3003 = vmatprep.subr.bf16.mxu0 0
    %3004 = vmatpush2.bf16.msra.mxu0 0
    %3005 = vmatprep.subr.bf16.mxu0 0
    %3006 = vmatpush2.bf16.msra.mxu0 0
    %3007 = vmatprep.subr.bf16.mxu0 0
    %3008 = vmatpush2.bf16.msra.mxu0 0
    %3009 = vmatprep.subr.bf16.mxu0 0
    %3010 = vmatpush2.bf16.msra.mxu0 0
    %3011 = vmatprep.subr.bf16.mxu0 0
    %3012 = vmatpush2.bf16.msra.mxu0 0
    %3013 = vmatprep.subr.bf16.mxu0 0
    %3014 = vmatpush2.bf16.msra.mxu0 0
    %3015 = vmatprep.subr.bf16.mxu0 0
    %3016 = vmatpush2.bf16.msra.mxu0 0
    %3017 = vmatprep.subr.bf16.mxu0 0
    %3018 = vmatpush2.bf16.msra.mxu0 0
    %3019 = vmatprep.mubr.bf16.mxu0 0
    %3020 = vmatmul.mubr.bf16.gmra.mxu0 %v2982
    %v3021 = vpop.f32.mrf.mxu0
    %v3022 = vadd.f32 0.0, %v3021
    %v3023 = vpop.f32.mrf.mxu0
    %v3024 = vpop.f32.mrf.mxu0
    %v3025 = vpop.f32.mrf.mxu0
    %3026 = vdwg.mxu0
    %v3028 = vsel %vm1128, %v2978, 0
    %v3031 = vsel %vm1180, %v2742, 0
    %3033 = vmatprep.subr.bf16.mxu0 0
    %3034 = vmatpush1.bf16.msra.mxu0 0
    %3035 = vmatprep.subr.bf16.mxu0 0
    %3036 = vmatpush1.bf16.msra.mxu0 0
    %3037 = vmatprep.subr.bf16.mxu0 0
    %3038 = vmatpush1.bf16.msra.mxu0 0
    %3039 = vmatprep.subr.bf16.mxu0 0
    %3040 = vmatpush1.bf16.msra.mxu0 0
    %3041 = vmatprep.subr.bf16.mxu0 0
    %3042 = vmatpush1.bf16.msra.mxu0 0
    %3043 = vmatprep.subr.bf16.mxu0 0
    %3044 = vmatpush1.bf16.msra.mxu0 0
    %3045 = vmatprep.subr.bf16.mxu0 0
    %3046 = vmatpush1.bf16.msra.mxu0 0
    %3047 = vmatprep.subr.bf16.mxu0 0
    %3048 = vmatpush1.bf16.msra.mxu0 %v3031
    %3049 = vmatprep.subr.bf16.mxu0 0
    %3050 = vmatpush2.bf16.msra.mxu0 0
    %3051 = vmatprep.subr.bf16.mxu0 0
    %3052 = vmatpush2.bf16.msra.mxu0 0
    %3053 = vmatprep.subr.bf16.mxu0 0
    %3054 = vmatpush2.bf16.msra.mxu0 0
    %3055 = vmatprep.subr.bf16.mxu0 0
    %3056 = vmatpush2.bf16.msra.mxu0 0
    %3057 = vmatprep.subr.bf16.mxu0 0
    %3058 = vmatpush2.bf16.msra.mxu0 0
    %3059 = vmatprep.subr.bf16.mxu0 0
    %3060 = vmatpush2.bf16.msra.mxu0 0
    %3061 = vmatprep.subr.bf16.mxu0 0
    %3062 = vmatpush2.bf16.msra.mxu0 0
    %3063 = vmatprep.subr.bf16.mxu0 0
    %3064 = vmatpush2.bf16.msra.mxu0 0
    %3065 = vmatprep.mubr.bf16.mxu0 0
    %3066 = vmatmul.mubr.bf16.gmra.mxu0 %v3028
    %v3067 = vpop.f32.mrf.mxu0
    %v3068 = vadd.f32 0.0, %v3067
    %v3069 = vpop.f32.mrf.mxu0
    %v3070 = vpop.f32.mrf.mxu0
    %v3071 = vpop.f32.mrf.mxu0
    %3072 = vdwg.mxu0
    %v3074 = vsel %vm1128, %v2979, 0
    %v3077 = vsel %vm1180, %v2743, 0
    %3079 = vmatprep.subr.bf16.mxu0 0
    %3080 = vmatpush1.bf16.msra.mxu0 0
    %3081 = vmatprep.subr.bf16.mxu0 0
    %3082 = vmatpush1.bf16.msra.mxu0 0
    %3083 = vmatprep.subr.bf16.mxu0 0
    %3084 = vmatpush1.bf16.msra.mxu0 0
    %3085 = vmatprep.subr.bf16.mxu0 0
    %3086 = vmatpush1.bf16.msra.mxu0 0
    %3087 = vmatprep.subr.bf16.mxu0 0
    %3088 = vmatpush1.bf16.msra.mxu0 0
    %3089 = vmatprep.subr.bf16.mxu0 0
    %3090 = vmatpush1.bf16.msra.mxu0 0
    %3091 = vmatprep.subr.bf16.mxu0 0
    %3092 = vmatpush1.bf16.msra.mxu0 0
    %3093 = vmatprep.subr.bf16.mxu0 0
    %3094 = vmatpush1.bf16.msra.mxu0 %v3077
    %3095 = vmatprep.subr.bf16.mxu0 0
    %3096 = vmatpush2.bf16.msra.mxu0 0
    %3097 = vmatprep.subr.bf16.mxu0 0
    %3098 = vmatpush2.bf16.msra.mxu0 0
    %3099 = vmatprep.subr.bf16.mxu0 0
    %3100 = vmatpush2.bf16.msra.mxu0 0
    %3101 = vmatprep.subr.bf16.mxu0 0
    %3102 = vmatpush2.bf16.msra.mxu0 0
    %3103 = vmatprep.subr.bf16.mxu0 0
    %3104 = vmatpush2.bf16.msra.mxu0 0
    %3105 = vmatprep.subr.bf16.mxu0 0
    %3106 = vmatpush2.bf16.msra.mxu0 0
    %3107 = vmatprep.subr.bf16.mxu0 0
    %3108 = vmatpush2.bf16.msra.mxu0 0
    %3109 = vmatprep.subr.bf16.mxu0 0
    %3110 = vmatpush2.bf16.msra.mxu0 0
    %3111 = vmatprep.mubr.bf16.mxu0 0
    %3112 = vmatmul.mubr.bf16.gmra.mxu0 %v3074
    %v3113 = vpop.f32.mrf.mxu0
    %v3114 = vadd.f32 0.0, %v3113
    %v3115 = vpop.f32.mrf.mxu0
    %v3116 = vpop.f32.mrf.mxu0
    %v3117 = vpop.f32.mrf.mxu0
    %3118 = vdwg.mxu0
    %v3120 = vsel %vm1128, %v2980, 0
    %v3123 = vsel %vm1180, %v2744, 0
    %3125 = vmatprep.subr.bf16.mxu0 0
    %3126 = vmatpush1.bf16.msra.mxu0 0
    %3127 = vmatprep.subr.bf16.mxu0 0
    %3128 = vmatpush1.bf16.msra.mxu0 0
    %3129 = vmatprep.subr.bf16.mxu0 0
    %3130 = vmatpush1.bf16.msra.mxu0 0
    %3131 = vmatprep.subr.bf16.mxu0 0
    %3132 = vmatpush1.bf16.msra.mxu0 0
    %3133 = vmatprep.subr.bf16.mxu0 0
    %3134 = vmatpush1.bf16.msra.mxu0 0
    %3135 = vmatprep.subr.bf16.mxu0 0
    %3136 = vmatpush1.bf16.msra.mxu0 0
    %3137 = vmatprep.subr.bf16.mxu0 0
    %3138 = vmatpush1.bf16.msra.mxu0 0
    %3139 = vmatprep.subr.bf16.mxu0 0
    %3140 = vmatpush1.bf16.msra.mxu0 %v3123
    %3141 = vmatprep.subr.bf16.mxu0 0
    %3142 = vmatpush2.bf16.msra.mxu0 0
    %3143 = vmatprep.subr.bf16.mxu0 0
    %3144 = vmatpush2.bf16.msra.mxu0 0
    %3145 = vmatprep.subr.bf16.mxu0 0
    %3146 = vmatpush2.bf16.msra.mxu0 0
    %3147 = vmatprep.subr.bf16.mxu0 0
    %3148 = vmatpush2.bf16.msra.mxu0 0
    %3149 = vmatprep.subr.bf16.mxu0 0
    %3150 = vmatpush2.bf16.msra.mxu0 0
    %3151 = vmatprep.subr.bf16.mxu0 0
    %3152 = vmatpush2.bf16.msra.mxu0 0
    %3153 = vmatprep.subr.bf16.mxu0 0
    %3154 = vmatpush2.bf16.msra.mxu0 0
    %3155 = vmatprep.subr.bf16.mxu0 0
    %3156 = vmatpush2.bf16.msra.mxu0 0
    %3157 = vmatprep.mubr.bf16.mxu0 0
    %3158 = vmatmul.mubr.bf16.gmra.mxu0 %v3120
    %v3159 = vpop.f32.mrf.mxu0
    %v3160 = vadd.f32 0.0, %v3159
    %v3161 = vpop.f32.mrf.mxu0
    %v3162 = vpop.f32.mrf.mxu0
    %v3163 = vpop.f32.mrf.mxu0
    %3164 = vdwg.mxu0
    %v3165 = vcombine.high %v3022, 0.0
    %v3167 = vunpack.c.l.s4 1983009808
    %v3168 = vunpack.c.0.s8 %v3167
    %v3169 = vlaneseq
    %v3170 = vshrl.u32 %v3169, 7
    %v3171 = vsub.s32 %v3168, %v3170
    %v3172 = vrot.slane %v3022, %v3171
    %v3174 = vunpack.c.l.s4 1983009808
    %v3175 = vunpack.c.0.s8 %v3174
    %v3176 = vlaneseq
    %v3177 = vshrl.u32 %v3176, 7
    %v3178 = vsub.s32 %v3175, %v3177
    %v3179 = vrot.slane %v3165, %v3178
    %v3180 = vcombine.high %v3068, 0.0
    %v3182 = vunpack.c.l.s4 1983009808
    %v3183 = vunpack.c.0.s8 %v3182
    %v3184 = vlaneseq
    %v3185 = vshrl.u32 %v3184, 7
    %v3186 = vsub.s32 %v3183, %v3185
    %v3187 = vrot.slane %v3068, %v3186
    %v3189 = vunpack.c.l.s4 1983009808
    %v3190 = vunpack.c.0.s8 %v3189
    %v3191 = vlaneseq
    %v3192 = vshrl.u32 %v3191, 7
    %v3193 = vsub.s32 %v3190, %v3192
    %v3194 = vrot.slane %v3180, %v3193
    %v3195 = vcombine.low %v3172, %v3187
    %v3196 = vcombine.high %v3172, %v3187
    %v3198 = vunpack.c.l.s4 1934713408
    %v3199 = vunpack.c.0.s8 %v3198
    %v3200 = vlaneseq
    %v3201 = vshrl.u32 %v3200, 7
    %v3202 = vsub.s32 %v3199, %v3201
    %v3203 = vrot.slane %v3195, %v3202
    %v3205 = vunpack.c.l.s4 1934713408
    %v3206 = vunpack.c.0.s8 %v3205
    %v3207 = vlaneseq
    %v3208 = vshrl.u32 %v3207, 7
    %v3209 = vsub.s32 %v3206, %v3208
    %v3210 = vrot.slane %v3196, %v3209
    %v3211 = vcombine.low %v3179, %v3194
    %v3212 = vcombine.high %v3179, %v3194
    %v3214 = vunpack.c.l.s4 1934713408
    %v3215 = vunpack.c.0.s8 %v3214
    %v3216 = vlaneseq
    %v3217 = vshrl.u32 %v3216, 7
    %v3218 = vsub.s32 %v3215, %v3217
    %v3219 = vrot.slane %v3211, %v3218
    %v3221 = vunpack.c.l.s4 1934713408
    %v3222 = vunpack.c.0.s8 %v3221
    %v3223 = vlaneseq
    %v3224 = vshrl.u32 %v3223, 7
    %v3225 = vsub.s32 %v3222, %v3224
    %v3226 = vrot.slane %v3212, %v3225
    %v3227 = vcombine.high %v3203, 0.0
    %v3228 = vcombine.high %v3210, 0.0
    %v3229 = vcombine.high %v3219, 0.0
    %v3230 = vcombine.high %v3226, 0.0
    %v3231 = vcombine.high %v3114, 0.0
    %v3233 = vunpack.c.l.s4 1983009808
    %v3234 = vunpack.c.0.s8 %v3233
    %v3235 = vlaneseq
    %v3236 = vshrl.u32 %v3235, 7
    %v3237 = vsub.s32 %v3234, %v3236
    %v3238 = vrot.slane %v3114, %v3237
    %v3240 = vunpack.c.l.s4 1983009808
    %v3241 = vunpack.c.0.s8 %v3240
    %v3242 = vlaneseq
    %v3243 = vshrl.u32 %v3242, 7
    %v3244 = vsub.s32 %v3241, %v3243
    %v3245 = vrot.slane %v3231, %v3244
    %v3246 = vcombine.high %v3160, 0.0
    %v3248 = vunpack.c.l.s4 1983009808
    %v3249 = vunpack.c.0.s8 %v3248
    %v3250 = vlaneseq
    %v3251 = vshrl.u32 %v3250, 7
    %v3252 = vsub.s32 %v3249, %v3251
    %v3253 = vrot.slane %v3160, %v3252
    %v3255 = vunpack.c.l.s4 1983009808
    %v3256 = vunpack.c.0.s8 %v3255
    %v3257 = vlaneseq
    %v3258 = vshrl.u32 %v3257, 7
    %v3259 = vsub.s32 %v3256, %v3258
    %v3260 = vrot.slane %v3246, %v3259
    %v3261 = vcombine.low %v3238, %v3253
    %v3262 = vcombine.high %v3238, %v3253
    %v3264 = vunpack.c.l.s4 1934713408
    %v3265 = vunpack.c.0.s8 %v3264
    %v3266 = vlaneseq
    %v3267 = vshrl.u32 %v3266, 7
    %v3268 = vsub.s32 %v3265, %v3267
    %v3269 = vrot.slane %v3261, %v3268
    %v3271 = vunpack.c.l.s4 1934713408
    %v3272 = vunpack.c.0.s8 %v3271
    %v3273 = vlaneseq
    %v3274 = vshrl.u32 %v3273, 7
    %v3275 = vsub.s32 %v3272, %v3274
    %v3276 = vrot.slane %v3262, %v3275
    %v3277 = vcombine.low %v3245, %v3260
    %v3278 = vcombine.high %v3245, %v3260
    %v3280 = vunpack.c.l.s4 1934713408
    %v3281 = vunpack.c.0.s8 %v3280
    %v3282 = vlaneseq
    %v3283 = vshrl.u32 %v3282, 7
    %v3284 = vsub.s32 %v3281, %v3283
    %v3285 = vrot.slane %v3277, %v3284
    %v3287 = vunpack.c.l.s4 1934713408
    %v3288 = vunpack.c.0.s8 %v3287
    %v3289 = vlaneseq
    %v3290 = vshrl.u32 %v3289, 7
    %v3291 = vsub.s32 %v3288, %v3290
    %v3292 = vrot.slane %v3278, %v3291
    %v3293 = vcombine.high %v3269, 0.0
    %v3294 = vcombine.high %v3276, 0.0
    %v3295 = vcombine.high %v3285, 0.0
    %v3296 = vcombine.high %v3292, 0.0
    %v3297 = vcombine.low %v3203, %v3210
    %v3299 = vunpack.c.l.s4 1983009808
    %v3300 = vunpack.c.0.s8 %v3299
    %v3301 = vlaneseq
    %v3302 = vshrl.u32 %v3301, 7
    %v3303 = vsub.s32 %v3300, %v3302
    %v3304 = vrot.slane %v3297, %v3303
    %v3305 = vcombine.low %v3227, %v3228
    %v3307 = vunpack.c.l.s4 1983009808
    %v3308 = vunpack.c.0.s8 %v3307
    %v3309 = vlaneseq
    %v3310 = vshrl.u32 %v3309, 7
    %v3311 = vsub.s32 %v3308, %v3310
    %v3312 = vrot.slane %v3305, %v3311
    %v3313 = vcombine.low %v3219, %v3226
    %v3315 = vunpack.c.l.s4 1983009808
    %v3316 = vunpack.c.0.s8 %v3315
    %v3317 = vlaneseq
    %v3318 = vshrl.u32 %v3317, 7
    %v3319 = vsub.s32 %v3316, %v3318
    %v3320 = vrot.slane %v3313, %v3319
    %v3321 = vcombine.low %v3229, %v3230
    %v3323 = vunpack.c.l.s4 1983009808
    %v3324 = vunpack.c.0.s8 %v3323
    %v3325 = vlaneseq
    %v3326 = vshrl.u32 %v3325, 7
    %v3327 = vsub.s32 %v3324, %v3326
    %v3328 = vrot.slane %v3321, %v3327
    %v3329 = vcombine.low %v3304, %v3312
    %v3331 = vunpack.c.l.s4 1934713408
    %v3332 = vunpack.c.0.s8 %v3331
    %v3333 = vlaneseq
    %v3334 = vshrl.u32 %v3333, 7
    %v3335 = vsub.s32 %v3332, %v3334
    %v3336 = vrot.slane %v3329, %v3335
    %v3337 = vcombine.low %v3320, %v3328
    %v3339 = vunpack.c.l.s4 1934713408
    %v3340 = vunpack.c.0.s8 %v3339
    %v3341 = vlaneseq
    %v3342 = vshrl.u32 %v3341, 7
    %v3343 = vsub.s32 %v3340, %v3342
    %v3344 = vrot.slane %v3337, %v3343
    %v3345 = vcombine.low %v3336, %v3344
    %v3346 = vcombine.high %v3336, %v3344
    %v3347 = vcombine.low %v3269, %v3276
    %v3349 = vunpack.c.l.s4 1983009808
    %v3350 = vunpack.c.0.s8 %v3349
    %v3351 = vlaneseq
    %v3352 = vshrl.u32 %v3351, 7
    %v3353 = vsub.s32 %v3350, %v3352
    %v3354 = vrot.slane %v3347, %v3353
    %v3355 = vcombine.low %v3293, %v3294
    %v3357 = vunpack.c.l.s4 1983009808
    %v3358 = vunpack.c.0.s8 %v3357
    %v3359 = vlaneseq
    %v3360 = vshrl.u32 %v3359, 7
    %v3361 = vsub.s32 %v3358, %v3360
    %v3362 = vrot.slane %v3355, %v3361
    %v3363 = vcombine.low %v3285, %v3292
    %v3365 = vunpack.c.l.s4 1983009808
    %v3366 = vunpack.c.0.s8 %v3365
    %v3367 = vlaneseq
    %v3368 = vshrl.u32 %v3367, 7
    %v3369 = vsub.s32 %v3366, %v3368
    %v3370 = vrot.slane %v3363, %v3369
    %v3371 = vcombine.low %v3295, %v3296
    %v3373 = vunpack.c.l.s4 1983009808
    %v3374 = vunpack.c.0.s8 %v3373
    %v3375 = vlaneseq
    %v3376 = vshrl.u32 %v3375, 7
    %v3377 = vsub.s32 %v3374, %v3376
    %v3378 = vrot.slane %v3371, %v3377
    %v3379 = vcombine.low %v3354, %v3362
    %v3381 = vunpack.c.l.s4 1934713408
    %v3382 = vunpack.c.0.s8 %v3381
    %v3383 = vlaneseq
    %v3384 = vshrl.u32 %v3383, 7
    %v3385 = vsub.s32 %v3382, %v3384
    %v3386 = vrot.slane %v3379, %v3385
    %v3387 = vcombine.low %v3370, %v3378
    %v3389 = vunpack.c.l.s4 1934713408
    %v3390 = vunpack.c.0.s8 %v3389
    %v3391 = vlaneseq
    %v3392 = vshrl.u32 %v3391, 7
    %v3393 = vsub.s32 %v3390, %v3392
    %v3394 = vrot.slane %v3387, %v3393
    %v3395 = vcombine.low %v3386, %v3394
    %v3396 = vcombine.high %v3386, %v3394
    %3399 = vrot.lane.b32.xlu0 %v3346, 16
    %v3400 = vpop.permute.xlu0 %3399
    %3401 = vrot.lane.b32.xlu0 %v3396, 16
    %v3402 = vpop.permute.xlu0 %3401
    %v3405 = vsel %vm939, %v3345, %v3400
    %v3406 = vsel %vm939, %v3395, %v3402
    %v3407 = vpack.c.bf16 %v3406, %v3405
    %s3408 = scalar_lea.vmem %s5, 16
    %v3409 = vld [vmem:[%s3408] sm:$0xf]
    %v3410 = vld [vmem:[%s3408 + $0x4] sm:$0xf]
    %v3411 = vld [vmem:[%s3408 + $0x8] sm:$0xf]
    %v3412 = vld [vmem:[%s3408 + $0xc] sm:$0xf]
    %s3413 = scalar_lea.vmem %s6, 1
    %v3414 = vld [vmem:[%s3413] sm:$0x1]
    %v3416 = vlaneseq
    %v3417 = vshrl.u32 %v3416, 7
    %v3418 = vsub.s32 0, %v3417
    %v3419 = vrot.slane %v3414, %v3418
    %v3425 = vunpack.c.l.b16 %v3409
    %v3426 = vunpack.c.l.b16 %v3410
    %v3427 = vunpack.c.l.b16 %v3411
    %v3428 = vunpack.c.l.b16 %v3412
    %v3429 = vpack.c.b16 %v3426, %v3425
    %v3430 = vpack.c.b16 %v3428, %v3427
    %v3434 = vsel %vm87, %v3407, 0
    %3436 = vmatprep.subr.bf16.mxu0 0
    %3437 = vmatpush1.bf16.msra.mxu0 0
    %3438 = vmatprep.subr.bf16.mxu0 0
    %3439 = vmatpush1.bf16.msra.mxu0 0
    %3440 = vmatprep.subr.bf16.mxu0 0
    %3441 = vmatpush1.bf16.msra.mxu0 0
    %3442 = vmatprep.subr.bf16.mxu0 0
    %3443 = vmatpush1.bf16.msra.mxu0 0
    %3444 = vmatprep.subr.bf16.mxu0 0
    %3445 = vmatpush1.bf16.msra.mxu0 0
    %3446 = vmatprep.subr.bf16.mxu0 0
    %3447 = vmatpush1.bf16.msra.mxu0 0
    %3448 = vmatprep.subr.bf16.mxu0 0
    %3449 = vmatpush1.bf16.msra.mxu0 %v3430
    %3450 = vmatprep.subr.bf16.mxu0 0
    %3451 = vmatpush1.bf16.msra.mxu0 %v3429
    %3452 = vmatprep.subr.bf16.mxu0 0
    %3453 = vmatpush2.bf16.msra.mxu0 0
    %3454 = vmatprep.subr.bf16.mxu0 0
    %3455 = vmatpush2.bf16.msra.mxu0 0
    %3456 = vmatprep.subr.bf16.mxu0 0
    %3457 = vmatpush2.bf16.msra.mxu0 0
    %3458 = vmatprep.subr.bf16.mxu0 0
    %3459 = vmatpush2.bf16.msra.mxu0 0
    %3460 = vmatprep.subr.bf16.mxu0 0
    %3461 = vmatpush2.bf16.msra.mxu0 0
    %3462 = vmatprep.subr.bf16.mxu0 0
    %3463 = vmatpush2.bf16.msra.mxu0 0
    %3464 = vmatprep.subr.bf16.mxu0 0
    %3465 = vmatpush2.bf16.msra.mxu0 0
    %3466 = vmatprep.subr.bf16.mxu0 0
    %3467 = vmatpush2.bf16.msra.mxu0 0
    %3468 = vmatprep.mubr.bf16.mxu0 0
    %3469 = vmatmul.mubr.bf16.gmra.mxu0 %v3434
    %v3470 = vpop.f32.mrf.mxu0
    %v3471 = vadd.f32 %v3419, %v3470
    %v3472 = vpop.f32.mrf.mxu0
    %v3473 = vpop.f32.mrf.mxu0
    %v3474 = vadd.f32 %v3419, %v3473
    %v3475 = vpop.f32.mrf.mxu0
    %3476 = vdwg.mxu0
    %v3477 = vadd.f32 %v1933, %v3471
    %v3478 = vadd.f32 %v1934, %v3474
    %s3479 = scalar_lea.vmem %s7, 1
    %v3480 = vld [vmem:[%s3479] sm:$0x1]
    %s3481 = scalar_lea.vmem %s8, 1
    %v3482 = vld [vmem:[%s3481] sm:$0x1]
    %v3483 = vsel %vm87, %v3477, 0.0
    %3484 = vadd.xlane.f32.xlu0 %v3483
    %v3485 = vpop.xlane.xlu0 %3484
    %v3486 = vsel %vm87, %v3478, 0.0
    %3487 = vadd.xlane.f32.xlu0 %v3486
    %v3488 = vpop.xlane.xlu0 %3487
    %v3489 = vmul.f32 %v3485, %v94
    %v3490 = vmul.f32 %v3488, %v94
    %v3491 = vsub.f32 %v3477, %v3489
    %v3492 = vsub.f32 %v3478, %v3490
    %v3493 = vmul.f32 %v3491, %v3491
    %v3494 = vmul.f32 %v3492, %v3492
    %v3495 = vsel %vm87, %v3493, 0.0
    %3496 = vadd.xlane.f32.xlu0 %v3495
    %v3497 = vpop.xlane.xlu0 %3496
    %v3498 = vsel %vm87, %v3494, 0.0
    %3499 = vadd.xlane.f32.xlu0 %v3498
    %v3500 = vpop.xlane.xlu0 %3499
    %v3501 = vmul.f32 %v3497, %v94
    %v3502 = vmul.f32 %v3500, %v94
    %v3503 = vadd.f32 %v3501, 1e-12
    %v3504 = vadd.f32 %v3502, 1e-12
    %v3505 = vrsqrt.pop %v3503
    %v3506 = vrsqrt.pop %v3504
    %v3507 = vmul.f32 %v3491, %v3505
    %v3508 = vmul.f32 %v3492, %v3506
    %v3510 = vlaneseq
    %v3511 = vshrl.u32 %v3510, 7
    %v3512 = vsub.s32 0, %v3511
    %v3513 = vrot.slane %v3480, %v3512
    %v3515 = vmul.f32 %v3507, %v3513
    %v3516 = vmul.f32 %v3508, %v3513
    %v3518 = vlaneseq
    %v3519 = vshrl.u32 %v3518, 7
    %v3520 = vsub.s32 0, %v3519
    %v3521 = vrot.slane %v3482, %v3520
    %v3523 = vadd.f32 %v3515, %v3521
    %v3524 = vadd.f32 %v3516, %v3521
    %v3525 = vpack.c.bf16 %v3524, %v3523
    %s3526 = scalar_lea.vmem %s9, 16
    %v3527 = vld [vmem:[%s3526] sm:$0xf]
    %v3528 = vld [vmem:[%s3526 + $0x4] sm:$0xf]
    %v3529 = vld [vmem:[%s3526 + $0x8] sm:$0xf]
    %v3530 = vld [vmem:[%s3526 + $0xc] sm:$0xf]
    %s3531 = scalar_lea.vmem %s10, 1
    %v3532 = vld [vmem:[%s3531] sm:$0x1]
    %v3534 = vlaneseq
    %v3535 = vshrl.u32 %v3534, 7
    %v3536 = vsub.s32 0, %v3535
    %v3537 = vrot.slane %v3532, %v3536
    %v3543 = vunpack.c.l.b16 %v3527
    %v3544 = vunpack.c.l.b16 %v3528
    %v3545 = vunpack.c.l.b16 %v3529
    %v3546 = vunpack.c.l.b16 %v3530
    %v3547 = vpack.c.b16 %v3544, %v3543
    %v3548 = vpack.c.b16 %v3546, %v3545
    %v3552 = vsel %vm87, %v3525, 0
    %3554 = vmatprep.subr.bf16.mxu0 0
    %3555 = vmatpush1.bf16.msra.mxu0 0
    %3556 = vmatprep.subr.bf16.mxu0 0
    %3557 = vmatpush1.bf16.msra.mxu0 0
    %3558 = vmatprep.subr.bf16.mxu0 0
    %3559 = vmatpush1.bf16.msra.mxu0 0
    %3560 = vmatprep.subr.bf16.mxu0 0
    %3561 = vmatpush1.bf16.msra.mxu0 0
    %3562 = vmatprep.subr.bf16.mxu0 0
    %3563 = vmatpush1.bf16.msra.mxu0 0
    %3564 = vmatprep.subr.bf16.mxu0 0
    %3565 = vmatpush1.bf16.msra.mxu0 0
    %3566 = vmatprep.subr.bf16.mxu0 0
    %3567 = vmatpush1.bf16.msra.mxu0 %v3548
    %3568 = vmatprep.subr.bf16.mxu0 0
    %3569 = vmatpush1.bf16.msra.mxu0 %v3547
    %3570 = vmatprep.subr.bf16.mxu0 0
    %3571 = vmatpush2.bf16.msra.mxu0 0
    %3572 = vmatprep.subr.bf16.mxu0 0
    %3573 = vmatpush2.bf16.msra.mxu0 0
    %3574 = vmatprep.subr.bf16.mxu0 0
    %3575 = vmatpush2.bf16.msra.mxu0 0
    %3576 = vmatprep.subr.bf16.mxu0 0
    %3577 = vmatpush2.bf16.msra.mxu0 0
    %3578 = vmatprep.subr.bf16.mxu0 0
    %3579 = vmatpush2.bf16.msra.mxu0 0
    %3580 = vmatprep.subr.bf16.mxu0 0
    %3581 = vmatpush2.bf16.msra.mxu0 0
    %3582 = vmatprep.subr.bf16.mxu0 0
    %3583 = vmatpush2.bf16.msra.mxu0 0
    %3584 = vmatprep.subr.bf16.mxu0 0
    %3585 = vmatpush2.bf16.msra.mxu0 0
    %3586 = vmatprep.mubr.bf16.mxu0 0
    %3587 = vmatmul.mubr.bf16.gmra.mxu0 %v3552
    %v3588 = vpop.f32.mrf.mxu0
    %v3589 = vadd.f32 %v3537, %v3588
    %v3590 = vpop.f32.mrf.mxu0
    %v3591 = vpop.f32.mrf.mxu0
    %v3592 = vadd.f32 %v3537, %v3591
    %v3593 = vpop.f32.mrf.mxu0
    %3594 = vdwg.mxu0
    %v3595 = vmul.f32 %v3589, 0.5
    %v3596 = vmul.f32 %v3592, 0.5
    %v3597 = vmul.f32 %v3589, 0.044715
    %v3598 = vmul.f32 %v3592, 0.044715
    %v3599 = vmul.f32 %v3597, %v3589
    %v3600 = vmul.f32 %v3598, %v3592
    %v3601 = vmul.f32 %v3599, %v3589
    %v3602 = vmul.f32 %v3600, %v3592
    %v3603 = vadd.f32 %v3589, %v3601
    %v3604 = vadd.f32 %v3592, %v3602
    %v3605 = vmul.f32 %v3603, 0.7978846
    %v3606 = vmul.f32 %v3604, 0.7978846
    %v3607 = vtanh.pop %v3605
    %v3608 = vtanh.pop %v3606
    %v3609 = vadd.f32 %v3607, 1.0
    %v3610 = vadd.f32 %v3608, 1.0
    %v3611 = vmul.f32 %v3595, %v3609
    %v3612 = vmul.f32 %v3596, %v3610
    %v3613 = vpack.c.bf16 %v3612, %v3611
    %s3614 = scalar_lea.vmem %s11, 32
    %v3615 = vld [vmem:[%s3614] sm:$0xf]
    %v3616 = vld [vmem:[%s3614 + $0x4] sm:$0xf]
    %v3617 = vld [vmem:[%s3614 + $0x8] sm:$0xf]
    %v3618 = vld [vmem:[%s3614 + $0xc] sm:$0xf]
    %v3619 = vld [vmem:[%s3614 + $0x10] sm:$0xf]
    %v3620 = vld [vmem:[%s3614 + $0x14] sm:$0xf]
    %v3621 = vld [vmem:[%s3614 + $0x18] sm:$0xf]
    %v3622 = vld [vmem:[%s3614 + $0x1c] sm:$0xf]
    %s3623 = scalar_lea.vmem %s12, 1
    %v3624 = vld [vmem:[%s3623] sm:$0x1]
    %v3626 = vlaneseq
    %v3627 = vshrl.u32 %v3626, 7
    %v3628 = vsub.s32 0, %v3627
    %v3629 = vrot.slane %v3624, %v3628
    %v3639 = vunpack.c.l.b16 %v3615
    %v3640 = vunpack.c.l.b16 %v3616
    %v3641 = vunpack.c.l.b16 %v3617
    %v3642 = vunpack.c.l.b16 %v3618
    %v3643 = vunpack.c.l.b16 %v3619
    %v3644 = vunpack.c.l.b16 %v3620
    %v3645 = vunpack.c.l.b16 %v3621
    %v3646 = vunpack.c.l.b16 %v3622
    %v3647 = vpack.c.b16 %v3640, %v3639
    %v3648 = vpack.c.b16 %v3642, %v3641
    %v3649 = vpack.c.b16 %v3644, %v3643
    %v3650 = vpack.c.b16 %v3646, %v3645
    %v3656 = vsel %vm1844, %v3613, 0
    %3658 = vmatprep.subr.bf16.mxu0 0
    %3659 = vmatpush1.bf16.msra.mxu0 0
    %3660 = vmatprep.subr.bf16.mxu0 0
    %3661 = vmatpush1.bf16.msra.mxu0 0
    %3662 = vmatprep.subr.bf16.mxu0 0
    %3663 = vmatpush1.bf16.msra.mxu0 0
    %3664 = vmatprep.subr.bf16.mxu0 0
    %3665 = vmatpush1.bf16.msra.mxu0 0
    %3666 = vmatprep.subr.bf16.mxu0 0
    %3667 = vmatpush1.bf16.msra.mxu0 %v3650
    %3668 = vmatprep.subr.bf16.mxu0 0
    %3669 = vmatpush1.bf16.msra.mxu0 %v3649
    %3670 = vmatprep.subr.bf16.mxu0 0
    %3671 = vmatpush1.bf16.msra.mxu0 %v3648
    %3672 = vmatprep.subr.bf16.mxu0 0
    %3673 = vmatpush1.bf16.msra.mxu0 %v3647
    %3674 = vmatprep.subr.bf16.mxu0 0
    %3675 = vmatpush2.bf16.msra.mxu0 0
    %3676 = vmatprep.subr.bf16.mxu0 0
    %3677 = vmatpush2.bf16.msra.mxu0 0
    %3678 = vmatprep.subr.bf16.mxu0 0
    %3679 = vmatpush2.bf16.msra.mxu0 0
    %3680 = vmatprep.subr.bf16.mxu0 0
    %3681 = vmatpush2.bf16.msra.mxu0 0
    %3682 = vmatprep.subr.bf16.mxu0 0
    %3683 = vmatpush2.bf16.msra.mxu0 0
    %3684 = vmatprep.subr.bf16.mxu0 0
    %3685 = vmatpush2.bf16.msra.mxu0 0
    %3686 = vmatprep.subr.bf16.mxu0 0
    %3687 = vmatpush2.bf16.msra.mxu0 0
    %3688 = vmatprep.subr.bf16.mxu0 0
    %3689 = vmatpush2.bf16.msra.mxu0 0
    %3690 = vmatprep.mubr.bf16.mxu0 0
    %3691 = vmatmul.mubr.bf16.gmra.mxu0 %v3656
    %v3692 = vpop.f32.mrf.mxu0
    %v3693 = vadd.f32 %v3629, %v3692
    %v3694 = vpop.f32.mrf.mxu0
    %v3695 = vpop.f32.mrf.mxu0
    %v3696 = vadd.f32 %v3629, %v3695
    %v3697 = vpop.f32.mrf.mxu0
    %3698 = vdwg.mxu0
    %v3699 = vadd.f32 %v3523, %v3693
    %v3700 = vadd.f32 %v3524, %v3696
    %s3701 = scalar_lea.vmem %s13, 1
    %v3702 = vld [vmem:[%s3701] sm:$0x1]
    %s3703 = scalar_lea.vmem %s14, 1
    %v3704 = vld [vmem:[%s3703] sm:$0x1]
    %v3705 = vsel %vm87, %v3699, 0.0
    %3706 = vadd.xlane.f32.xlu0 %v3705
    %v3707 = vpop.xlane.xlu0 %3706
    %v3708 = vsel %vm87, %v3700, 0.0
    %3709 = vadd.xlane.f32.xlu0 %v3708
    %v3710 = vpop.xlane.xlu0 %3709
    %v3711 = vmul.f32 %v3707, %v94
    %v3712 = vmul.f32 %v3710, %v94
    %v3713 = vsub.f32 %v3699, %v3711
    %v3714 = vsub.f32 %v3700, %v3712
    %v3715 = vmul.f32 %v3713, %v3713
    %v3716 = vmul.f32 %v3714, %v3714
    %v3717 = vsel %vm87, %v3715, 0.0
    %3718 = vadd.xlane.f32.xlu0 %v3717
    %v3719 = vpop.xlane.xlu0 %3718
    %v3720 = vsel %vm87, %v3716, 0.0
    %3721 = vadd.xlane.f32.xlu0 %v3720
    %v3722 = vpop.xlane.xlu0 %3721
    %v3723 = vmul.f32 %v3719, %v94
    %v3724 = vmul.f32 %v3722, %v94
    %v3725 = vadd.f32 %v3723, 1e-12
    %v3726 = vadd.f32 %v3724, 1e-12
    %v3727 = vrsqrt.pop %v3725
    %v3728 = vrsqrt.pop %v3726
    %v3729 = vmul.f32 %v3713, %v3727
    %v3730 = vmul.f32 %v3714, %v3728
    %v3732 = vlaneseq
    %v3733 = vshrl.u32 %v3732, 7
    %v3734 = vsub.s32 0, %v3733
    %v3735 = vrot.slane %v3702, %v3734
    %v3737 = vmul.f32 %v3729, %v3735
    %v3738 = vmul.f32 %v3730, %v3735
    %v3740 = vlaneseq
    %v3741 = vshrl.u32 %v3740, 7
    %v3742 = vsub.s32 0, %v3741
    %v3743 = vrot.slane %v3704, %v3742
    %v3745 = vadd.f32 %v3737, %v3743
    %v3746 = vadd.f32 %v3738, %v3743
    %v3747 = vpack.c.bf16 %v3745, %v3745
    %v3748 = vpack.c.bf16 %v3746, %v3746
    %v3749 = vld [vmem:[%s15] sm:$0xf]
    %v3750 = vld [vmem:[%s15 + $0x4] sm:$0xf]
    %v3751 = vld [vmem:[%s15 + $0x8] sm:$0xf]
    %v3752 = vld [vmem:[%s15 + $0xc] sm:$0xf]
    %v3753 = vld [vmem:[%s16] sm:$0x1]
    %v3755 = vlaneseq
    %v3756 = vshrl.u32 %v3755, 7
    %v3757 = vsub.s32 0, %v3756
    %v3758 = vrot.slane %v3753, %v3757
    %v3762 = vunpack.c.l.b16 %v3747
    %v3763 = vunpack.c.l.b16 %v3748
    %v3764 = vrot.slane %v3763, 7
    %vm3765 = vcmask 1041409
    %v3766 = vsel %vm3765, %v3764, %v3762
    %v3767 = vpack.c.b16 %v3766, %v3766
    %v3772 = vunpack.c.l.b16 %v3749
    %v3773 = vunpack.c.l.b16 %v3750
    %v3774 = vunpack.c.l.b16 %v3751
    %v3775 = vunpack.c.l.b16 %v3752
    %v3776 = vpack.c.b16 %v3773, %v3772
    %v3777 = vpack.c.b16 %v3775, %v3774
    %v3781 = vsel %vm87, %v3767, 0
    %3783 = vmatprep.subr.bf16.mxu0 0
    %3784 = vmatpush1.bf16.msra.mxu0 0
    %3785 = vmatprep.subr.bf16.mxu0 0
    %3786 = vmatpush1.bf16.msra.mxu0 0
    %3787 = vmatprep.subr.bf16.mxu0 0
    %3788 = vmatpush1.bf16.msra.mxu0 0
    %3789 = vmatprep.subr.bf16.mxu0 0
    %3790 = vmatpush1.bf16.msra.mxu0 0
    %3791 = vmatprep.subr.bf16.mxu0 0
    %3792 = vmatpush1.bf16.msra.mxu0 0
    %3793 = vmatprep.subr.bf16.mxu0 0
    %3794 = vmatpush1.bf16.msra.mxu0 0
    %3795 = vmatprep.subr.bf16.mxu0 0
    %3796 = vmatpush1.bf16.msra.mxu0 %v3777
    %3797 = vmatprep.subr.bf16.mxu0 0
    %3798 = vmatpush1.bf16.msra.mxu0 %v3776
    %3799 = vmatprep.subr.bf16.mxu0 0
    %3800 = vmatpush2.bf16.msra.mxu0 0
    %3801 = vmatprep.subr.bf16.mxu0 0
    %3802 = vmatpush2.bf16.msra.mxu0 0
    %3803 = vmatprep.subr.bf16.mxu0 0
    %3804 = vmatpush2.bf16.msra.mxu0 0
    %3805 = vmatprep.subr.bf16.mxu0 0
    %3806 = vmatpush2.bf16.msra.mxu0 0
    %3807 = vmatprep.subr.bf16.mxu0 0
    %3808 = vmatpush2.bf16.msra.mxu0 0
    %3809 = vmatprep.subr.bf16.mxu0 0
    %3810 = vmatpush2.bf16.msra.mxu0 0
    %3811 = vmatprep.subr.bf16.mxu0 0
    %3812 = vmatpush2.bf16.msra.mxu0 0
    %3813 = vmatprep.subr.bf16.mxu0 0
    %3814 = vmatpush2.bf16.msra.mxu0 0
    %3815 = vmatprep.mubr.bf16.mxu0 0
    %3816 = vmatmul.mubr.bf16.gmra.mxu0 %v3781
    %v3817 = vpop.f32.mrf.mxu0
    %v3818 = vadd.f32 %v3758, %v3817
    %v3819 = vpop.f32.mrf.mxu0
    %v3820 = vpop.f32.mrf.mxu0
    %v3821 = vpop.f32.mrf.mxu0
    %3822 = vdwg.mxu0
    %v3823 = vtanh.pop %v3818
    %v3824 = vpack.c.bf16 %v3823, %v3823
    %v3825 = vld [vmem:[%s17] sm:$0xf]
    %v3826 = vld [vmem:[%s17 + $0x4] sm:$0xf]
    %v3827 = vld [vmem:[%s17 + $0x8] sm:$0xf]
    %v3828 = vld [vmem:[%s17 + $0xc] sm:$0xf]
    %v3829 = vld [vmem:[%s18] sm:$0x1]
    %v3831 = vlaneseq
    %v3832 = vshrl.u32 %v3831, 7
    %v3833 = vsub.s32 0, %v3832
    %v3834 = vrot.slane %v3829, %v3833
    %v3840 = vunpack.c.l.b16 %v3825
    %v3841 = vunpack.c.l.b16 %v3826
    %v3842 = vunpack.c.l.b16 %v3827
    %v3843 = vunpack.c.l.b16 %v3828
    %v3844 = vpack.c.b16 %v3841, %v3840
    %v3845 = vpack.c.b16 %v3843, %v3842
    %v3849 = vsel %vm87, %v3824, 0
    %3851 = vmatprep.subr.bf16.mxu0 0
    %3852 = vmatpush1.bf16.msra.mxu0 0
    %3853 = vmatprep.subr.bf16.mxu0 0
    %3854 = vmatpush1.bf16.msra.mxu0 0
    %3855 = vmatprep.subr.bf16.mxu0 0
    %3856 = vmatpush1.bf16.msra.mxu0 0
    %3857 = vmatprep.subr.bf16.mxu0 0
    %3858 = vmatpush1.bf16.msra.mxu0 0
    %3859 = vmatprep.subr.bf16.mxu0 0
    %3860 = vmatpush1.bf16.msra.mxu0 0
    %3861 = vmatprep.subr.bf16.mxu0 0
    %3862 = vmatpush1.bf16.msra.mxu0 0
    %3863 = vmatprep.subr.bf16.mxu0 0
    %3864 = vmatpush1.bf16.msra.mxu0 %v3845
    %3865 = vmatprep.subr.bf16.mxu0 0
    %3866 = vmatpush1.bf16.msra.mxu0 %v3844
    %3867 = vmatprep.subr.bf16.mxu0 0
    %3868 = vmatpush2.bf16.msra.mxu0 0
    %3869 = vmatprep.subr.bf16.mxu0 0
    %3870 = vmatpush2.bf16.msra.mxu0 0
    %3871 = vmatprep.subr.bf16.mxu0 0
    %3872 = vmatpush2.bf16.msra.mxu0 0
    %3873 = vmatprep.subr.bf16.mxu0 0
    %3874 = vmatpush2.bf16.msra.mxu0 0
    %3875 = vmatprep.subr.bf16.mxu0 0
    %3876 = vmatpush2.bf16.msra.mxu0 0
    %3877 = vmatprep.subr.bf16.mxu0 0
    %3878 = vmatpush2.bf16.msra.mxu0 0
    %3879 = vmatprep.subr.bf16.mxu0 0
    %3880 = vmatpush2.bf16.msra.mxu0 0
    %3881 = vmatprep.subr.bf16.mxu0 0
    %3882 = vmatpush2.bf16.msra.mxu0 0
    %3883 = vmatprep.mubr.bf16.mxu0 0
    %3884 = vmatmul.mubr.bf16.gmra.mxu0 %v3849
    %v3885 = vpop.f32.mrf.mxu0
    %v3886 = vadd.f32 %v3834, %v3885
    %v3887 = vpop.f32.mrf.mxu0
    %v3888 = vpop.f32.mrf.mxu0
    %v3889 = vpop.f32.mrf.mxu0
    %3890 = vdwg.mxu0
    %3891 = vst [vmem:[#allocation5] sm:$0x3] %v3886
    %v3892 = vlaneseq
    %v3893 = vand.u32 %v3892, 127
    %v3894 = vlaneseq
    %v3895 = vshrl.u32 %v3894, 7
    %vm3896 = vcmp.eq.s32.totalorder %v3895, 0
    %s3897 = sld [smem:[#allocation2]]
    %v3898 = vstv %s3897
    %v3899 = vsel %vm3896, %v3898, 0
    %vm3900 = vcmp.eq.s32.totalorder %v3895, 1
    %s3901 = sld [smem:[#allocation2 + $0x1]]
    %v3902 = vstv %s3901
    %v3903 = vsel %vm3900, %v3902, %v3899
    %vm3904 = vcmp.lt.s32.totalorder %v3893, 2
    %v3905 = vsel %vm3904, %v3886, -1e+30
    %vm3906 = vcmask 1041408
    %v3907 = vsel %vm3906, %v3905, -inf
    %3908 = vmax.xlane.f32.xlu0 %v3907
    %v3909 = vpop.xlane.xlu0 %3908
    %v3910 = vsub.f32 %v3905, %v3909
    %v3911 = vmul.f32 %v3910, 1.442695
    %v3912 = vpow.pop %v3911
    %v3913 = vsel %vm3904, %v3912, 0.0
    %v3914 = vsel %vm3906, %v3913, 0.0
    %3915 = vadd.xlane.f32.xlu0 %v3914
    %v3916 = vpop.xlane.xlu0 %3915
    %v3917 = vlog2.pop %v3916
    %v3918 = vmul.f32 %v3917, 0.6931472
    %v3919 = vadd.f32 %v3909, %v3918
    %vm3920 = vcmp.eq.s32.totalorder %v3893, %v3903
    %vm3921 = vmand %vm3920, %vm3904
    %v3922 = vsel %vm3921, %v3886, 0.0
    %v3923 = vsel %vm3906, %v3922, 0.0
    %3924 = vadd.xlane.f32.xlu0 %v3923
    %v3925 = vpop.xlane.xlu0 %3924
    %v3926 = vsub.f32 %v3919, %v3925
    %v3927 = vsel %vm3906, %v3926, 0.0
    %v3928 = vrot.slane %v3927, 4
    %v3929 = vadd.f32 %v3927, %v3928
    %v3930 = vrot.slane %v3929, 2
    %v3931 = vadd.f32 %v3929, %v3930
    %v3932 = vrot.slane %v3931, 1
    %v3933 = vadd.f32 %v3931, %v3932
    %v3934 = vmul.f32 %v3933, 0.5
    %vm3935 = vcmask 0
    %3936 = vst.msk [vmem:[#allocation6] sm:$0x1] %vm3935, %v3934
    // Predicated region
    $region86: #{bert_forward.1} parent=1 // pred_check
      _
    $region87: #{bert_forward.1} parent=1 // pred_check_branch
      %3938 = sbr.rel (0) target = $region89
    $region88: #{bert_forward.1} parent=1 // pred_region
      %s3940 = ssub.s32 32, 32
      %3941 = vsyncadd [#allocation3], %s3940
      %s3943 = sshll.u32 [#allocation5], 4
      %s3944 = int_to_ptr.vmem [resolvable:$true] %s3943
      %3946 = dma.vmem_to_hbm [thread:$0]  %s3944, 32, %s20, [#allocation3]
    $region89: #{bert_forward.1} parent=1 // pred_fallthru
      _
    // Predicated region
    $region90: #{bert_forward.1} parent=1 // pred_check
      _
    $region91: #{bert_forward.1} parent=1 // pred_check_branch
      %3948 = sbr.rel (0) target = $region93
    $region92: #{bert_forward.1} parent=1 // pred_region
      %s3950 = ssub.s32 16, 16
      %3951 = vsyncadd [#allocation7], %s3950
      %s3953 = sshll.u32 [#allocation6], 4
      %s3954 = int_to_ptr.vmem [resolvable:$true] %s3953
      %3956 = dma.vmem_to_hbm [thread:$0]  %s3954, 16, %s21, [#allocation7]
    $region93: #{bert_forward.1} parent=1 // pred_fallthru
      _
    // Predicated region
    $region94: #{bert_forward.1} parent=1 // pred_check
      _
    $region95: #{bert_forward.1} parent=1 // pred_check_branch
      %3958 = sbr.rel (0) target = $region97
    $region96: #{bert_forward.1} parent=1 // pred_region
      %3959 = dma.done [#allocation3], 32
    $region97: #{bert_forward.1} parent=1 // pred_fallthru
      _
    // Predicated region
    $region98: #{bert_forward.1} parent=1 // pred_check
      _
    $region99: #{bert_forward.1} parent=1 // pred_check_branch
      %3961 = sbr.rel (0) target = $region101
    $region100: #{bert_forward.1} parent=1 // pred_region
      %3962 = dma.done [#allocation7], 16
    $region101: #{bert_forward.1} parent=1 // pred_fallthru
      _
    %3963 = vsyncpa [#allocation3], 1
    %3964 = vsyncpa [#allocation7], 1
    %3965 = vsyncpa [#allocation4], 1

</llo_original>
